<compile_context>
chip_gen: v6e
topology: v6e:2x2x1
jax: 0.10.0
libtpu: 0.0.40
codegen_flags: <defaults>
</compile_context>

<pallas_src>
import functools

import jax
import jax.numpy as jnp
from jax import lax
from jax.experimental import pallas as pl
from jax.experimental.pallas import tpu as pltpu

_BN_EPS = 1e-5


# ---------------------------------------------------------------------------
# Fused Pallas kernel
# ---------------------------------------------------------------------------
def _bottleneck_kernel(x_ref, w1_ref, b1_ref, w2_ref, b2_ref, w3_ref, b3_ref,
                       o_ref, t1p_ref, *, W, Cmid, TH, dil):
    # x_ref  : (H*W, Cin)      bf16 image (rows flattened); constant across h
    # w1_ref : (Cin, Cmid)     folded conv1 weight (bf16)
    # b1_ref : (1, Cmid)       folded BN1 bias (f32)          (same for 2/3)
    # w2_ref : (9*Cmid, Cmid)  folded conv2 weight, taps K-concatenated (bf16)
    # w3_ref : (Cmid, Cout)
    # o_ref  : (TH*W, Cout)    lane-dense output row-tile (reshape-free store)
    # t1p_ref: (TH+2d, W+2d, Cmid) per-tile zero-padded conv1 activations (bf16)
    d = dil
    h = pl.program_id(1)
    nh = pl.num_programs(1)
    row0 = h * TH
    cd = t1p_ref.dtype

    def conv1(x2d):
        t = jnp.dot(x2d, w1_ref[...], preferred_element_type=jnp.float32)
        return jnp.maximum(t + b1_ref[...], 0.0)

    # ---- Stage 1: per-tile conv1 (1x1) + BN + ReLU with a recomputed d-row
    #      halo.  Only the halo border of the scratch is zeroed; the interior
    #      (and interior halo rows) are always fully overwritten.
    zcol = jnp.zeros((TH + 2 * d, d, Cmid), cd)
    t1p_ref[:, pl.ds(0, d), :] = zcol                    # left padding cols
    t1p_ref[:, pl.ds(W + d, d), :] = zcol                # right padding cols

    x_main = x_ref[pl.ds(pl.multiple_of(row0 * W, TH * W), TH * W), :]
    t1p_ref[pl.ds(d, TH), pl.ds(d, W), :] = (
        conv1(x_main).reshape(TH, W, Cmid).astype(cd))

    zrow = jnp.zeros((d, W, Cmid), cd)

    @pl.when(h > 0)                                      # top halo (recompute)
    def _():
        xt = x_ref[pl.ds(pl.multiple_of((row0 - d) * W, W), d * W), :]
        t1p_ref[pl.ds(0, d), pl.ds(d, W), :] = (
            conv1(xt).reshape(d, W, Cmid).astype(cd))

    @pl.when(h == 0)                                     # image top -> zeros
    def _():
        t1p_ref[pl.ds(0, d), pl.ds(d, W), :] = zrow

    @pl.when(h < nh - 1)                                 # bottom halo
    def _():
        xb = x_ref[pl.ds(pl.multiple_of((row0 + TH) * W, W), d * W), :]
        t1p_ref[pl.ds(TH + d, d), pl.ds(d, W), :] = (
            conv1(xb).reshape(d, W, Cmid).astype(cd))

    @pl.when(h == nh - 1)                                # image bottom -> zeros
    def _():
        t1p_ref[pl.ds(TH + d, d), pl.ds(d, W), :] = zrow

    # ---- Stage 2: 3x3 dilated conv2 + BN + ReLU as ONE MXU matmul.
    #      Load the padded band once and K-concatenate the 9 shifted taps
    #      (static slices of the value) -> K = 9*Cmid, no carried accumulator.
    band = t1p_ref[...]                                  # (TH+2d, W+2d, Cmid)
    taps = [band[ky * d:ky * d + TH, kx * d:kx * d + W, :]
            for ky in range(3) for kx in range(3)]
    patch = jnp.concatenate(taps, axis=-1).reshape(TH * W, 9 * Cmid)
    t2 = jnp.dot(patch, w2_ref[...], preferred_element_type=jnp.float32)
    t2 = jnp.maximum(t2 + b2_ref[...], 0.0).astype(cd)

    # ---- Stage 3: conv3 (1x1) + BN + identity residual + ReLU, stored
    #      straight into the lane-dense 2-D output block (no reshape).
    y = jnp.dot(t2, w3_ref[...], preferred_element_type=jnp.float32)
    out = jnp.maximum(y + b3_ref[...] + x_main.astype(jnp.float32), 0.0)
    o_ref[...] = out.astype(o_ref.dtype)


# ---------------------------------------------------------------------------
# Parameter folding / tiling helpers
# ---------------------------------------------------------------------------
def _fold_bn_into_conv(w, bn):
    """Fold eval-mode BN into the conv weight (scale) + a per-channel bias."""
    gamma, beta, mean, var = bn
    scale = gamma * lax.rsqrt(var + _BN_EPS)
    return w * scale, beta - mean * scale


def _pick_row_tile(H, W, Cmid, Cout, d, *, vmem_budget_bytes=24 << 20):
    """Largest row tile (divisor of H, >= dilation) whose per-step VMEM
    footprint fits the budget (output x2 buffers + scratch + K-concat patch
    + f32 epilogue temps)."""
    divisors = [t for t in range(H, 0, -1) if H % t == 0 and t >= d]
    for t in divisors:
        step_bytes = 2 * (2 * t * W * Cout                               # out (x2)
                          + (t + 2 * d) * (W + 2 * d) * max(Cmid, 128)   # scratch
                          + t * W * 9 * Cmid)                            # patch
        step_bytes += 4 * 3 * t * W * max(Cmid, Cout)                    # f32 temps
        if step_bytes <= vmem_budget_bytes and (t * W) % 8 == 0:
            return t
    return divisors[-1] if divisors else H


def _vmem_limit_bytes(H, W, Cin, Cmid, Cout, TH, d, out_itemsize):
    est = (2 * 2 * H * W * Cin                                   # input image (x2)
           + 2 * out_itemsize * TH * W * Cout                    # output tile (x2)
           + 2 * (TH + 2 * d) * (W + 2 * d) * max(Cmid, 128)     # scratch (padded)
           + 2 * TH * W * 9 * Cmid                               # K-concat patch
           + 2 * (Cin * Cmid + 9 * Cmid * Cmid + Cmid * Cout)    # weights
           + 4 * 4 * TH * W * max(Cmid, Cout))                   # f32 temporaries
    return int(min(max(2 * est, 16 << 20), 64 << 20))


# ---------------------------------------------------------------------------
# Wrappers
# ---------------------------------------------------------------------------
def bottleneck_forward_nhwc(x_nhwc, params, *, dilation=1, row_tile=None,
                            compute_dtype=jnp.bfloat16):
    """Fused Bottleneck forward on NHWC input (preferred entry point)."""
    N, H, W, Cin = x_nhwc.shape
    d = int(dilation)
    w1, b1 = _fold_bn_into_conv(params["w1"], params["bn1"])
    w2, b2 = _fold_bn_into_conv(params["w2"], params["bn2"])
    w3, b3 = _fold_bn_into_conv(params["w3"], params["bn3"])
    Cmid = w1.shape[1]
    Cout = w3.shape[1]
    assert Cout == Cin, "identity residual requires planes*4 == inplanes"

    TH = row_tile if row_tile is not None else _pick_row_tile(H, W, Cmid, Cout, d)
    assert H % TH == 0, "row_tile must divide H"
    assert TH >= d, "row_tile must be >= dilation (halo rows)"
    assert (TH * W) % 8 == 0 or TH * W == H * W, "row tile must be sublane aligned"

    cd = compute_dtype
    w2r = w2.reshape(9 * Cmid, Cmid)        # (ky, kx, cin) K-concatenated vs cout
    # TODO(synk): for Cmid < 128 the scratch lane dim is padded to 128 by the
    # (8,128) tiling; a lane-repacked scratch layout would cut its footprint.

    kernel = functools.partial(_bottleneck_kernel, W=W, Cmid=Cmid, TH=TH, dil=d)

    x_flat = x_nhwc.reshape(N, H * W, Cin).astype(cd)       # free XLA reshape
    args = (x_flat,
            w1.astype(cd), b1.reshape(1, -1).astype(jnp.float32),
            w2r.astype(cd), b2.reshape(1, -1).astype(jnp.float32),
            w3.astype(cd), b3.reshape(1, -1).astype(jnp.float32))

    vmem_limit = _vmem_limit_bytes(H, W, Cin, Cmid, Cout, TH, d,
                                   jnp.dtype(x_nhwc.dtype).itemsize)

    def run(single_buffer_weights):
        def const_spec(shape):
            imap = lambda n, h: (0,) * len(shape)
            if single_buffer_weights:
                # Constant block over the whole grid -> single VMEM buffer.
                return pl.BlockSpec(shape, imap, pipeline_mode=pl.Buffered(1))
            return pl.BlockSpec(shape, imap)

        return pl.pallas_call(
            kernel,
            out_shape=jax.ShapeDtypeStruct((N, H * W, Cout), x_nhwc.dtype),
            grid=(N, H // TH),
            in_specs=[
                # Whole (flattened) image per batch element; block index is
                # constant across h so it is DMA'd once per image per core.
                # TODO(synk): at real ResNet scales switch to a row-tiled input
                # with a d-row halo via manual make_async_copy so VMEM scales
                # with TH instead of H (v7x 64 MiB budget).
                pl.BlockSpec((None, H * W, Cin), lambda n, h: (n, 0, 0)),
                const_spec((Cin, Cmid)), const_spec((1, Cmid)),
                const_spec((9 * Cmid, Cmid)), const_spec((1, Cmid)),
                const_spec((Cmid, Cout)), const_spec((1, Cout)),
            ],
            out_specs=pl.BlockSpec((None, TH * W, Cout), lambda n, h: (n, h, 0)),
            scratch_shapes=[pltpu.VMEM((TH + 2 * d, W + 2 * d, Cmid), cd)],
            compiler_params=pltpu.CompilerParams(
                dimension_semantics=("parallel", "parallel"),
                vmem_limit_bytes=vmem_limit),
        )(*args)

    try:
        out_flat = run(single_buffer_weights=True)
    except Exception:
        # Fallback for jax versions without BlockSpec.pipeline_mode /
        # single-buffered (Buffered(1)) support on pallas_call inputs.
        out_flat = run(single_buffer_weights=False)

    return out_flat.reshape(N, H, W, Cout)


def bottleneck_forward(x_nchw, params, stride=1, dilation=1, *, row_tile=None,
                       compute_dtype=jnp.bfloat16):
    """PyTorch-layout (NCHW) wrapper around the fused NHWC kernel."""
    # TODO(synk): stride>1 / downsample branch not implemented (this module is
    # the downsample=None, identity-residual Bottleneck).
    assert stride == 1, "stride>1 requires a downsample branch"
    x = jnp.transpose(x_nchw, (0, 2, 3, 1))          # NCHW -> NHWC (boundary only)
    out = bottleneck_forward_nhwc(x, params, dilation=dilation,
                                  row_tile=row_tile, compute_dtype=compute_dtype)
    return jnp.transpose(out, (0, 3, 1, 2))          # NHWC -> NCHW


# ---------------------------------------------------------------------------
# Pure-JAX references (correctness checks)
# ---------------------------------------------------------------------------
def bottleneck_reference_f32(x_nchw, params, dilation=1):
    """Straight f32 translation of the PyTorch module (eval-mode BN)."""
    x = jnp.transpose(x_nchw, (0, 2, 3, 1))

    def bn(y, p):
        gamma, beta, mean, var = p
        return gamma * (y - mean) / jnp.sqrt(var + _BN_EPS) + beta

    out = jax.nn.relu(bn(jnp.einsum("nhwc,ck->nhwk", x, params["w1"]), params["bn1"]))
    out = lax.conv_general_dilated(
        out, params["w2"], window_strides=(1, 1),
        padding=[(dilation, dilation)] * 2, rhs_dilation=(dilation, dilation),
        dimension_numbers=("NHWC", "HWIO", "NHWC"))
    out = jax.nn.relu(bn(out, params["bn2"]))
    out = jax.nn.relu(bn(jnp.einsum("nhwc,ck->nhwk", out, params["w3"]), params["bn3"]) + x)
    return jnp.transpose(out, (0, 3, 1, 2))


def bottleneck_reference_matched(x_nchw, params, dilation=1,
                                 compute_dtype=jnp.bfloat16):
    """Reference mirroring the kernel's quantization points (bf16 matmul
    inputs, f32 accumulation) so it matches the Pallas kernel tightly."""
    q = lambda a: a.astype(compute_dtype).astype(jnp.float32)
    x = q(jnp.transpose(x_nchw, (0, 2, 3, 1)))
    w1, b1 = _fold_bn_into_conv(params["w1"], params["bn1"])
    w2, b2 = _fold_bn_into_conv(params["w2"], params["bn2"])
    w3, b3 = _fold_bn_into_conv(params["w3"], params["bn3"])
    t1 = jnp.maximum(jnp.einsum("nhwc,ck->nhwk", x, q(w1)) + b1, 0.0)
    t2 = lax.conv_general_dilated(
        q(t1), q(w2), window_strides=(1, 1),
        padding=[(dilation, dilation)] * 2, rhs_dilation=(dilation, dilation),
        dimension_numbers=("NHWC", "HWIO", "NHWC"))
    t2 = jnp.maximum(t2 + b2, 0.0)
    y = jnp.maximum(jnp.einsum("nhwc,ck->nhwk", q(t2), q(w3)) + b3 + x, 0.0)
    return jnp.transpose(y, (0, 3, 1, 2)).astype(x_nchw.dtype)


# ---------------------------------------------------------------------------
# Deterministic parameters + demo
# ---------------------------------------------------------------------------
def make_params(key, inplanes, planes):
    ks = jax.random.split(key, 6)

    def bn_params(k, c):
        k0, k1, k2, k3 = jax.random.split(k, 4)
        gamma = jax.random.uniform(k0, (c,), jnp.float32, 0.5, 1.5)
        beta = 0.1 * jax.random.normal(k1, (c,), jnp.float32)
        mean = 0.1 * jax.random.normal(k2, (c,), jnp.float32)
        var = jax.random.uniform(k3, (c,), jnp.float32, 0.5, 1.5)
        return (gamma, beta, mean, var)

    # conv1 -> [Cin, planes], conv2 -> HWIO, conv3 -> [planes, 4*planes].
    w1 = jax.random.normal(ks[0], (inplanes, planes), jnp.float32) / jnp.sqrt(1.0 * inplanes)
    w2 = jax.random.normal(ks[1], (3, 3, planes, planes), jnp.float32) / jnp.sqrt(9.0 * planes)
    w3 = jax.random.normal(ks[2], (planes, 4 * planes), jnp.float32) / jnp.sqrt(1.0 * planes)
    return {"w1": w1, "w2": w2, "w3": w3,
            "bn1": bn_params(ks[3], planes),
            "bn2": bn_params(ks[4], planes),
            "bn3": bn_params(ks[5], 4 * planes)}


if __name__ == "__main__":
    key = jax.random.PRNGKey(0)
    k_x, k_p = jax.random.split(key)

    # planes * expansion(4) == inplanes -> identity residual; Cout = 128 lanes.
    inplanes, planes = 128, 32
    N, H, W = 2, 16, 16
    x = jax.random.normal(k_x, (N, inplanes, H, W), jnp.float32)   # NCHW input
    params = make_params(k_p, inplanes, planes)

    for dilation, row_tile in ((1, 8), (2, 4), (2, None)):
        out = jax.block_until_ready(
            bottleneck_forward(x, params, stride=1, dilation=dilation,
                               row_tile=row_tile))
        assert out.shape == (N, inplanes, H, W)

        ref_m = jax.block_until_ready(
            bottleneck_reference_matched(x, params, dilation=dilation))
        ref_f = jax.block_until_ready(
            bottleneck_reference_f32(x, params, dilation=dilation))
        assert jnp.allclose(out, ref_m, atol=5e-3, rtol=5e-3), \
            f"mismatch vs matched-precision reference (d={dilation}, th={row_tile})"
        assert jnp.allclose(out, ref_f, atol=1e-1, rtol=1e-1), \
            f"mismatch vs f32 reference (d={dilation}, th={row_tile})"

    print("KERNEL_OK")
</pallas_src>

<mosaic_0001>
module attributes {stable_mosaic.version = 11 : i64} {
  func.func @_bottleneck_kernel(%arg0: i32, %arg1: i32, %arg2: memref<1x256x128xbf16, #tpu.memory_space<vmem>>, %arg3: memref<128x32xbf16, #tpu.memory_space<vmem>>, %arg4: memref<1x32xf32, #tpu.memory_space<vmem>>, %arg5: memref<288x32xbf16, #tpu.memory_space<vmem>>, %arg6: memref<1x32xf32, #tpu.memory_space<vmem>>, %arg7: memref<32x128xbf16, #tpu.memory_space<vmem>>, %arg8: memref<1x128xf32, #tpu.memory_space<vmem>>, %arg9: memref<1x128x128xf32, #tpu.memory_space<vmem>>, %arg10: memref<10x18x32xbf16, #tpu.memory_space<vmem>>) attributes {dimension_semantics = [#tpu.dimension_semantics<parallel>, #tpu.dimension_semantics<parallel>], iteration_bounds = array<i64: 2, 2>, scalar_prefetch = 0 : i64, scratch_operands = 1 : i64, tpu.core_type = #tpu.core_type<tc>, window_params = [{transform_indices = @transform_0, window_bounds = array<i64: 1, 256, 128>}, {pipeline_mode = #tpu.pipeline_mode<synchronous>, transform_indices = @transform_1, window_bounds = array<i64: 128, 32>}, {pipeline_mode = #tpu.pipeline_mode<synchronous>, transform_indices = @transform_2, window_bounds = array<i64: 1, 32>}, {pipeline_mode = #tpu.pipeline_mode<synchronous>, transform_indices = @transform_3, window_bounds = array<i64: 288, 32>}, {pipeline_mode = #tpu.pipeline_mode<synchronous>, transform_indices = @transform_4, window_bounds = array<i64: 1, 32>}, {pipeline_mode = #tpu.pipeline_mode<synchronous>, transform_indices = @transform_5, window_bounds = array<i64: 32, 128>}, {pipeline_mode = #tpu.pipeline_mode<synchronous>, transform_indices = @transform_6, window_bounds = array<i64: 1, 128>}, {transform_indices = @transform_7, window_bounds = array<i64: 1, 128, 128>}]} {
    %c8_i32 = arith.constant 8 : i32
    %0 = arith.muli %arg1, %c8_i32 : i32
    %cst = arith.constant 0.000000e+00 : bf16
    %1 = vector.broadcast %cst : bf16 to vector<10x1x32xbf16>
    %c0 = arith.constant 0 : index
    %c0_0 = arith.constant 0 : index
    %c0_1 = arith.constant 0 : index
    %2 = vector.load %arg10[%c0, %c0_0, %c0_1] : memref<10x18x32xbf16, #tpu.memory_space<vmem>>, vector<10x1x32xbf16>
    tpu.vector_store %arg10[%c0, %c0_0, %c0_1], %1 {strides = array<i32>} : memref<10x18x32xbf16, #tpu.memory_space<vmem>>, vector<10x1x32xbf16>,
    %c0_2 = arith.constant 0 : index
    %c17 = arith.constant 17 : index
    %c0_3 = arith.constant 0 : index
    %3 = vector.load %arg10[%c0_2, %c17, %c0_3] : memref<10x18x32xbf16, #tpu.memory_space<vmem>>, vector<10x1x32xbf16>
    tpu.vector_store %arg10[%c0_2, %c17, %c0_3], %1 {strides = array<i32>} : memref<10x18x32xbf16, #tpu.memory_space<vmem>>, vector<10x1x32xbf16>,
    %c16_i32 = arith.constant 16 : i32
    %4 = arith.muli %0, %c16_i32 : i32
    %5 = tpu.assume_multiple %4, 128 : i32
    %c0_4 = arith.constant 0 : index
    %6 = arith.index_cast %5 : i32 to index
    %c0_5 = arith.constant 0 : index
    %7 = vector.load %arg2[%c0_4, %6, %c0_5] : memref<1x256x128xbf16, #tpu.memory_space<vmem>>, vector<1x128x128xbf16>
    %8 = vector.shape_cast %7 : vector<1x128x128xbf16> to vector<128x128xbf16>
    %c0_6 = arith.constant 0 : index
    %c0_7 = arith.constant 0 : index
    %9 = vector.load %arg3[%c0_6, %c0_7] : memref<128x32xbf16, #tpu.memory_space<vmem>>, vector<128x32xbf16>
    %cst_8 = arith.constant dense<0.000000e+00> : vector<128x32xf32>
    %10 = tpu.matmul %8, %9, %cst_8 {dimension_numbers = #tpu.dot_dimension_numbers<[1], [0], [0], [1], [0, 0, 1, 1], [], []>} : vector<128x128xbf16>, vector<128x32xbf16>, vector<128x32xf32> -> vector<128x32xf32>
    %c0_9 = arith.constant 0 : index
    %c0_10 = arith.constant 0 : index
    %11 = vector.load %arg4[%c0_9, %c0_10] : memref<1x32xf32, #tpu.memory_space<vmem>>, vector<1x32xf32>
    %12 = vector.broadcast %11 : vector<1x32xf32> to vector<128x32xf32>
    %13 = arith.addf %10, %12 : vector<128x32xf32>
    %cst_11 = arith.constant 0.000000e+00 : f32
    %14 = vector.broadcast %cst_11 : f32 to vector<128x32xf32>
    %15 = arith.maximumf %13, %14 : vector<128x32xf32>
    %16 = vector.shape_cast %15 : vector<128x32xf32> to vector<8x16x32xf32>
    %17 = arith.truncf %16 : vector<8x16x32xf32> to vector<8x16x32xbf16>
    %c1 = arith.constant 1 : index
    %c1_12 = arith.constant 1 : index
    %c0_13 = arith.constant 0 : index
    %18 = vector.load %arg10[%c1, %c1_12, %c0_13] : memref<10x18x32xbf16, #tpu.memory_space<vmem>>, vector<8x16x32xbf16>
    tpu.vector_store %arg10[%c1, %c1_12, %c0_13], %17 {strides = array<i32>} : memref<10x18x32xbf16, #tpu.memory_space<vmem>>, vector<8x16x32xbf16>,
    %cst_14 = arith.constant 0.000000e+00 : bf16
    %19 = vector.broadcast %cst_14 : bf16 to vector<1x16x32xbf16>
    %c0_i32 = arith.constant 0 : i32
    %20 = arith.cmpi sgt, %arg1, %c0_i32 : i32
    %21 = arith.extui %20 : i1 to i32
    %c0_i32_15 = arith.constant 0 : i32
    %22 = arith.cmpi ne, %21, %c0_i32_15 : i32
    scf.if %22 {
      %c1_i32_39 = arith.constant 1 : i32
      %64 = arith.subi %0, %c1_i32_39 : i32
      %c16_i32_40 = arith.constant 16 : i32
      %65 = arith.muli %64, %c16_i32_40 : i32
      %66 = tpu.assume_multiple %65, 16 : i32
      %c0_41 = arith.constant 0 : index
      %67 = arith.index_cast %66 : i32 to index
      %c0_42 = arith.constant 0 : index
      %68 = vector.load %arg2[%c0_41, %67, %c0_42] : memref<1x256x128xbf16, #tpu.memory_space<vmem>>, vector<1x16x128xbf16>
      %69 = vector.shape_cast %68 : vector<1x16x128xbf16> to vector<16x128xbf16>
      %c0_43 = arith.constant 0 : index
      %c0_44 = arith.constant 0 : index
      %70 = vector.load %arg3[%c0_43, %c0_44] : memref<128x32xbf16, #tpu.memory_space<vmem>>, vector<128x32xbf16>
      %cst_45 = arith.constant dense<0.000000e+00> : vector<16x32xf32>
      %71 = tpu.matmul %69, %70, %cst_45 {dimension_numbers = #tpu.dot_dimension_numbers<[1], [0], [0], [1], [0, 0, 1, 1], [], []>} : vector<16x128xbf16>, vector<128x32xbf16>, vector<16x32xf32> -> vector<16x32xf32>
      %c0_46 = arith.constant 0 : index
      %c0_47 = arith.constant 0 : index
      %72 = vector.load %arg4[%c0_46, %c0_47] : memref<1x32xf32, #tpu.memory_space<vmem>>, vector<1x32xf32>
      %73 = vector.broadcast %72 : vector<1x32xf32> to vector<16x32xf32>
      %74 = arith.addf %71, %73 : vector<16x32xf32>
      %cst_48 = arith.constant 0.000000e+00 : f32
      %75 = vector.broadcast %cst_48 : f32 to vector<16x32xf32>
      %76 = arith.maximumf %74, %75 : vector<16x32xf32>
      %77 = vector.shape_cast %76 : vector<16x32xf32> to vector<1x16x32xf32>
      %78 = arith.truncf %77 : vector<1x16x32xf32> to vector<1x16x32xbf16>
      %c0_49 = arith.constant 0 : index
      %c1_50 = arith.constant 1 : index
      %c0_51 = arith.constant 0 : index
      %79 = vector.load %arg10[%c0_49, %c1_50, %c0_51] : memref<10x18x32xbf16, #tpu.memory_space<vmem>>, vector<1x16x32xbf16>
      tpu.vector_store %arg10[%c0_49, %c1_50, %c0_51], %78 {strides = array<i32>} : memref<10x18x32xbf16, #tpu.memory_space<vmem>>, vector<1x16x32xbf16>,
    } else {
    }
    %c0_i32_16 = arith.constant 0 : i32
    %23 = arith.cmpi eq, %arg1, %c0_i32_16 : i32
    %24 = arith.extui %23 : i1 to i32
    %c0_i32_17 = arith.constant 0 : i32
    %25 = arith.cmpi ne, %24, %c0_i32_17 : i32
    scf.if %25 {
      %c0_39 = arith.constant 0 : index
      %c1_40 = arith.constant 1 : index
      %c0_41 = arith.constant 0 : index
      %64 = vector.load %arg10[%c0_39, %c1_40, %c0_41] : memref<10x18x32xbf16, #tpu.memory_space<vmem>>, vector<1x16x32xbf16>
      tpu.vector_store %arg10[%c0_39, %c1_40, %c0_41], %19 {strides = array<i32>} : memref<10x18x32xbf16, #tpu.memory_space<vmem>>, vector<1x16x32xbf16>,
    } else {
    }
    %c1_i32 = arith.constant 1 : i32
    %26 = arith.cmpi slt, %arg1, %c1_i32 : i32
    %27 = arith.extui %26 : i1 to i32
    %c0_i32_18 = arith.constant 0 : i32
    %28 = arith.cmpi ne, %27, %c0_i32_18 : i32
    scf.if %28 {
      %c8_i32_39 = arith.constant 8 : i32
      %64 = arith.addi %0, %c8_i32_39 : i32
      %c16_i32_40 = arith.constant 16 : i32
      %65 = arith.muli %64, %c16_i32_40 : i32
      %66 = tpu.assume_multiple %65, 16 : i32
      %c0_41 = arith.constant 0 : index
      %67 = arith.index_cast %66 : i32 to index
      %c0_42 = arith.constant 0 : index
      %68 = vector.load %arg2[%c0_41, %67, %c0_42] : memref<1x256x128xbf16, #tpu.memory_space<vmem>>, vector<1x16x128xbf16>
      %69 = vector.shape_cast %68 : vector<1x16x128xbf16> to vector<16x128xbf16>
      %c0_43 = arith.constant 0 : index
      %c0_44 = arith.constant 0 : index
      %70 = vector.load %arg3[%c0_43, %c0_44] : memref<128x32xbf16, #tpu.memory_space<vmem>>, vector<128x32xbf16>
      %cst_45 = arith.constant dense<0.000000e+00> : vector<16x32xf32>
      %71 = tpu.matmul %69, %70, %cst_45 {dimension_numbers = #tpu.dot_dimension_numbers<[1], [0], [0], [1], [0, 0, 1, 1], [], []>} : vector<16x128xbf16>, vector<128x32xbf16>, vector<16x32xf32> -> vector<16x32xf32>
      %c0_46 = arith.constant 0 : index
      %c0_47 = arith.constant 0 : index
      %72 = vector.load %arg4[%c0_46, %c0_47] : memref<1x32xf32, #tpu.memory_space<vmem>>, vector<1x32xf32>
      %73 = vector.broadcast %72 : vector<1x32xf32> to vector<16x32xf32>
      %74 = arith.addf %71, %73 : vector<16x32xf32>
      %cst_48 = arith.constant 0.000000e+00 : f32
      %75 = vector.broadcast %cst_48 : f32 to vector<16x32xf32>
      %76 = arith.maximumf %74, %75 : vector<16x32xf32>
      %77 = vector.shape_cast %76 : vector<16x32xf32> to vector<1x16x32xf32>
      %78 = arith.truncf %77 : vector<1x16x32xf32> to vector<1x16x32xbf16>
      %c9 = arith.constant 9 : index
      %c1_49 = arith.constant 1 : index
      %c0_50 = arith.constant 0 : index
      %79 = vector.load %arg10[%c9, %c1_49, %c0_50] : memref<10x18x32xbf16, #tpu.memory_space<vmem>>, vector<1x16x32xbf16>
      tpu.vector_store %arg10[%c9, %c1_49, %c0_50], %78 {strides = array<i32>} : memref<10x18x32xbf16, #tpu.memory_space<vmem>>, vector<1x16x32xbf16>,
    } else {
    }
    %c1_i32_19 = arith.constant 1 : i32
    %29 = arith.cmpi eq, %arg1, %c1_i32_19 : i32
    %30 = arith.extui %29 : i1 to i32
    %c0_i32_20 = arith.constant 0 : i32
    %31 = arith.cmpi ne, %30, %c0_i32_20 : i32
    scf.if %31 {
      %c9 = arith.constant 9 : index
      %c1_39 = arith.constant 1 : index
      %c0_40 = arith.constant 0 : index
      %64 = vector.load %arg10[%c9, %c1_39, %c0_40] : memref<10x18x32xbf16, #tpu.memory_space<vmem>>, vector<1x16x32xbf16>
      tpu.vector_store %arg10[%c9, %c1_39, %c0_40], %19 {strides = array<i32>} : memref<10x18x32xbf16, #tpu.memory_space<vmem>>, vector<1x16x32xbf16>,
    } else {
    }
    %c0_21 = arith.constant 0 : index
    %c0_22 = arith.constant 0 : index
    %c0_23 = arith.constant 0 : index
    %32 = vector.load %arg10[%c0_21, %c0_22, %c0_23] : memref<10x18x32xbf16, #tpu.memory_space<vmem>>, vector<10x18x32xbf16>
    %33 = vector.extract_strided_slice %32 {offsets = [0, 0, 0], sizes = [8, 16, 32], strides = [1, 1, 1]} : vector<10x18x32xbf16> to vector<8x16x32xbf16>
    %34 = vector.extract_strided_slice %32 {offsets = [0, 1, 0], sizes = [8, 16, 32], strides = [1, 1, 1]} : vector<10x18x32xbf16> to vector<8x16x32xbf16>
    %35 = vector.extract_strided_slice %32 {offsets = [0, 2, 0], sizes = [8, 16, 32], strides = [1, 1, 1]} : vector<10x18x32xbf16> to vector<8x16x32xbf16>
    %36 = vector.extract_strided_slice %32 {offsets = [1, 0, 0], sizes = [8, 16, 32], strides = [1, 1, 1]} : vector<10x18x32xbf16> to vector<8x16x32xbf16>
    %37 = vector.extract_strided_slice %32 {offsets = [1, 1, 0], sizes = [8, 16, 32], strides = [1, 1, 1]} : vector<10x18x32xbf16> to vector<8x16x32xbf16>
    %38 = vector.extract_strided_slice %32 {offsets = [1, 2, 0], sizes = [8, 16, 32], strides = [1, 1, 1]} : vector<10x18x32xbf16> to vector<8x16x32xbf16>
    %39 = vector.extract_strided_slice %32 {offsets = [2, 0, 0], sizes = [8, 16, 32], strides = [1, 1, 1]} : vector<10x18x32xbf16> to vector<8x16x32xbf16>
    %40 = vector.extract_strided_slice %32 {offsets = [2, 1, 0], sizes = [8, 16, 32], strides = [1, 1, 1]} : vector<10x18x32xbf16> to vector<8x16x32xbf16>
    %41 = vector.extract_strided_slice %32 {offsets = [2, 2, 0], sizes = [8, 16, 32], strides = [1, 1, 1]} : vector<10x18x32xbf16> to vector<8x16x32xbf16>
    %42 = tpu.concatenate %33, %34, %35, %36, %37, %38, %39, %40, %41 in 2 : vector<8x16x32xbf16>, vector<8x16x32xbf16>, vector<8x16x32xbf16>, vector<8x16x32xbf16>, vector<8x16x32xbf16>, vector<8x16x32xbf16>, vector<8x16x32xbf16>, vector<8x16x32xbf16>, vector<8x16x32xbf16> -> vector<8x16x288xbf16>
    %43 = vector.shape_cast %42 : vector<8x16x288xbf16> to vector<128x288xbf16>
    %c0_24 = arith.constant 0 : index
    %c0_25 = arith.constant 0 : index
    %44 = vector.load %arg5[%c0_24, %c0_25] : memref<288x32xbf16, #tpu.memory_space<vmem>>, vector<288x32xbf16>
    %cst_26 = arith.constant dense<0.000000e+00> : vector<128x32xf32>
    %45 = tpu.matmul %43, %44, %cst_26 {dimension_numbers = #tpu.dot_dimension_numbers<[1], [0], [0], [1], [0, 0, 1, 1], [], []>} : vector<128x288xbf16>, vector<288x32xbf16>, vector<128x32xf32> -> vector<128x32xf32>
    %c0_27 = arith.constant 0 : index
    %c0_28 = arith.constant 0 : index
    %46 = vector.load %arg6[%c0_27, %c0_28] : memref<1x32xf32, #tpu.memory_space<vmem>>, vector<1x32xf32>
    %47 = vector.broadcast %46 : vector<1x32xf32> to vector<128x32xf32>
    %48 = arith.addf %45, %47 : vector<128x32xf32>
    %cst_29 = arith.constant 0.000000e+00 : f32
    %49 = vector.broadcast %cst_29 : f32 to vector<128x32xf32>
    %50 = arith.maximumf %48, %49 : vector<128x32xf32>
    %51 = arith.truncf %50 : vector<128x32xf32> to vector<128x32xbf16>
    %c0_30 = arith.constant 0 : index
    %c0_31 = arith.constant 0 : index
    %52 = vector.load %arg7[%c0_30, %c0_31] : memref<32x128xbf16, #tpu.memory_space<vmem>>, vector<32x128xbf16>
    %cst_32 = arith.constant dense<0.000000e+00> : vector<128x128xf32>
    %53 = tpu.matmul %51, %52, %cst_32 {dimension_numbers = #tpu.dot_dimension_numbers<[1], [0], [0], [1], [0, 0, 1, 1], [], []>} : vector<128x32xbf16>, vector<32x128xbf16>, vector<128x128xf32> -> vector<128x128xf32>
    %c0_33 = arith.constant 0 : index
    %c0_34 = arith.constant 0 : index
    %54 = vector.load %arg8[%c0_33, %c0_34] : memref<1x128xf32, #tpu.memory_space<vmem>>, vector<1x128xf32>
    %55 = vector.broadcast %54 : vector<1x128xf32> to vector<128x128xf32>
    %56 = arith.addf %53, %55 : vector<128x128xf32>
    %57 = arith.extf %8 : vector<128x128xbf16> to vector<128x128xf32>
    %58 = arith.addf %56, %57 : vector<128x128xf32>
    %cst_35 = arith.constant 0.000000e+00 : f32
    %59 = vector.broadcast %cst_35 : f32 to vector<128x128xf32>
    %60 = arith.maximumf %58, %59 : vector<128x128xf32>
    %c0_36 = arith.constant 0 : index
    %c0_37 = arith.constant 0 : index
    %c0_38 = arith.constant 0 : index
    %61 = vector.load %arg9[%c0_36, %c0_37, %c0_38] : memref<1x128x128xf32, #tpu.memory_space<vmem>>, vector<1x128x128xf32>
    %62 = vector.shape_cast %61 : vector<1x128x128xf32> to vector<128x128xf32>
    %63 = vector.shape_cast %60 : vector<128x128xf32> to vector<1x128x128xf32>
    tpu.vector_store %arg9[%c0_36, %c0_37, %c0_38], %63 {strides = array<i32>} : memref<1x128x128xf32, #tpu.memory_space<vmem>>, vector<1x128x128xf32>,
    return
  }
  func.func @transform_0(%arg0: i32, %arg1: i32) -> (i32, i32, i32) {
    %c0_i32 = arith.constant 0 : i32
    %c0_i32_0 = arith.constant 0 : i32
    %c0_i32_1 = arith.constant 0 : i32
    return %arg0, %c0_i32, %c0_i32_0 : i32, i32, i32
  }
  func.func @transform_1(%arg0: i32, %arg1: i32) -> (i32, i32) {
    %c0_i32 = arith.constant 0 : i32
    %c0_i32_0 = arith.constant 0 : i32
    %c0_i32_1 = arith.constant 0 : i32
    return %c0_i32, %c0_i32_0 : i32, i32
  }
  func.func @transform_2(%arg0: i32, %arg1: i32) -> (i32, i32) {
    %c0_i32 = arith.constant 0 : i32
    %c0_i32_0 = arith.constant 0 : i32
    %c0_i32_1 = arith.constant 0 : i32
    return %c0_i32, %c0_i32_0 : i32, i32
  }
  func.func @transform_3(%arg0: i32, %arg1: i32) -> (i32, i32) {
    %c0_i32 = arith.constant 0 : i32
    %c0_i32_0 = arith.constant 0 : i32
    %c0_i32_1 = arith.constant 0 : i32
    return %c0_i32, %c0_i32_0 : i32, i32
  }
  func.func @transform_4(%arg0: i32, %arg1: i32) -> (i32, i32) {
    %c0_i32 = arith.constant 0 : i32
    %c0_i32_0 = arith.constant 0 : i32
    %c0_i32_1 = arith.constant 0 : i32
    return %c0_i32, %c0_i32_0 : i32, i32
  }
  func.func @transform_5(%arg0: i32, %arg1: i32) -> (i32, i32) {
    %c0_i32 = arith.constant 0 : i32
    %c0_i32_0 = arith.constant 0 : i32
    %c0_i32_1 = arith.constant 0 : i32
    return %c0_i32, %c0_i32_0 : i32, i32
  }
  func.func @transform_6(%arg0: i32, %arg1: i32) -> (i32, i32) {
    %c0_i32 = arith.constant 0 : i32
    %c0_i32_0 = arith.constant 0 : i32
    %c0_i32_1 = arith.constant 0 : i32
    return %c0_i32, %c0_i32_0 : i32, i32
  }
  func.func @transform_7(%arg0: i32, %arg1: i32) -> (i32, i32, i32) {
    %c0_i32 = arith.constant 0 : i32
    %c0_i32_0 = arith.constant 0 : i32
    return %arg0, %arg1, %c0_i32 : i32, i32, i32
  }
}

module attributes {stable_mosaic.version = 11 : i64} {
  func.func @_bottleneck_kernel(%arg0: i32, %arg1: i32, %arg2: memref<1x256x128xbf16, #tpu.memory_space<vmem>>, %arg3: memref<128x32xbf16, #tpu.memory_space<vmem>>, %arg4: memref<1x32xf32, #tpu.memory_space<vmem>>, %arg5: memref<288x32xbf16, #tpu.memory_space<vmem>>, %arg6: memref<1x32xf32, #tpu.memory_space<vmem>>, %arg7: memref<32x128xbf16, #tpu.memory_space<vmem>>, %arg8: memref<1x128xf32, #tpu.memory_space<vmem>>, %arg9: memref<1x128x128xf32, #tpu.memory_space<vmem>>, %arg10: memref<10x18x32xbf16, #tpu.memory_space<vmem>>) attributes {dimension_semantics = [#tpu.dimension_semantics<parallel>, #tpu.dimension_semantics<parallel>], iteration_bounds = array<i64: 2, 2>, scalar_prefetch = 0 : i64, scratch_operands = 1 : i64, tpu.core_type = #tpu.core_type<tc>, window_params = [{transform_indices = @transform_0, window_bounds = array<i64: 1, 256, 128>}, {pipeline_mode = #tpu.pipeline_mode<synchronous>, transform_indices = @transform_1, window_bounds = array<i64: 128, 32>}, {pipeline_mode = #tpu.pipeline_mode<synchronous>, transform_indices = @transform_2, window_bounds = array<i64: 1, 32>}, {pipeline_mode = #tpu.pipeline_mode<synchronous>, transform_indices = @transform_3, window_bounds = array<i64: 288, 32>}, {pipeline_mode = #tpu.pipeline_mode<synchronous>, transform_indices = @transform_4, window_bounds = array<i64: 1, 32>}, {pipeline_mode = #tpu.pipeline_mode<synchronous>, transform_indices = @transform_5, window_bounds = array<i64: 32, 128>}, {pipeline_mode = #tpu.pipeline_mode<synchronous>, transform_indices = @transform_6, window_bounds = array<i64: 1, 128>}, {transform_indices = @transform_7, window_bounds = array<i64: 1, 128, 128>}]} {
    %c8_i32 = arith.constant 8 : i32
    %0 = arith.muli %arg1, %c8_i32 : i32
    %cst = arith.constant 0.000000e+00 : bf16
    %1 = vector.broadcast %cst : bf16 to vector<10x1x32xbf16>
    %c0 = arith.constant 0 : index
    %c0_0 = arith.constant 0 : index
    %c0_1 = arith.constant 0 : index
    %2 = vector.load %arg10[%c0, %c0_0, %c0_1] : memref<10x18x32xbf16, #tpu.memory_space<vmem>>, vector<10x1x32xbf16>
    tpu.vector_store %arg10[%c0, %c0_0, %c0_1], %1 {strides = array<i32>} : memref<10x18x32xbf16, #tpu.memory_space<vmem>>, vector<10x1x32xbf16>,
    %c0_2 = arith.constant 0 : index
    %c17 = arith.constant 17 : index
    %c0_3 = arith.constant 0 : index
    %3 = vector.load %arg10[%c0_2, %c17, %c0_3] : memref<10x18x32xbf16, #tpu.memory_space<vmem>>, vector<10x1x32xbf16>
    tpu.vector_store %arg10[%c0_2, %c17, %c0_3], %1 {strides = array<i32>} : memref<10x18x32xbf16, #tpu.memory_space<vmem>>, vector<10x1x32xbf16>,
    %c16_i32 = arith.constant 16 : i32
    %4 = arith.muli %0, %c16_i32 : i32
    %5 = tpu.assume_multiple %4, 128 : i32
    %c0_4 = arith.constant 0 : index
    %6 = arith.index_cast %5 : i32 to index
    %c0_5 = arith.constant 0 : index
    %7 = vector.load %arg2[%c0_4, %6, %c0_5] : memref<1x256x128xbf16, #tpu.memory_space<vmem>>, vector<1x128x128xbf16>
    %8 = vector.shape_cast %7 : vector<1x128x128xbf16> to vector<128x128xbf16>
    %c0_6 = arith.constant 0 : index
    %c0_7 = arith.constant 0 : index
    %9 = vector.load %arg3[%c0_6, %c0_7] : memref<128x32xbf16, #tpu.memory_space<vmem>>, vector<128x32xbf16>
    %cst_8 = arith.constant dense<0.000000e+00> : vector<128x32xf32>
    %10 = tpu.matmul %8, %9, %cst_8 {dimension_numbers = #tpu.dot_dimension_numbers<[1], [0], [0], [1], [0, 0, 1, 1], [], []>} : vector<128x128xbf16>, vector<128x32xbf16>, vector<128x32xf32> -> vector<128x32xf32>
    %c0_9 = arith.constant 0 : index
    %c0_10 = arith.constant 0 : index
    %11 = vector.load %arg4[%c0_9, %c0_10] : memref<1x32xf32, #tpu.memory_space<vmem>>, vector<1x32xf32>
    %12 = vector.broadcast %11 : vector<1x32xf32> to vector<128x32xf32>
    %13 = arith.addf %10, %12 : vector<128x32xf32>
    %cst_11 = arith.constant 0.000000e+00 : f32
    %14 = vector.broadcast %cst_11 : f32 to vector<128x32xf32>
    %15 = arith.maximumf %13, %14 : vector<128x32xf32>
    %16 = vector.shape_cast %15 : vector<128x32xf32> to vector<8x16x32xf32>
    %17 = arith.truncf %16 : vector<8x16x32xf32> to vector<8x16x32xbf16>
    %c1 = arith.constant 1 : index
    %c1_12 = arith.constant 1 : index
    %c0_13 = arith.constant 0 : index
    %18 = vector.load %arg10[%c1, %c1_12, %c0_13] : memref<10x18x32xbf16, #tpu.memory_space<vmem>>, vector<8x16x32xbf16>
    tpu.vector_store %arg10[%c1, %c1_12, %c0_13], %17 {strides = array<i32>} : memref<10x18x32xbf16, #tpu.memory_space<vmem>>, vector<8x16x32xbf16>,
    %cst_14 = arith.constant 0.000000e+00 : bf16
    %19 = vector.broadcast %cst_14 : bf16 to vector<1x16x32xbf16>
    %c0_i32 = arith.constant 0 : i32
    %20 = arith.cmpi sgt, %arg1, %c0_i32 : i32
    %21 = arith.extui %20 : i1 to i32
    %c0_i32_15 = arith.constant 0 : i32
    %22 = arith.cmpi ne, %21, %c0_i32_15 : i32
    scf.if %22 {
      %c1_i32_39 = arith.constant 1 : i32
      %64 = arith.subi %0, %c1_i32_39 : i32
      %c16_i32_40 = arith.constant 16 : i32
      %65 = arith.muli %64, %c16_i32_40 : i32
      %66 = tpu.assume_multiple %65, 16 : i32
      %c0_41 = arith.constant 0 : index
      %67 = arith.index_cast %66 : i32 to index
      %c0_42 = arith.constant 0 : index
      %68 = vector.load %arg2[%c0_41, %67, %c0_42] : memref<1x256x128xbf16, #tpu.memory_space<vmem>>, vector<1x16x128xbf16>
      %69 = vector.shape_cast %68 : vector<1x16x128xbf16> to vector<16x128xbf16>
      %c0_43 = arith.constant 0 : index
      %c0_44 = arith.constant 0 : index
      %70 = vector.load %arg3[%c0_43, %c0_44] : memref<128x32xbf16, #tpu.memory_space<vmem>>, vector<128x32xbf16>
      %cst_45 = arith.constant dense<0.000000e+00> : vector<16x32xf32>
      %71 = tpu.matmul %69, %70, %cst_45 {dimension_numbers = #tpu.dot_dimension_numbers<[1], [0], [0], [1], [0, 0, 1, 1], [], []>} : vector<16x128xbf16>, vector<128x32xbf16>, vector<16x32xf32> -> vector<16x32xf32>
      %c0_46 = arith.constant 0 : index
      %c0_47 = arith.constant 0 : index
      %72 = vector.load %arg4[%c0_46, %c0_47] : memref<1x32xf32, #tpu.memory_space<vmem>>, vector<1x32xf32>
      %73 = vector.broadcast %72 : vector<1x32xf32> to vector<16x32xf32>
      %74 = arith.addf %71, %73 : vector<16x32xf32>
      %cst_48 = arith.constant 0.000000e+00 : f32
      %75 = vector.broadcast %cst_48 : f32 to vector<16x32xf32>
      %76 = arith.maximumf %74, %75 : vector<16x32xf32>
      %77 = vector.shape_cast %76 : vector<16x32xf32> to vector<1x16x32xf32>
      %78 = arith.truncf %77 : vector<1x16x32xf32> to vector<1x16x32xbf16>
      %c0_49 = arith.constant 0 : index
      %c1_50 = arith.constant 1 : index
      %c0_51 = arith.constant 0 : index
      %79 = vector.load %arg10[%c0_49, %c1_50, %c0_51] : memref<10x18x32xbf16, #tpu.memory_space<vmem>>, vector<1x16x32xbf16>
      tpu.vector_store %arg10[%c0_49, %c1_50, %c0_51], %78 {strides = array<i32>} : memref<10x18x32xbf16, #tpu.memory_space<vmem>>, vector<1x16x32xbf16>,
    } else {
    }
    %c0_i32_16 = arith.constant 0 : i32
    %23 = arith.cmpi eq, %arg1, %c0_i32_16 : i32
    %24 = arith.extui %23 : i1 to i32
    %c0_i32_17 = arith.constant 0 : i32
    %25 = arith.cmpi ne, %24, %c0_i32_17 : i32
    scf.if %25 {
      %c0_39 = arith.constant 0 : index
      %c1_40 = arith.constant 1 : index
      %c0_41 = arith.constant 0 : index
      %64 = vector.load %arg10[%c0_39, %c1_40, %c0_41] : memref<10x18x32xbf16, #tpu.memory_space<vmem>>, vector<1x16x32xbf16>
      tpu.vector_store %arg10[%c0_39, %c1_40, %c0_41], %19 {strides = array<i32>} : memref<10x18x32xbf16, #tpu.memory_space<vmem>>, vector<1x16x32xbf16>,
    } else {
    }
    %c1_i32 = arith.constant 1 : i32
    %26 = arith.cmpi slt, %arg1, %c1_i32 : i32
    %27 = arith.extui %26 : i1 to i32
    %c0_i32_18 = arith.constant 0 : i32
    %28 = arith.cmpi ne, %27, %c0_i32_18 : i32
    scf.if %28 {
      %c8_i32_39 = arith.constant 8 : i32
      %64 = arith.addi %0, %c8_i32_39 : i32
      %c16_i32_40 = arith.constant 16 : i32
      %65 = arith.muli %64, %c16_i32_40 : i32
      %66 = tpu.assume_multiple %65, 16 : i32
      %c0_41 = arith.constant 0 : index
      %67 = arith.index_cast %66 : i32 to index
      %c0_42 = arith.constant 0 : index
      %68 = vector.load %arg2[%c0_41, %67, %c0_42] : memref<1x256x128xbf16, #tpu.memory_space<vmem>>, vector<1x16x128xbf16>
      %69 = vector.shape_cast %68 : vector<1x16x128xbf16> to vector<16x128xbf16>
      %c0_43 = arith.constant 0 : index
      %c0_44 = arith.constant 0 : index
      %70 = vector.load %arg3[%c0_43, %c0_44] : memref<128x32xbf16, #tpu.memory_space<vmem>>, vector<128x32xbf16>
      %cst_45 = arith.constant dense<0.000000e+00> : vector<16x32xf32>
      %71 = tpu.matmul %69, %70, %cst_45 {dimension_numbers = #tpu.dot_dimension_numbers<[1], [0], [0], [1], [0, 0, 1, 1], [], []>} : vector<16x128xbf16>, vector<128x32xbf16>, vector<16x32xf32> -> vector<16x32xf32>
      %c0_46 = arith.constant 0 : index
      %c0_47 = arith.constant 0 : index
      %72 = vector.load %arg4[%c0_46, %c0_47] : memref<1x32xf32, #tpu.memory_space<vmem>>, vector<1x32xf32>
      %73 = vector.broadcast %72 : vector<1x32xf32> to vector<16x32xf32>
      %74 = arith.addf %71, %73 : vector<16x32xf32>
      %cst_48 = arith.constant 0.000000e+00 : f32
      %75 = vector.broadcast %cst_48 : f32 to vector<16x32xf32>
      %76 = arith.maximumf %74, %75 : vector<16x32xf32>
      %77 = vector.shape_cast %76 : vector<16x32xf32> to vector<1x16x32xf32>
      %78 = arith.truncf %77 : vector<1x16x32xf32> to vector<1x16x32xbf16>
      %c9 = arith.constant 9 : index
      %c1_49 = arith.constant 1 : index
      %c0_50 = arith.constant 0 : index
      %79 = vector.load %arg10[%c9, %c1_49, %c0_50] : memref<10x18x32xbf16, #tpu.memory_space<vmem>>, vector<1x16x32xbf16>
      tpu.vector_store %arg10[%c9, %c1_49, %c0_50], %78 {strides = array<i32>} : memref<10x18x32xbf16, #tpu.memory_space<vmem>>, vector<1x16x32xbf16>,
    } else {
    }
    %c1_i32_19 = arith.constant 1 : i32
    %29 = arith.cmpi eq, %arg1, %c1_i32_19 : i32
    %30 = arith.extui %29 : i1 to i32
    %c0_i32_20 = arith.constant 0 : i32
    %31 = arith.cmpi ne, %30, %c0_i32_20 : i32
    scf.if %31 {
      %c9 = arith.constant 9 : index
      %c1_39 = arith.constant 1 : index
      %c0_40 = arith.constant 0 : index
      %64 = vector.load %arg10[%c9, %c1_39, %c0_40] : memref<10x18x32xbf16, #tpu.memory_space<vmem>>, vector<1x16x32xbf16>
      tpu.vector_store %arg10[%c9, %c1_39, %c0_40], %19 {strides = array<i32>} : memref<10x18x32xbf16, #tpu.memory_space<vmem>>, vector<1x16x32xbf16>,
    } else {
    }
    %c0_21 = arith.constant 0 : index
    %c0_22 = arith.constant 0 : index
    %c0_23 = arith.constant 0 : index
    %32 = vector.load %arg10[%c0_21, %c0_22, %c0_23] : memref<10x18x32xbf16, #tpu.memory_space<vmem>>, vector<10x18x32xbf16>
    %33 = vector.extract_strided_slice %32 {offsets = [0, 0, 0], sizes = [8, 16, 32], strides = [1, 1, 1]} : vector<10x18x32xbf16> to vector<8x16x32xbf16>
    %34 = vector.extract_strided_slice %32 {offsets = [0, 1, 0], sizes = [8, 16, 32], strides = [1, 1, 1]} : vector<10x18x32xbf16> to vector<8x16x32xbf16>
    %35 = vector.extract_strided_slice %32 {offsets = [0, 2, 0], sizes = [8, 16, 32], strides = [1, 1, 1]} : vector<10x18x32xbf16> to vector<8x16x32xbf16>
    %36 = vector.extract_strided_slice %32 {offsets = [1, 0, 0], sizes = [8, 16, 32], strides = [1, 1, 1]} : vector<10x18x32xbf16> to vector<8x16x32xbf16>
    %37 = vector.extract_strided_slice %32 {offsets = [1, 1, 0], sizes = [8, 16, 32], strides = [1, 1, 1]} : vector<10x18x32xbf16> to vector<8x16x32xbf16>
    %38 = vector.extract_strided_slice %32 {offsets = [1, 2, 0], sizes = [8, 16, 32], strides = [1, 1, 1]} : vector<10x18x32xbf16> to vector<8x16x32xbf16>
    %39 = vector.extract_strided_slice %32 {offsets = [2, 0, 0], sizes = [8, 16, 32], strides = [1, 1, 1]} : vector<10x18x32xbf16> to vector<8x16x32xbf16>
    %40 = vector.extract_strided_slice %32 {offsets = [2, 1, 0], sizes = [8, 16, 32], strides = [1, 1, 1]} : vector<10x18x32xbf16> to vector<8x16x32xbf16>
    %41 = vector.extract_strided_slice %32 {offsets = [2, 2, 0], sizes = [8, 16, 32], strides = [1, 1, 1]} : vector<10x18x32xbf16> to vector<8x16x32xbf16>
    %42 = tpu.concatenate %33, %34, %35, %36, %37, %38, %39, %40, %41 in 2 : vector<8x16x32xbf16>, vector<8x16x32xbf16>, vector<8x16x32xbf16>, vector<8x16x32xbf16>, vector<8x16x32xbf16>, vector<8x16x32xbf16>, vector<8x16x32xbf16>, vector<8x16x32xbf16>, vector<8x16x32xbf16> -> vector<8x16x288xbf16>
    %43 = vector.shape_cast %42 : vector<8x16x288xbf16> to vector<128x288xbf16>
    %c0_24 = arith.constant 0 : index
    %c0_25 = arith.constant 0 : index
    %44 = vector.load %arg5[%c0_24, %c0_25] : memref<288x32xbf16, #tpu.memory_space<vmem>>, vector<288x32xbf16>
    %cst_26 = arith.constant dense<0.000000e+00> : vector<128x32xf32>
    %45 = tpu.matmul %43, %44, %cst_26 {dimension_numbers = #tpu.dot_dimension_numbers<[1], [0], [0], [1], [0, 0, 1, 1], [], []>} : vector<128x288xbf16>, vector<288x32xbf16>, vector<128x32xf32> -> vector<128x32xf32>
    %c0_27 = arith.constant 0 : index
    %c0_28 = arith.constant 0 : index
    %46 = vector.load %arg6[%c0_27, %c0_28] : memref<1x32xf32, #tpu.memory_space<vmem>>, vector<1x32xf32>
    %47 = vector.broadcast %46 : vector<1x32xf32> to vector<128x32xf32>
    %48 = arith.addf %45, %47 : vector<128x32xf32>
    %cst_29 = arith.constant 0.000000e+00 : f32
    %49 = vector.broadcast %cst_29 : f32 to vector<128x32xf32>
    %50 = arith.maximumf %48, %49 : vector<128x32xf32>
    %51 = arith.truncf %50 : vector<128x32xf32> to vector<128x32xbf16>
    %c0_30 = arith.constant 0 : index
    %c0_31 = arith.constant 0 : index
    %52 = vector.load %arg7[%c0_30, %c0_31] : memref<32x128xbf16, #tpu.memory_space<vmem>>, vector<32x128xbf16>
    %cst_32 = arith.constant dense<0.000000e+00> : vector<128x128xf32>
    %53 = tpu.matmul %51, %52, %cst_32 {dimension_numbers = #tpu.dot_dimension_numbers<[1], [0], [0], [1], [0, 0, 1, 1], [], []>} : vector<128x32xbf16>, vector<32x128xbf16>, vector<128x128xf32> -> vector<128x128xf32>
    %c0_33 = arith.constant 0 : index
    %c0_34 = arith.constant 0 : index
    %54 = vector.load %arg8[%c0_33, %c0_34] : memref<1x128xf32, #tpu.memory_space<vmem>>, vector<1x128xf32>
    %55 = vector.broadcast %54 : vector<1x128xf32> to vector<128x128xf32>
    %56 = arith.addf %53, %55 : vector<128x128xf32>
    %57 = arith.extf %8 : vector<128x128xbf16> to vector<128x128xf32>
    %58 = arith.addf %56, %57 : vector<128x128xf32>
    %cst_35 = arith.constant 0.000000e+00 : f32
    %59 = vector.broadcast %cst_35 : f32 to vector<128x128xf32>
    %60 = arith.maximumf %58, %59 : vector<128x128xf32>
    %c0_36 = arith.constant 0 : index
    %c0_37 = arith.constant 0 : index
    %c0_38 = arith.constant 0 : index
    %61 = vector.load %arg9[%c0_36, %c0_37, %c0_38] : memref<1x128x128xf32, #tpu.memory_space<vmem>>, vector<1x128x128xf32>
    %62 = vector.shape_cast %61 : vector<1x128x128xf32> to vector<128x128xf32>
    %63 = vector.shape_cast %60 : vector<128x128xf32> to vector<1x128x128xf32>
    tpu.vector_store %arg9[%c0_36, %c0_37, %c0_38], %63 {strides = array<i32>} : memref<1x128x128xf32, #tpu.memory_space<vmem>>, vector<1x128x128xf32>,
    return
  }
  func.func @transform_0(%arg0: i32, %arg1: i32) -> (i32, i32, i32) {
    %c0_i32 = arith.constant 0 : i32
    %c0_i32_0 = arith.constant 0 : i32
    %c0_i32_1 = arith.constant 0 : i32
    return %arg0, %c0_i32, %c0_i32_0 : i32, i32, i32
  }
  func.func @transform_1(%arg0: i32, %arg1: i32) -> (i32, i32) {
    %c0_i32 = arith.constant 0 : i32
    %c0_i32_0 = arith.constant 0 : i32
    %c0_i32_1 = arith.constant 0 : i32
    return %c0_i32, %c0_i32_0 : i32, i32
  }
  func.func @transform_2(%arg0: i32, %arg1: i32) -> (i32, i32) {
    %c0_i32 = arith.constant 0 : i32
    %c0_i32_0 = arith.constant 0 : i32
    %c0_i32_1 = arith.constant 0 : i32
    return %c0_i32, %c0_i32_0 : i32, i32
  }
  func.func @transform_3(%arg0: i32, %arg1: i32) -> (i32, i32) {
    %c0_i32 = arith.constant 0 : i32
    %c0_i32_0 = arith.constant 0 : i32
    %c0_i32_1 = arith.constant 0 : i32
    return %c0_i32, %c0_i32_0 : i32, i32
  }
  func.func @transform_4(%arg0: i32, %arg1: i32) -> (i32, i32) {
    %c0_i32 = arith.constant 0 : i32
    %c0_i32_0 = arith.constant 0 : i32
    %c0_i32_1 = arith.constant 0 : i32
    return %c0_i32, %c0_i32_0 : i32, i32
  }
  func.func @transform_5(%arg0: i32, %arg1: i32) -> (i32, i32) {
    %c0_i32 = arith.constant 0 : i32
    %c0_i32_0 = arith.constant 0 : i32
    %c0_i32_1 = arith.constant 0 : i32
    return %c0_i32, %c0_i32_0 : i32, i32
  }
  func.func @transform_6(%arg0: i32, %arg1: i32) -> (i32, i32) {
    %c0_i32 = arith.constant 0 : i32
    %c0_i32_0 = arith.constant 0 : i32
    %c0_i32_1 = arith.constant 0 : i32
    return %c0_i32, %c0_i32_0 : i32, i32
  }
  func.func @transform_7(%arg0: i32, %arg1: i32) -> (i32, i32, i32) {
    %c0_i32 = arith.constant 0 : i32
    %c0_i32_0 = arith.constant 0 : i32
    return %arg0, %arg1, %c0_i32 : i32, i32, i32
  }
}

</mosaic_0001>

<llo_original>
// kernel: tpu_custom_call.1
$region0: #{tpu_custom_call.1}
  #allocation0 [shape = 'u32[]', space=smem, size = 0x4, offset = 0x4, fixed_abs, tag = 'smem constant byte address 0x4 - core index']
  #allocation1 [shape = 'u32[144,128]{1,0:T(1,128)}', space=vmem, size = 0x12000, scoped, tag = 'internal scratch']
  #allocation2 [shape = 'bf16[10,18,32]{2,1,0:T(8,128)(2,1)}', space=vmem, size = 0xf000, scoped, tag = 'scratch operand']
  %s0 = inlined_call_operand.vmem [shape: bf16[2,256,128], index: 0, kind: input, shape index: {}]
  %s1 = inlined_call_operand.vmem [shape: bf16[128,32], index: 1, kind: input, shape index: {}]
  %s2 = inlined_call_operand.vmem [shape: f32[1,32], index: 2, kind: input, shape index: {}]
  %s3 = inlined_call_operand.vmem [shape: bf16[288,32], index: 3, kind: input, shape index: {}]
  %s4 = inlined_call_operand.vmem [shape: f32[1,32], index: 4, kind: input, shape index: {}]
  %s5 = inlined_call_operand.vmem [shape: bf16[32,128], index: 5, kind: input, shape index: {}]
  %s6 = inlined_call_operand.vmem [shape: f32[1,128], index: 6, kind: input, shape index: {}]
  %s7 = inlined_call_operand.hbm [shape: f32[2,256,128], index: 7, kind: output, shape index: {}]
  %s8 = sld [smem:[#allocation0]]
  $region77: #{tpu_custom_call.1} parent=0
    _
  %s10 = ssub.s32 1, %s8
  %s11 = scalar_select 0, %s10, %s8
  $region1: #{tpu_custom_call.1} parent=0
    #allocation3 [shape = 'u8[131072]{0}', space=vmem, size = 0x20000, scoped, tag = 'output window, operand 0']
    #allocation4 [shape = 's32[2]{0}', space=sflag, size = 0x8, scoped, tag = 'scoped memory for tpu_custom_call.1']
    %12 = vsyncpa [#allocation4], 0
    %s13 = scalar_lea.sflag [#allocation4], 1
    %14 = vsyncpa %s13, 0
    loop: start=0, step=1, limit=6
    $region2: #{tpu_custom_call.1} parent=1 // loop_pre_header
      _
    $region3: #{tpu_custom_call.1} parent=1 // loop_header
      %s16 = sphi 0, %s20
      %p17 = scmp.ge.s32.totalorder %s16, 6
      %s23 = sphi 0, %s35
      %s24 = sphi 0, %s31
      %s25 = sphi 0, %s23
      %s26 = sphi 0, %s24
      %s27 = sphi 0, %s25
      %s28 = sphi 0, %s26
      %s38 = sphi 0, %s40
      %s41 = sphi 0, %s38
      %s42 = sphi 0, %s41
      %s58 = sphi 0, %s42
      %s62 = sphi 0, %s62
      %s64 = sphi 0, %s62
      %s65 = sphi 0, %s64
      %s79 = sphi 0, %s65
      %s83 = sphi 0, %s83
      %s85 = sphi 0, %s83
      %s86 = sphi 0, %s85
      %s100 = sphi 0, %s86
      %s104 = sphi 0, %s104
      %s106 = sphi 0, %s104
      %s107 = sphi 0, %s106
      %s121 = sphi 0, %s107
      %s125 = sphi 0, %s125
      %s127 = sphi 0, %s125
      %s128 = sphi 0, %s127
      %s142 = sphi 0, %s128
      %s146 = sphi 0, %s146
      %s148 = sphi 0, %s146
      %s149 = sphi 0, %s148
      %s163 = sphi 0, %s149
      %s167 = sphi 0, %s167
      %s169 = sphi 0, %s167
      %s170 = sphi 0, %s169
      %s184 = sphi 0, %s170
      %s192 = sphi 0, %s194
      %s195 = sphi 0, %s192
      %s196 = sphi 0, %s195
      %s212 = sphi 0, %s196
    $region4: #{tpu_custom_call.1} parent=1 // loop_header_branch
      %19 = sbr.rel (%p17) target = $region8
    $region5: #{tpu_custom_call.1} parent=1 // loop_body
      %s21 = ssub.s32 %s16, 1
      %s22 = ssub.s32 %s16, 2
      %s29 = sadd.s32 1, %s24
      %p30 = scmp.ge.s32.totalorder %s29, 2
      %s31 = scalar_select %p30, 0, %s29
      %s32 = sadd.s32 1, %s23
      %s33 = scalar_select %p30, %s32, %s23
      %p34 = scmp.ge.s32.totalorder %s33, 2
      %s35 = scalar_select %p34, 0, %s33
      %s36 = ssub.s32 %s23, %s35
      %p37 = scmp.eq.s32.totalorder %s36, 0
      %s39 = sadd.s32 %s38, 1
      %s40 = scalar_select %p37, %s38, %s39
      %p43 = pneg %p37
      %p44 = scmp.eq.s32.totalorder %s16, 3
      %p45 = por %p43, %p44
      %p46 = scmp.ne.s32.totalorder %s38, %s41
      %p47 = scmp.eq.s32.totalorder %s16, 0
      %p48 = por %p46, %p47
      %p49 = scmp.ne.s32.totalorder %s38, %s41
      %p50 = scmp.eq.s32.totalorder %s21, 3
      %p51 = por %p49, %p50
      %p52 = scmp.ne.s32.totalorder %s41, %s42
      %p53 = scmp.eq.s32.totalorder %s21, 0
      %p54 = por %p52, %p53
      %p55 = scmp.ne.s32.totalorder %s41, %s42
      %p56 = scmp.eq.s32.totalorder %s22, 3
      %p57 = por %p55, %p56
      %p59 = scmp.ne.s32.totalorder %s42, %s58
      %p60 = scmp.eq.s32.totalorder %s22, 0
      %p61 = por %p59, %p60
      %s63 = sadd.s32 %s62, 1
      %p66 = scmp.eq.s32.totalorder %s16, 3
      %p67 = scmp.ne.s32.totalorder %s62, %s64
      %p68 = scmp.eq.s32.totalorder %s16, 0
      %p69 = por %p67, %p68
      %p70 = scmp.ne.s32.totalorder %s62, %s64
      %p71 = scmp.eq.s32.totalorder %s21, 3
      %p72 = por %p70, %p71
      %p73 = scmp.ne.s32.totalorder %s64, %s65
      %p74 = scmp.eq.s32.totalorder %s21, 0
      %p75 = por %p73, %p74
      %p76 = scmp.ne.s32.totalorder %s64, %s65
      %p77 = scmp.eq.s32.totalorder %s22, 3
      %p78 = por %p76, %p77
      %p80 = scmp.ne.s32.totalorder %s65, %s79
      %p81 = scmp.eq.s32.totalorder %s22, 0
      %p82 = por %p80, %p81
      %s84 = sadd.s32 %s83, 1
      %p87 = scmp.eq.s32.totalorder %s16, 3
      %p88 = scmp.ne.s32.totalorder %s83, %s85
      %p89 = scmp.eq.s32.totalorder %s16, 0
      %p90 = por %p88, %p89
      %p91 = scmp.ne.s32.totalorder %s83, %s85
      %p92 = scmp.eq.s32.totalorder %s21, 3
      %p93 = por %p91, %p92
      %p94 = scmp.ne.s32.totalorder %s85, %s86
      %p95 = scmp.eq.s32.totalorder %s21, 0
      %p96 = por %p94, %p95
      %p97 = scmp.ne.s32.totalorder %s85, %s86
      %p98 = scmp.eq.s32.totalorder %s22, 3
      %p99 = por %p97, %p98
      %p101 = scmp.ne.s32.totalorder %s86, %s100
      %p102 = scmp.eq.s32.totalorder %s22, 0
      %p103 = por %p101, %p102
      %s105 = sadd.s32 %s104, 1
      %p108 = scmp.eq.s32.totalorder %s16, 3
      %p109 = scmp.ne.s32.totalorder %s104, %s106
      %p110 = scmp.eq.s32.totalorder %s16, 0
      %p111 = por %p109, %p110
      %p112 = scmp.ne.s32.totalorder %s104, %s106
      %p113 = scmp.eq.s32.totalorder %s21, 3
      %p114 = por %p112, %p113
      %p115 = scmp.ne.s32.totalorder %s106, %s107
      %p116 = scmp.eq.s32.totalorder %s21, 0
      %p117 = por %p115, %p116
      %p118 = scmp.ne.s32.totalorder %s106, %s107
      %p119 = scmp.eq.s32.totalorder %s22, 3
      %p120 = por %p118, %p119
      %p122 = scmp.ne.s32.totalorder %s107, %s121
      %p123 = scmp.eq.s32.totalorder %s22, 0
      %p124 = por %p122, %p123
      %s126 = sadd.s32 %s125, 1
      %p129 = scmp.eq.s32.totalorder %s16, 3
      %p130 = scmp.ne.s32.totalorder %s125, %s127
      %p131 = scmp.eq.s32.totalorder %s16, 0
      %p132 = por %p130, %p131
      %p133 = scmp.ne.s32.totalorder %s125, %s127
      %p134 = scmp.eq.s32.totalorder %s21, 3
      %p135 = por %p133, %p134
      %p136 = scmp.ne.s32.totalorder %s127, %s128
      %p137 = scmp.eq.s32.totalorder %s21, 0
      %p138 = por %p136, %p137
      %p139 = scmp.ne.s32.totalorder %s127, %s128
      %p140 = scmp.eq.s32.totalorder %s22, 3
      %p141 = por %p139, %p140
      %p143 = scmp.ne.s32.totalorder %s128, %s142
      %p144 = scmp.eq.s32.totalorder %s22, 0
      %p145 = por %p143, %p144
      %s147 = sadd.s32 %s146, 1
      %p150 = scmp.eq.s32.totalorder %s16, 3
      %p151 = scmp.ne.s32.totalorder %s146, %s148
      %p152 = scmp.eq.s32.totalorder %s16, 0
      %p153 = por %p151, %p152
      %p154 = scmp.ne.s32.totalorder %s146, %s148
      %p155 = scmp.eq.s32.totalorder %s21, 3
      %p156 = por %p154, %p155
      %p157 = scmp.ne.s32.totalorder %s148, %s149
      %p158 = scmp.eq.s32.totalorder %s21, 0
      %p159 = por %p157, %p158
      %p160 = scmp.ne.s32.totalorder %s148, %s149
      %p161 = scmp.eq.s32.totalorder %s22, 3
      %p162 = por %p160, %p161
      %p164 = scmp.ne.s32.totalorder %s149, %s163
      %p165 = scmp.eq.s32.totalorder %s22, 0
      %p166 = por %p164, %p165
      %s168 = sadd.s32 %s167, 1
      %p171 = scmp.eq.s32.totalorder %s16, 3
      %p172 = scmp.ne.s32.totalorder %s167, %s169
      %p173 = scmp.eq.s32.totalorder %s16, 0
      %p174 = por %p172, %p173
      %p175 = scmp.ne.s32.totalorder %s167, %s169
      %p176 = scmp.eq.s32.totalorder %s21, 3
      %p177 = por %p175, %p176
      %p178 = scmp.ne.s32.totalorder %s169, %s170
      %p179 = scmp.eq.s32.totalorder %s21, 0
      %p180 = por %p178, %p179
      %p181 = scmp.ne.s32.totalorder %s169, %s170
      %p182 = scmp.eq.s32.totalorder %s22, 3
      %p183 = por %p181, %p182
      %p185 = scmp.ne.s32.totalorder %s170, %s184
      %p186 = scmp.eq.s32.totalorder %s22, 0
      %p187 = por %p185, %p186
      %s188 = ssub.s32 %s23, %s35
      %s189 = ssub.s32 %s24, %s31
      %s190 = sor.u32 %s188, %s189
      %p191 = scmp.eq.s32.totalorder %s190, 0
      %s193 = sadd.s32 %s192, 1
      %s194 = scalar_select %p191, %s192, %s193
      %p197 = pneg %p191
      %p198 = scmp.eq.s32.totalorder %s16, 3
      %p199 = por %p197, %p198
      %p200 = scmp.ne.s32.totalorder %s192, %s195
      %p201 = scmp.eq.s32.totalorder %s16, 0
      %p202 = por %p200, %p201
      %p203 = scmp.ne.s32.totalorder %s192, %s195
      %p204 = scmp.eq.s32.totalorder %s21, 3
      %p205 = por %p203, %p204
      %p206 = scmp.ne.s32.totalorder %s195, %s196
      %p207 = scmp.eq.s32.totalorder %s21, 0
      %p208 = por %p206, %p207
      %p209 = scmp.ne.s32.totalorder %s195, %s196
      %p210 = scmp.eq.s32.totalorder %s22, 3
      %p211 = por %p209, %p210
      %p213 = scmp.ne.s32.totalorder %s196, %s212
      %p214 = scmp.eq.s32.totalorder %s22, 0
      %p215 = por %p213, %p214
      %p216 = scmp.le.s32.totalorder 1, %s16
      %p217 = scmp.lt.s32.totalorder %s16, 5
      %p218 = pnand %p216, %p217
      %p219 = pneg %p218
      // Predicated region
      $region9: #{tpu_custom_call.1} parent=5 // pred_check
        _
      $region10: #{tpu_custom_call.1} parent=5 // pred_check_branch
        %221 = sbr.rel (%p218) target = $region12
      $region11: #{tpu_custom_call.1} parent=5 // pred_region
        %s222 = ssub.s32 %s16, 1
        // Predicated region
        $region13: #{tpu_custom_call.1} parent=11 // pred_check
          %p223 = pneg %p75
        $region14: #{tpu_custom_call.1} parent=11 // pred_check_branch
          %225 = sbr.rel (%p223) target = $region16
        $region15: #{tpu_custom_call.1} parent=11 // pred_region
          _
        $region16: #{tpu_custom_call.1} parent=11 // pred_fallthru
          _
        // Predicated region
        $region17: #{tpu_custom_call.1} parent=11 // pred_check
          %p226 = pneg %p96
        $region18: #{tpu_custom_call.1} parent=11 // pred_check_branch
          %228 = sbr.rel (%p226) target = $region20
        $region19: #{tpu_custom_call.1} parent=11 // pred_region
          _
        $region20: #{tpu_custom_call.1} parent=11 // pred_fallthru
          _
        // Predicated region
        $region21: #{tpu_custom_call.1} parent=11 // pred_check
          %p229 = pneg %p117
        $region22: #{tpu_custom_call.1} parent=11 // pred_check_branch
          %231 = sbr.rel (%p229) target = $region24
        $region23: #{tpu_custom_call.1} parent=11 // pred_region
          _
        $region24: #{tpu_custom_call.1} parent=11 // pred_fallthru
          _
        // Predicated region
        $region25: #{tpu_custom_call.1} parent=11 // pred_check
          %p232 = pneg %p138
        $region26: #{tpu_custom_call.1} parent=11 // pred_check_branch
          %234 = sbr.rel (%p232) target = $region28
        $region27: #{tpu_custom_call.1} parent=11 // pred_region
          _
        $region28: #{tpu_custom_call.1} parent=11 // pred_fallthru
          _
        // Predicated region
        $region29: #{tpu_custom_call.1} parent=11 // pred_check
          %p235 = pneg %p159
        $region30: #{tpu_custom_call.1} parent=11 // pred_check_branch
          %237 = sbr.rel (%p235) target = $region32
        $region31: #{tpu_custom_call.1} parent=11 // pred_region
          _
        $region32: #{tpu_custom_call.1} parent=11 // pred_fallthru
          _
        // Predicated region
        $region33: #{tpu_custom_call.1} parent=11 // pred_check
          %p238 = pneg %p180
        $region34: #{tpu_custom_call.1} parent=11 // pred_check_branch
          %240 = sbr.rel (%p238) target = $region36
        $region35: #{tpu_custom_call.1} parent=11 // pred_region
          _
        $region36: #{tpu_custom_call.1} parent=11 // pred_fallthru
          _
      $region12: #{tpu_custom_call.1} parent=5 // pred_fallthru
        _
      %p241 = scmp.lt.s32.totalorder %s16, 4
      // Predicated region
      $region37: #{tpu_custom_call.1} parent=5 // pred_check
        %p242 = pneg %p241
      $region38: #{tpu_custom_call.1} parent=5 // pred_check_branch
        %244 = sbr.rel (%p242) target = $region40
      $region39: #{tpu_custom_call.1} parent=5 // pred_region
        // Predicated region
        $region41: #{tpu_custom_call.1} parent=39 // pred_check
          %p245 = pneg %p48
        $region42: #{tpu_custom_call.1} parent=39 // pred_check_branch
          %247 = sbr.rel (%p245) target = $region44
        $region43: #{tpu_custom_call.1} parent=39 // pred_region
          %p248 = scmp.lt.s32.totalorder %s23, 1
          %s249 = scalar_select %p248, %s23, 1
          %s250 = smul.addr %s249, 32
          %s251 = smul.addr %s250, 4
          %s252 = scalar_lea.vmem %s0, %s251
        $region44: #{tpu_custom_call.1} parent=39 // pred_fallthru
          _
      $region40: #{tpu_custom_call.1} parent=5 // pred_fallthru
        _
      %p253 = scmp.le.s32.totalorder 1, %s16
      %p254 = scmp.lt.s32.totalorder %s16, 5
      %p255 = pnand %p253, %p254
      %p256 = pneg %p255
      // Predicated region
      $region45: #{tpu_custom_call.1} parent=5 // pred_check
        _
      $region46: #{tpu_custom_call.1} parent=5 // pred_check_branch
        %258 = sbr.rel (%p255) target = $region48
      $region47: #{tpu_custom_call.1} parent=5 // pred_region
        %s259 = ssub.s32 %s16, 1
        %p260 = scmp.lt.s32.totalorder %s25, 1
        %s261 = scalar_select %p260, %s25, 1
        %s262 = smul.addr %s261, 32
        %s263 = smul.addr %s262, 4
        %s264 = scalar_lea.vmem %s0, %s263
        %p265 = pneg %p54
        %p266 = pneg %p51
        %p267 = pneg %p75
        %p268 = pneg %p72
        %p269 = pneg %p96
        %p270 = pneg %p93
        %p271 = pneg %p117
        %p272 = pneg %p114
        %p273 = pneg %p138
        %p274 = pneg %p135
        %p275 = pneg %p159
        %p276 = pneg %p156
        %p277 = pneg %p180
        %p278 = pneg %p177
        %p279 = pneg %p208
        %p280 = pneg %p205
        %s281 = sand.u32 %s195, 1
        %s282 = scalar_lea.sflag [#allocation4], %s281
        %s283 = sand.u32 %s195, 1
        %s284 = smul.addr %s283, 128
        %s285 = scalar_lea.vmem [#allocation3], %s284
        %p286 = scmp.lt.s32.totalorder %s25, 1
        %s287 = scalar_select %p286, %s25, 1
        %s288 = smul.addr %s287, 32
        %s289 = smul.addr %s288, 4
        %s290 = scalar_lea.vmem %s0, %s289
        %s291 = smul.u32 16, %s26
        %s293 = smul.u32 %s26, 8
        %vm294 = vcmask 253952
        %vm295 = vsmask.f32 256
        %vm296 = vmand %vm294, %vm295
        %v297 = vld [vmem:[#allocation2] sm:$0x1]
        %v298 = vsel %vm296, 0, %v297
        %299 = vst [vmem:[#allocation2] sm:$0x1] %v298
        %v300 = vld [vmem:[#allocation2 + $0xc] sm:$0x1]
        %v301 = vsel %vm296, 0, %v300
        %302 = vst [vmem:[#allocation2 + $0xc] sm:$0x1] %v301
        %v303 = vld [vmem:[#allocation2 + $0x18] sm:$0x1]
        %v304 = vsel %vm296, 0, %v303
        %305 = vst [vmem:[#allocation2 + $0x18] sm:$0x1] %v304
        %v306 = vld [vmem:[#allocation2 + $0x24] sm:$0x1]
        %v307 = vsel %vm296, 0, %v306
        %308 = vst [vmem:[#allocation2 + $0x24] sm:$0x1] %v307
        %v309 = vld [vmem:[#allocation2 + $0x30] sm:$0x1]
        %v310 = vsel %vm296, 0, %v309
        %311 = vst [vmem:[#allocation2 + $0x30] sm:$0x1] %v310
        %v312 = vld [vmem:[#allocation2 + $0x3c] sm:$0x1]
        %v313 = vsel %vm296, 0, %v312
        %314 = vst [vmem:[#allocation2 + $0x3c] sm:$0x1] %v313
        %v315 = vld [vmem:[#allocation2 + $0x48] sm:$0x1]
        %v316 = vsel %vm296, 0, %v315
        %317 = vst [vmem:[#allocation2 + $0x48] sm:$0x1] %v316
        %v318 = vld [vmem:[#allocation2 + $0x54] sm:$0x1]
        %v319 = vsel %vm296, 0, %v318
        %320 = vst [vmem:[#allocation2 + $0x54] sm:$0x1] %v319
        %v321 = vld [vmem:[#allocation2 + $0x60] sm:$0x1]
        %v322 = vsel %vm296, 0, %v321
        %323 = vst [vmem:[#allocation2 + $0x60] sm:$0x1] %v322
        %v324 = vld [vmem:[#allocation2 + $0x6c] sm:$0x1]
        %v325 = vsel %vm296, 0, %v324
        %326 = vst [vmem:[#allocation2 + $0x6c] sm:$0x1] %v325
        %vm327 = vsmask.f32 7938
        %vm328 = vmand %vm294, %vm327
        %v329 = vld [vmem:[#allocation2 + $0x8] sm:$0x1]
        %v330 = vsel %vm328, 0, %v329
        %331 = vst [vmem:[#allocation2 + $0x8] sm:$0x1] %v330
        %v332 = vld [vmem:[#allocation2 + $0x14] sm:$0x1]
        %v333 = vsel %vm328, 0, %v332
        %334 = vst [vmem:[#allocation2 + $0x14] sm:$0x1] %v333
        %v335 = vld [vmem:[#allocation2 + $0x20] sm:$0x1]
        %v336 = vsel %vm328, 0, %v335
        %337 = vst [vmem:[#allocation2 + $0x20] sm:$0x1] %v336
        %v338 = vld [vmem:[#allocation2 + $0x2c] sm:$0x1]
        %v339 = vsel %vm328, 0, %v338
        %340 = vst [vmem:[#allocation2 + $0x2c] sm:$0x1] %v339
        %v341 = vld [vmem:[#allocation2 + $0x38] sm:$0x1]
        %v342 = vsel %vm328, 0, %v341
        %343 = vst [vmem:[#allocation2 + $0x38] sm:$0x1] %v342
        %v344 = vld [vmem:[#allocation2 + $0x44] sm:$0x1]
        %v345 = vsel %vm328, 0, %v344
        %346 = vst [vmem:[#allocation2 + $0x44] sm:$0x1] %v345
        %v347 = vld [vmem:[#allocation2 + $0x50] sm:$0x1]
        %v348 = vsel %vm328, 0, %v347
        %349 = vst [vmem:[#allocation2 + $0x50] sm:$0x1] %v348
        %v350 = vld [vmem:[#allocation2 + $0x5c] sm:$0x1]
        %v351 = vsel %vm328, 0, %v350
        %352 = vst [vmem:[#allocation2 + $0x5c] sm:$0x1] %v351
        %v353 = vld [vmem:[#allocation2 + $0x68] sm:$0x1]
        %v354 = vsel %vm328, 0, %v353
        %355 = vst [vmem:[#allocation2 + $0x68] sm:$0x1] %v354
        %v356 = vld [vmem:[#allocation2 + $0x74] sm:$0x1]
        %v357 = vsel %vm328, 0, %v356
        %358 = vst [vmem:[#allocation2 + $0x74] sm:$0x1] %v357
        %s359 = smul.u32 %s26, 128
        %s360 = sshra.s32 %s359, 3
        %s361 = sand.u32 %s359, 7
        %s362 = smul.addr %s360, 4
        %s363 = scalar_lea.vmem %s290, %s362
        %v364 = vld [vmem:[%s363] sm:$0xf]
        %v365 = vld [vmem:[%s363 + $0x4] sm:$0xf]
        %v366 = vld [vmem:[%s363 + $0x8] sm:$0xf]
        %v367 = vld [vmem:[%s363 + $0xc] sm:$0xf]
        %v368 = vld [vmem:[%s363 + $0x10] sm:$0xf]
        %v369 = vld [vmem:[%s363 + $0x14] sm:$0xf]
        %v370 = vld [vmem:[%s363 + $0x18] sm:$0xf]
        %v371 = vld [vmem:[%s363 + $0x1c] sm:$0xf]
        %v372 = vld [vmem:[%s363 + $0x20] sm:$0xf]
        %v373 = vld [vmem:[%s363 + $0x24] sm:$0xf]
        %v374 = vld [vmem:[%s363 + $0x28] sm:$0xf]
        %v375 = vld [vmem:[%s363 + $0x2c] sm:$0xf]
        %v376 = vld [vmem:[%s363 + $0x30] sm:$0xf]
        %v377 = vld [vmem:[%s363 + $0x34] sm:$0xf]
        %v378 = vld [vmem:[%s363 + $0x38] sm:$0xf]
        %v379 = vld [vmem:[%s363 + $0x3c] sm:$0xf]
        %v380 = vld [vmem:[%s1] sm:$0xf]
        %v381 = vld [vmem:[%s1 + $0x4] sm:$0xf]
        %v382 = vld [vmem:[%s1 + $0x8] sm:$0xf]
        %v383 = vld [vmem:[%s1 + $0xc] sm:$0xf]
        %v384 = vld [vmem:[%s1 + $0x10] sm:$0xf]
        %v385 = vld [vmem:[%s1 + $0x14] sm:$0xf]
        %v386 = vld [vmem:[%s1 + $0x18] sm:$0xf]
        %v387 = vld [vmem:[%s1 + $0x1c] sm:$0xf]
        %v388 = vld [vmem:[%s1 + $0x20] sm:$0xf]
        %v389 = vld [vmem:[%s1 + $0x24] sm:$0xf]
        %v390 = vld [vmem:[%s1 + $0x28] sm:$0xf]
        %v391 = vld [vmem:[%s1 + $0x2c] sm:$0xf]
        %v392 = vld [vmem:[%s1 + $0x30] sm:$0xf]
        %v393 = vld [vmem:[%s1 + $0x34] sm:$0xf]
        %v394 = vld [vmem:[%s1 + $0x38] sm:$0xf]
        %v395 = vld [vmem:[%s1 + $0x3c] sm:$0xf]
        %v396 = vld [vmem:[%s2] sm:$0x1]
        %v398 = vlaneseq
        %v399 = vshrl.u32 %v398, 7
        %v400 = vsub.s32 0, %v399
        %v401 = vrot.slane %v396, %v400
        %v419 = vunpack.c.l.b16 %v364
        %v420 = vunpack.c.l.b16 %v365
        %v421 = vunpack.c.l.b16 %v366
        %v422 = vunpack.c.l.b16 %v367
        %v423 = vunpack.c.l.b16 %v368
        %v424 = vunpack.c.l.b16 %v369
        %v425 = vunpack.c.l.b16 %v370
        %v426 = vunpack.c.l.b16 %v371
        %v427 = vunpack.c.l.b16 %v372
        %v428 = vunpack.c.l.b16 %v373
        %v429 = vunpack.c.l.b16 %v374
        %v430 = vunpack.c.l.b16 %v375
        %v431 = vunpack.c.l.b16 %v376
        %v432 = vunpack.c.l.b16 %v377
        %v433 = vunpack.c.l.b16 %v378
        %v434 = vunpack.c.l.b16 %v379
        %v435 = vpack.c.b16 %v420, %v419
        %v436 = vpack.c.b16 %v422, %v421
        %v437 = vpack.c.b16 %v424, %v423
        %v438 = vpack.c.b16 %v426, %v425
        %v439 = vpack.c.b16 %v428, %v427
        %v440 = vpack.c.b16 %v430, %v429
        %v441 = vpack.c.b16 %v432, %v431
        %v442 = vpack.c.b16 %v434, %v433
        %v467 = vunpack.c.l.b16 %v380
        %v468 = vunpack.c.l.b16 %v381
        %v469 = vunpack.c.l.b16 %v382
        %v470 = vunpack.c.l.b16 %v383
        %v471 = vunpack.c.l.b16 %v384
        %v472 = vunpack.c.l.b16 %v385
        %v473 = vunpack.c.l.b16 %v386
        %v474 = vunpack.c.l.b16 %v387
        %v475 = vunpack.c.l.b16 %v388
        %v476 = vunpack.c.l.b16 %v389
        %v477 = vunpack.c.l.b16 %v390
        %v478 = vunpack.c.l.b16 %v391
        %v479 = vunpack.c.l.b16 %v392
        %v480 = vunpack.c.l.b16 %v393
        %v481 = vunpack.c.l.b16 %v394
        %v482 = vunpack.c.l.b16 %v395
        %v483 = vpack.c.b16 %v468, %v467
        %v484 = vpack.c.b16 %v470, %v469
        %v485 = vpack.c.b16 %v472, %v471
        %v486 = vpack.c.b16 %v474, %v473
        %v487 = vpack.c.b16 %v476, %v475
        %v488 = vpack.c.b16 %v478, %v477
        %v489 = vpack.c.b16 %v480, %v479
        %v490 = vpack.c.b16 %v482, %v481
        %499 = vmatprep.subr.bf16.mxu0 0
        %500 = vmatpush1.bf16.msra.mxu0 %v490
        %501 = vmatprep.subr.bf16.mxu0 0
        %502 = vmatpush1.bf16.msra.mxu0 %v489
        %503 = vmatprep.subr.bf16.mxu0 0
        %504 = vmatpush1.bf16.msra.mxu0 %v488
        %505 = vmatprep.subr.bf16.mxu0 0
        %506 = vmatpush1.bf16.msra.mxu0 %v487
        %507 = vmatprep.subr.bf16.mxu0 0
        %508 = vmatpush1.bf16.msra.mxu0 %v486
        %509 = vmatprep.subr.bf16.mxu0 0
        %510 = vmatpush1.bf16.msra.mxu0 %v485
        %511 = vmatprep.subr.bf16.mxu0 0
        %512 = vmatpush1.bf16.msra.mxu0 %v484
        %513 = vmatprep.subr.bf16.mxu0 0
        %514 = vmatpush1.bf16.msra.mxu0 %v483
        %515 = vmatprep.subr.bf16.mxu0 0
        %516 = vmatpush2.bf16.msra.mxu0 0
        %517 = vmatprep.subr.bf16.mxu0 0
        %518 = vmatpush2.bf16.msra.mxu0 0
        %519 = vmatprep.subr.bf16.mxu0 0
        %520 = vmatpush2.bf16.msra.mxu0 0
        %521 = vmatprep.subr.bf16.mxu0 0
        %522 = vmatpush2.bf16.msra.mxu0 0
        %523 = vmatprep.subr.bf16.mxu0 0
        %524 = vmatpush2.bf16.msra.mxu0 0
        %525 = vmatprep.subr.bf16.mxu0 0
        %526 = vmatpush2.bf16.msra.mxu0 0
        %527 = vmatprep.subr.bf16.mxu0 0
        %528 = vmatpush2.bf16.msra.mxu0 0
        %529 = vmatprep.subr.bf16.mxu0 0
        %530 = vmatpush2.bf16.msra.mxu0 0
        %531 = vmatprep.mubr.bf16.mxu0 0
        %532 = vmatmul.mubr.bf16.gmra.mxu0 %v435
        %v533 = vpop.f32.mrf.mxu0
        %v534 = vadd.f32 %v401, %v533
        %v535 = vpop.f32.mrf.mxu0
        %v536 = vpop.f32.mrf.mxu0
        %v537 = vadd.f32 %v401, %v536
        %v538 = vpop.f32.mrf.mxu0
        %539 = vmatprep.mubr.bf16.mxu0 0
        %540 = vmatmul.mubr.bf16.gmra.mxu0 %v436
        %v541 = vpop.f32.mrf.mxu0
        %v542 = vadd.f32 %v401, %v541
        %v543 = vpop.f32.mrf.mxu0
        %v544 = vpop.f32.mrf.mxu0
        %v545 = vadd.f32 %v401, %v544
        %v546 = vpop.f32.mrf.mxu0
        %547 = vmatprep.mubr.bf16.mxu0 0
        %548 = vmatmul.mubr.bf16.gmra.mxu0 %v437
        %v549 = vpop.f32.mrf.mxu0
        %v550 = vadd.f32 %v401, %v549
        %v551 = vpop.f32.mrf.mxu0
        %v552 = vpop.f32.mrf.mxu0
        %v553 = vadd.f32 %v401, %v552
        %v554 = vpop.f32.mrf.mxu0
        %555 = vmatprep.mubr.bf16.mxu0 0
        %556 = vmatmul.mubr.bf16.gmra.mxu0 %v438
        %v557 = vpop.f32.mrf.mxu0
        %v558 = vadd.f32 %v401, %v557
        %v559 = vpop.f32.mrf.mxu0
        %v560 = vpop.f32.mrf.mxu0
        %v561 = vadd.f32 %v401, %v560
        %v562 = vpop.f32.mrf.mxu0
        %563 = vmatprep.mubr.bf16.mxu0 0
        %564 = vmatmul.mubr.bf16.gmra.mxu0 %v439
        %v565 = vpop.f32.mrf.mxu0
        %v566 = vadd.f32 %v401, %v565
        %v567 = vpop.f32.mrf.mxu0
        %v568 = vpop.f32.mrf.mxu0
        %v569 = vadd.f32 %v401, %v568
        %v570 = vpop.f32.mrf.mxu0
        %571 = vmatprep.mubr.bf16.mxu0 0
        %572 = vmatmul.mubr.bf16.gmra.mxu0 %v440
        %v573 = vpop.f32.mrf.mxu0
        %v574 = vadd.f32 %v401, %v573
        %v575 = vpop.f32.mrf.mxu0
        %v576 = vpop.f32.mrf.mxu0
        %v577 = vadd.f32 %v401, %v576
        %v578 = vpop.f32.mrf.mxu0
        %579 = vmatprep.mubr.bf16.mxu0 0
        %580 = vmatmul.mubr.bf16.gmra.mxu0 %v441
        %v581 = vpop.f32.mrf.mxu0
        %v582 = vadd.f32 %v401, %v581
        %v583 = vpop.f32.mrf.mxu0
        %v584 = vpop.f32.mrf.mxu0
        %v585 = vadd.f32 %v401, %v584
        %v586 = vpop.f32.mrf.mxu0
        %587 = vmatprep.mubr.bf16.mxu0 0
        %588 = vmatmul.mubr.bf16.gmra.mxu0 %v442
        %v589 = vpop.f32.mrf.mxu0
        %v590 = vadd.f32 %v401, %v589
        %v591 = vpop.f32.mrf.mxu0
        %v592 = vpop.f32.mrf.mxu0
        %v593 = vadd.f32 %v401, %v592
        %v594 = vpop.f32.mrf.mxu0
        %595 = vdwg.mxu0
        %v596 = vmax.f32 %v534, 0.0
        %v597 = vmax.f32 %v537, 0.0
        %v598 = vmax.f32 %v542, 0.0
        %v599 = vmax.f32 %v545, 0.0
        %v600 = vmax.f32 %v550, 0.0
        %v601 = vmax.f32 %v553, 0.0
        %v602 = vmax.f32 %v558, 0.0
        %v603 = vmax.f32 %v561, 0.0
        %v604 = vmax.f32 %v566, 0.0
        %v605 = vmax.f32 %v569, 0.0
        %v606 = vmax.f32 %v574, 0.0
        %v607 = vmax.f32 %v577, 0.0
        %v608 = vmax.f32 %v582, 0.0
        %v609 = vmax.f32 %v585, 0.0
        %v610 = vmax.f32 %v590, 0.0
        %v611 = vmax.f32 %v593, 0.0
        %v612 = vpack.c.bf16 %v597, %v596
        %v613 = vpack.c.bf16 %v599, %v598
        %v614 = vpack.c.bf16 %v601, %v600
        %v615 = vpack.c.bf16 %v603, %v602
        %v616 = vpack.c.bf16 %v605, %v604
        %v617 = vpack.c.bf16 %v607, %v606
        %v618 = vpack.c.bf16 %v609, %v608
        %v619 = vpack.c.bf16 %v611, %v610
        %v628 = vunpack.c.l.b16 %v612
        %v629 = vunpack.c.h.b16 %v612
        %v630 = vunpack.c.l.b16 %v613
        %v631 = vunpack.c.h.b16 %v613
        %v632 = vunpack.c.l.b16 %v614
        %v633 = vunpack.c.h.b16 %v614
        %v634 = vunpack.c.l.b16 %v615
        %v635 = vunpack.c.h.b16 %v615
        %v636 = vunpack.c.l.b16 %v616
        %v637 = vunpack.c.h.b16 %v616
        %v638 = vunpack.c.l.b16 %v617
        %v639 = vunpack.c.h.b16 %v617
        %v640 = vunpack.c.l.b16 %v618
        %v641 = vunpack.c.h.b16 %v618
        %v642 = vunpack.c.l.b16 %v619
        %v643 = vunpack.c.h.b16 %v619
        %v644 = vpack.c.b16 %v628, %v628
        %v645 = vpack.c.b16 %v629, %v629
        %v646 = vpack.c.b16 %v630, %v630
        %v647 = vpack.c.b16 %v631, %v631
        %v648 = vpack.c.b16 %v632, %v632
        %v649 = vpack.c.b16 %v633, %v633
        %v650 = vpack.c.b16 %v634, %v634
        %v651 = vpack.c.b16 %v635, %v635
        %v652 = vpack.c.b16 %v636, %v636
        %v653 = vpack.c.b16 %v637, %v637
        %v654 = vpack.c.b16 %v638, %v638
        %v655 = vpack.c.b16 %v639, %v639
        %v656 = vpack.c.b16 %v640, %v640
        %v657 = vpack.c.b16 %v641, %v641
        %v658 = vpack.c.b16 %v642, %v642
        %v659 = vpack.c.b16 %v643, %v643
        %vm660 = vsmask.f32 4368
        %vm661 = vmor %vm295, %vm660
        %v663 = vshrl.u32 %v644, 16
        %v665 = vrot.slane %v663, 7
        %v666 = vshll.u32 %v644, 16
        %v668 = vor.u32 %v665, %v666
        %v669 = vrot.slane %v665, 4
        %v671 = vshrl.u32 %v645, 16
        %v673 = vrot.slane %v671, 7
        %v674 = vshll.u32 %v645, 16
        %v676 = vor.u32 %v673, %v674
        %v677 = vsel %vm661, %v669, %v676
        %v678 = vrot.slane %v673, 4
        %v680 = vshrl.u32 %v646, 16
        %v682 = vrot.slane %v680, 7
        %v683 = vshll.u32 %v646, 16
        %v685 = vor.u32 %v682, %v683
        %v686 = vrot.slane %v682, 4
        %v688 = vshrl.u32 %v647, 16
        %v690 = vrot.slane %v688, 7
        %v691 = vshll.u32 %v647, 16
        %v693 = vor.u32 %v690, %v691
        %v694 = vsel %vm661, %v686, %v693
        %v695 = vrot.slane %v690, 4
        %v697 = vshrl.u32 %v648, 16
        %v699 = vrot.slane %v697, 7
        %v700 = vshll.u32 %v648, 16
        %v702 = vor.u32 %v699, %v700
        %v703 = vrot.slane %v699, 4
        %v705 = vshrl.u32 %v649, 16
        %v707 = vrot.slane %v705, 7
        %v708 = vshll.u32 %v649, 16
        %v710 = vor.u32 %v707, %v708
        %v711 = vsel %vm661, %v703, %v710
        %v712 = vrot.slane %v707, 4
        %v714 = vshrl.u32 %v650, 16
        %v716 = vrot.slane %v714, 7
        %v717 = vshll.u32 %v650, 16
        %v719 = vor.u32 %v716, %v717
        %v720 = vrot.slane %v716, 4
        %v722 = vshrl.u32 %v651, 16
        %v724 = vrot.slane %v722, 7
        %v725 = vshll.u32 %v651, 16
        %v727 = vor.u32 %v724, %v725
        %v728 = vsel %vm661, %v720, %v727
        %v729 = vrot.slane %v724, 4
        %v731 = vshrl.u32 %v652, 16
        %v733 = vrot.slane %v731, 7
        %v734 = vshll.u32 %v652, 16
        %v736 = vor.u32 %v733, %v734
        %v737 = vrot.slane %v733, 4
        %v739 = vshrl.u32 %v653, 16
        %v741 = vrot.slane %v739, 7
        %v742 = vshll.u32 %v653, 16
        %v744 = vor.u32 %v741, %v742
        %v745 = vsel %vm661, %v737, %v744
        %v746 = vrot.slane %v741, 4
        %v748 = vshrl.u32 %v654, 16
        %v750 = vrot.slane %v748, 7
        %v751 = vshll.u32 %v654, 16
        %v753 = vor.u32 %v750, %v751
        %v754 = vrot.slane %v750, 4
        %v756 = vshrl.u32 %v655, 16
        %v758 = vrot.slane %v756, 7
        %v759 = vshll.u32 %v655, 16
        %v761 = vor.u32 %v758, %v759
        %v762 = vsel %vm661, %v754, %v761
        %v763 = vrot.slane %v758, 4
        %v765 = vshrl.u32 %v656, 16
        %v767 = vrot.slane %v765, 7
        %v768 = vshll.u32 %v656, 16
        %v770 = vor.u32 %v767, %v768
        %v771 = vrot.slane %v767, 4
        %v773 = vshrl.u32 %v657, 16
        %v775 = vrot.slane %v773, 7
        %v776 = vshll.u32 %v657, 16
        %v778 = vor.u32 %v775, %v776
        %v779 = vsel %vm661, %v771, %v778
        %v780 = vrot.slane %v775, 4
        %v782 = vshrl.u32 %v658, 16
        %v784 = vrot.slane %v782, 7
        %v785 = vshll.u32 %v658, 16
        %v787 = vor.u32 %v784, %v785
        %v788 = vrot.slane %v784, 4
        %v790 = vshrl.u32 %v659, 16
        %v792 = vrot.slane %v790, 7
        %v793 = vshll.u32 %v659, 16
        %v795 = vor.u32 %v792, %v793
        %v796 = vsel %vm661, %v788, %v795
        %v797 = vrot.slane %v792, 4
        %s822 = scalar_lea.vmem [#allocation2], 12
        %vm823 = vcmask 257024
        %vm824 = vmand %vm823, %vm327
        %v825 = vld [vmem:[%s822] sm:$0xf]
        %v826 = vsel %vm824, %v668, %v825
        %827 = vst [vmem:[%s822] sm:$0xf] %v826
        %vm828 = vcmask 257024
        %829 = vst.msk [vmem:[%s822 + $0x4] sm:$0xf] %vm828, %v677
        %v830 = vld [vmem:[%s822 + $0x8] sm:$0x1]
        %v831 = vsel %vm296, %v678, %v830
        %832 = vst [vmem:[%s822 + $0x8] sm:$0x1] %v831
        %v833 = vld [vmem:[%s822 + $0xc] sm:$0xf]
        %v834 = vsel %vm824, %v685, %v833
        %835 = vst [vmem:[%s822 + $0xc] sm:$0xf] %v834
        %836 = vst.msk [vmem:[%s822 + $0x10] sm:$0xf] %vm828, %v694
        %v837 = vld [vmem:[%s822 + $0x14] sm:$0x1]
        %v838 = vsel %vm296, %v695, %v837
        %839 = vst [vmem:[%s822 + $0x14] sm:$0x1] %v838
        %v840 = vld [vmem:[%s822 + $0x18] sm:$0xf]
        %v841 = vsel %vm824, %v702, %v840
        %842 = vst [vmem:[%s822 + $0x18] sm:$0xf] %v841
        %843 = vst.msk [vmem:[%s822 + $0x1c] sm:$0xf] %vm828, %v711
        %v844 = vld [vmem:[%s822 + $0x20] sm:$0x1]
        %v845 = vsel %vm296, %v712, %v844
        %846 = vst [vmem:[%s822 + $0x20] sm:$0x1] %v845
        %v847 = vld [vmem:[%s822 + $0x24] sm:$0xf]
        %v848 = vsel %vm824, %v719, %v847
        %849 = vst [vmem:[%s822 + $0x24] sm:$0xf] %v848
        %850 = vst.msk [vmem:[%s822 + $0x28] sm:$0xf] %vm828, %v728
        %v851 = vld [vmem:[%s822 + $0x2c] sm:$0x1]
        %v852 = vsel %vm296, %v729, %v851
        %853 = vst [vmem:[%s822 + $0x2c] sm:$0x1] %v852
        %v854 = vld [vmem:[%s822 + $0x30] sm:$0xf]
        %v855 = vsel %vm824, %v736, %v854
        %856 = vst [vmem:[%s822 + $0x30] sm:$0xf] %v855
        %857 = vst.msk [vmem:[%s822 + $0x34] sm:$0xf] %vm828, %v745
        %v858 = vld [vmem:[%s822 + $0x38] sm:$0x1]
        %v859 = vsel %vm296, %v746, %v858
        %860 = vst [vmem:[%s822 + $0x38] sm:$0x1] %v859
        %v861 = vld [vmem:[%s822 + $0x3c] sm:$0xf]
        %v862 = vsel %vm824, %v753, %v861
        %863 = vst [vmem:[%s822 + $0x3c] sm:$0xf] %v862
        %864 = vst.msk [vmem:[%s822 + $0x40] sm:$0xf] %vm828, %v762
        %v865 = vld [vmem:[%s822 + $0x44] sm:$0x1]
        %v866 = vsel %vm296, %v763, %v865
        %867 = vst [vmem:[%s822 + $0x44] sm:$0x1] %v866
        %v868 = vld [vmem:[%s822 + $0x48] sm:$0xf]
        %v869 = vsel %vm824, %v770, %v868
        %870 = vst [vmem:[%s822 + $0x48] sm:$0xf] %v869
        %871 = vst.msk [vmem:[%s822 + $0x4c] sm:$0xf] %vm828, %v779
        %v872 = vld [vmem:[%s822 + $0x50] sm:$0x1]
        %v873 = vsel %vm296, %v780, %v872
        %874 = vst [vmem:[%s822 + $0x50] sm:$0x1] %v873
        %v875 = vld [vmem:[%s822 + $0x54] sm:$0xf]
        %v876 = vsel %vm824, %v787, %v875
        %877 = vst [vmem:[%s822 + $0x54] sm:$0xf] %v876
        %878 = vst.msk [vmem:[%s822 + $0x58] sm:$0xf] %vm828, %v796
        %v879 = vld [vmem:[%s822 + $0x5c] sm:$0x1]
        %v880 = vsel %vm296, %v797, %v879
        %881 = vst [vmem:[%s822 + $0x5c] sm:$0x1] %v880
        %p882 = scmp.gt.s32.totalorder %s26, 0
        // Predicated region
        $region49: #{tpu_custom_call.1} parent=47 // pred_check
          %p883 = pneg %p882
        $region50: #{tpu_custom_call.1} parent=47 // pred_check_branch
          %885 = sbr.rel (%p883) target = $region52
        $region51: #{tpu_custom_call.1} parent=47 // pred_region
          %s886 = ssub.s32 %s293, 1
          %s887 = smul.u32 %s886, 16
          %s888 = sshra.s32 %s887, 3
          %s889 = sand.u32 %s887, 7
          %s890 = smul.addr %s888, 4
          %s891 = scalar_lea.vmem %s290, %s890
          %v892 = vld [vmem:[%s891] sm:$0xf]
          %v893 = vld [vmem:[%s891 + $0x4] sm:$0xf]
          %v894 = vld [vmem:[%s1] sm:$0xf]
          %v895 = vld [vmem:[%s1 + $0x4] sm:$0xf]
          %v896 = vld [vmem:[%s1 + $0x8] sm:$0xf]
          %v897 = vld [vmem:[%s1 + $0xc] sm:$0xf]
          %v898 = vld [vmem:[%s1 + $0x10] sm:$0xf]
          %v899 = vld [vmem:[%s1 + $0x14] sm:$0xf]
          %v900 = vld [vmem:[%s1 + $0x18] sm:$0xf]
          %v901 = vld [vmem:[%s1 + $0x1c] sm:$0xf]
          %v902 = vld [vmem:[%s1 + $0x20] sm:$0xf]
          %v903 = vld [vmem:[%s1 + $0x24] sm:$0xf]
          %v904 = vld [vmem:[%s1 + $0x28] sm:$0xf]
          %v905 = vld [vmem:[%s1 + $0x2c] sm:$0xf]
          %v906 = vld [vmem:[%s1 + $0x30] sm:$0xf]
          %v907 = vld [vmem:[%s1 + $0x34] sm:$0xf]
          %v908 = vld [vmem:[%s1 + $0x38] sm:$0xf]
          %v909 = vld [vmem:[%s1 + $0x3c] sm:$0xf]
          %v910 = vld [vmem:[%s2] sm:$0x1]
          %v912 = vlaneseq
          %v913 = vshrl.u32 %v912, 7
          %v914 = vsub.s32 0, %v913
          %v915 = vrot.slane %v910, %v914
          %v919 = vunpack.c.l.b16 %v892
          %v920 = vunpack.c.l.b16 %v893
          %v921 = vpack.c.b16 %v920, %v919
          %v939 = vunpack.c.l.b16 %v894
          %v940 = vunpack.c.l.b16 %v895
          %v941 = vunpack.c.l.b16 %v896
          %v942 = vunpack.c.l.b16 %v897
          %v943 = vunpack.c.l.b16 %v898
          %v944 = vunpack.c.l.b16 %v899
          %v945 = vunpack.c.l.b16 %v900
          %v946 = vunpack.c.l.b16 %v901
          %v947 = vunpack.c.l.b16 %v902
          %v948 = vunpack.c.l.b16 %v903
          %v949 = vunpack.c.l.b16 %v904
          %v950 = vunpack.c.l.b16 %v905
          %v951 = vunpack.c.l.b16 %v906
          %v952 = vunpack.c.l.b16 %v907
          %v953 = vunpack.c.l.b16 %v908
          %v954 = vunpack.c.l.b16 %v909
          %v955 = vpack.c.b16 %v940, %v939
          %v956 = vpack.c.b16 %v942, %v941
          %v957 = vpack.c.b16 %v944, %v943
          %v958 = vpack.c.b16 %v946, %v945
          %v959 = vpack.c.b16 %v948, %v947
          %v960 = vpack.c.b16 %v950, %v949
          %v961 = vpack.c.b16 %v952, %v951
          %v962 = vpack.c.b16 %v954, %v953
          %971 = vmatprep.subr.bf16.mxu0 0
          %972 = vmatpush1.bf16.msra.mxu0 %v962
          %973 = vmatprep.subr.bf16.mxu0 0
          %974 = vmatpush1.bf16.msra.mxu0 %v961
          %975 = vmatprep.subr.bf16.mxu0 0
          %976 = vmatpush1.bf16.msra.mxu0 %v960
          %977 = vmatprep.subr.bf16.mxu0 0
          %978 = vmatpush1.bf16.msra.mxu0 %v959
          %979 = vmatprep.subr.bf16.mxu0 0
          %980 = vmatpush1.bf16.msra.mxu0 %v958
          %981 = vmatprep.subr.bf16.mxu0 0
          %982 = vmatpush1.bf16.msra.mxu0 %v957
          %983 = vmatprep.subr.bf16.mxu0 0
          %984 = vmatpush1.bf16.msra.mxu0 %v956
          %985 = vmatprep.subr.bf16.mxu0 0
          %986 = vmatpush1.bf16.msra.mxu0 %v955
          %987 = vmatprep.subr.bf16.mxu0 0
          %988 = vmatpush2.bf16.msra.mxu0 0
          %989 = vmatprep.subr.bf16.mxu0 0
          %990 = vmatpush2.bf16.msra.mxu0 0
          %991 = vmatprep.subr.bf16.mxu0 0
          %992 = vmatpush2.bf16.msra.mxu0 0
          %993 = vmatprep.subr.bf16.mxu0 0
          %994 = vmatpush2.bf16.msra.mxu0 0
          %995 = vmatprep.subr.bf16.mxu0 0
          %996 = vmatpush2.bf16.msra.mxu0 0
          %997 = vmatprep.subr.bf16.mxu0 0
          %998 = vmatpush2.bf16.msra.mxu0 0
          %999 = vmatprep.subr.bf16.mxu0 0
          %1000 = vmatpush2.bf16.msra.mxu0 0
          %1001 = vmatprep.subr.bf16.mxu0 0
          %1002 = vmatpush2.bf16.msra.mxu0 0
          %1003 = vmatprep.mubr.bf16.mxu0 0
          %1004 = vmatmul.mubr.bf16.gmra.mxu0 %v921
          %v1005 = vpop.f32.mrf.mxu0
          %v1006 = vadd.f32 %v915, %v1005
          %v1007 = vpop.f32.mrf.mxu0
          %v1008 = vpop.f32.mrf.mxu0
          %v1009 = vadd.f32 %v915, %v1008
          %v1010 = vpop.f32.mrf.mxu0
          %1011 = vdwg.mxu0
          %v1012 = vmax.f32 %v1006, 0.0
          %v1013 = vmax.f32 %v1009, 0.0
          %v1014 = vpack.c.bf16 %v1013, %v1012
          %v1016 = vunpack.c.l.b16 %v1014
          %v1017 = vunpack.c.h.b16 %v1014
          %v1018 = vpack.c.b16 %v1016, %v1016
          %v1019 = vpack.c.b16 %v1017, %v1017
          %v1021 = vshrl.u32 %v1018, 16
          %v1023 = vrot.slane %v1021, 7
          %v1024 = vshll.u32 %v1018, 16
          %v1026 = vor.u32 %v1023, %v1024
          %v1027 = vrot.slane %v1023, 4
          %v1029 = vshrl.u32 %v1019, 16
          %v1031 = vrot.slane %v1029, 7
          %v1032 = vshll.u32 %v1019, 16
          %v1034 = vor.u32 %v1031, %v1032
          %v1035 = vsel %vm661, %v1027, %v1034
          %v1036 = vrot.slane %v1031, 4
          %v1040 = vld [vmem:[#allocation2] sm:$0xf]
          %v1041 = vsel %vm824, %v1026, %v1040
          %1042 = vst [vmem:[#allocation2] sm:$0xf] %v1041
          %1043 = vst.msk [vmem:[#allocation2 + $0x4] sm:$0xf] %vm828, %v1035
          %v1044 = vld [vmem:[#allocation2 + $0x8] sm:$0x1]
          %v1045 = vsel %vm296, %v1036, %v1044
          %1046 = vst [vmem:[#allocation2 + $0x8] sm:$0x1] %v1045
        $region52: #{tpu_custom_call.1} parent=47 // pred_fallthru
          _
        %p1047 = scmp.eq.s32.totalorder %s26, 0
        // Predicated region
        $region53: #{tpu_custom_call.1} parent=47 // pred_check
          %p1048 = pneg %p1047
        $region54: #{tpu_custom_call.1} parent=47 // pred_check_branch
          %1050 = sbr.rel (%p1048) target = $region56
        $region55: #{tpu_custom_call.1} parent=47 // pred_region
          %v1051 = vld [vmem:[#allocation2] sm:$0xf]
          %v1052 = vsel %vm824, 0, %v1051
          %1053 = vst [vmem:[#allocation2] sm:$0xf] %v1052
          %1054 = vst.msk [vmem:[#allocation2 + $0x4] sm:$0xf] %vm828, 0
          %v1055 = vld [vmem:[#allocation2 + $0x8] sm:$0x1]
          %v1056 = vsel %vm296, 0, %v1055
          %1057 = vst [vmem:[#allocation2 + $0x8] sm:$0x1] %v1056
        $region56: #{tpu_custom_call.1} parent=47 // pred_fallthru
          _
        %p1058 = scmp.lt.s32.totalorder %s26, 1
        // Predicated region
        $region57: #{tpu_custom_call.1} parent=47 // pred_check
          %p1059 = pneg %p1058
        $region58: #{tpu_custom_call.1} parent=47 // pred_check_branch
          %1061 = sbr.rel (%p1059) target = $region60
        $region59: #{tpu_custom_call.1} parent=47 // pred_region
          %s1062 = sadd.s32 %s293, 8
          %s1063 = smul.u32 %s1062, 16
          %s1064 = sshra.s32 %s1063, 3
          %s1065 = sand.u32 %s1063, 7
          %s1066 = smul.addr %s1064, 4
          %s1067 = scalar_lea.vmem %s290, %s1066
          %v1068 = vld [vmem:[%s1067] sm:$0xf]
          %v1069 = vld [vmem:[%s1067 + $0x4] sm:$0xf]
          %v1070 = vld [vmem:[%s1] sm:$0xf]
          %v1071 = vld [vmem:[%s1 + $0x4] sm:$0xf]
          %v1072 = vld [vmem:[%s1 + $0x8] sm:$0xf]
          %v1073 = vld [vmem:[%s1 + $0xc] sm:$0xf]
          %v1074 = vld [vmem:[%s1 + $0x10] sm:$0xf]
          %v1075 = vld [vmem:[%s1 + $0x14] sm:$0xf]
          %v1076 = vld [vmem:[%s1 + $0x18] sm:$0xf]
          %v1077 = vld [vmem:[%s1 + $0x1c] sm:$0xf]
          %v1078 = vld [vmem:[%s1 + $0x20] sm:$0xf]
          %v1079 = vld [vmem:[%s1 + $0x24] sm:$0xf]
          %v1080 = vld [vmem:[%s1 + $0x28] sm:$0xf]
          %v1081 = vld [vmem:[%s1 + $0x2c] sm:$0xf]
          %v1082 = vld [vmem:[%s1 + $0x30] sm:$0xf]
          %v1083 = vld [vmem:[%s1 + $0x34] sm:$0xf]
          %v1084 = vld [vmem:[%s1 + $0x38] sm:$0xf]
          %v1085 = vld [vmem:[%s1 + $0x3c] sm:$0xf]
          %v1086 = vld [vmem:[%s2] sm:$0x1]
          %v1088 = vlaneseq
          %v1089 = vshrl.u32 %v1088, 7
          %v1090 = vsub.s32 0, %v1089
          %v1091 = vrot.slane %v1086, %v1090
          %v1095 = vunpack.c.l.b16 %v1068
          %v1096 = vunpack.c.l.b16 %v1069
          %v1097 = vpack.c.b16 %v1096, %v1095
          %v1115 = vunpack.c.l.b16 %v1070
          %v1116 = vunpack.c.l.b16 %v1071
          %v1117 = vunpack.c.l.b16 %v1072
          %v1118 = vunpack.c.l.b16 %v1073
          %v1119 = vunpack.c.l.b16 %v1074
          %v1120 = vunpack.c.l.b16 %v1075
          %v1121 = vunpack.c.l.b16 %v1076
          %v1122 = vunpack.c.l.b16 %v1077
          %v1123 = vunpack.c.l.b16 %v1078
          %v1124 = vunpack.c.l.b16 %v1079
          %v1125 = vunpack.c.l.b16 %v1080
          %v1126 = vunpack.c.l.b16 %v1081
          %v1127 = vunpack.c.l.b16 %v1082
          %v1128 = vunpack.c.l.b16 %v1083
          %v1129 = vunpack.c.l.b16 %v1084
          %v1130 = vunpack.c.l.b16 %v1085
          %v1131 = vpack.c.b16 %v1116, %v1115
          %v1132 = vpack.c.b16 %v1118, %v1117
          %v1133 = vpack.c.b16 %v1120, %v1119
          %v1134 = vpack.c.b16 %v1122, %v1121
          %v1135 = vpack.c.b16 %v1124, %v1123
          %v1136 = vpack.c.b16 %v1126, %v1125
          %v1137 = vpack.c.b16 %v1128, %v1127
          %v1138 = vpack.c.b16 %v1130, %v1129
          %1147 = vmatprep.subr.bf16.mxu0 0
          %1148 = vmatpush1.bf16.msra.mxu0 %v1138
          %1149 = vmatprep.subr.bf16.mxu0 0
          %1150 = vmatpush1.bf16.msra.mxu0 %v1137
          %1151 = vmatprep.subr.bf16.mxu0 0
          %1152 = vmatpush1.bf16.msra.mxu0 %v1136
          %1153 = vmatprep.subr.bf16.mxu0 0
          %1154 = vmatpush1.bf16.msra.mxu0 %v1135
          %1155 = vmatprep.subr.bf16.mxu0 0
          %1156 = vmatpush1.bf16.msra.mxu0 %v1134
          %1157 = vmatprep.subr.bf16.mxu0 0
          %1158 = vmatpush1.bf16.msra.mxu0 %v1133
          %1159 = vmatprep.subr.bf16.mxu0 0
          %1160 = vmatpush1.bf16.msra.mxu0 %v1132
          %1161 = vmatprep.subr.bf16.mxu0 0
          %1162 = vmatpush1.bf16.msra.mxu0 %v1131
          %1163 = vmatprep.subr.bf16.mxu0 0
          %1164 = vmatpush2.bf16.msra.mxu0 0
          %1165 = vmatprep.subr.bf16.mxu0 0
          %1166 = vmatpush2.bf16.msra.mxu0 0
          %1167 = vmatprep.subr.bf16.mxu0 0
          %1168 = vmatpush2.bf16.msra.mxu0 0
          %1169 = vmatprep.subr.bf16.mxu0 0
          %1170 = vmatpush2.bf16.msra.mxu0 0
          %1171 = vmatprep.subr.bf16.mxu0 0
          %1172 = vmatpush2.bf16.msra.mxu0 0
          %1173 = vmatprep.subr.bf16.mxu0 0
          %1174 = vmatpush2.bf16.msra.mxu0 0
          %1175 = vmatprep.subr.bf16.mxu0 0
          %1176 = vmatpush2.bf16.msra.mxu0 0
          %1177 = vmatprep.subr.bf16.mxu0 0
          %1178 = vmatpush2.bf16.msra.mxu0 0
          %1179 = vmatprep.mubr.bf16.mxu0 0
          %1180 = vmatmul.mubr.bf16.gmra.mxu0 %v1097
          %v1181 = vpop.f32.mrf.mxu0
          %v1182 = vadd.f32 %v1091, %v1181
          %v1183 = vpop.f32.mrf.mxu0
          %v1184 = vpop.f32.mrf.mxu0
          %v1185 = vadd.f32 %v1091, %v1184
          %v1186 = vpop.f32.mrf.mxu0
          %1187 = vdwg.mxu0
          %v1188 = vmax.f32 %v1182, 0.0
          %v1189 = vmax.f32 %v1185, 0.0
          %v1190 = vpack.c.bf16 %v1189, %v1188
          %v1192 = vunpack.c.l.b16 %v1190
          %v1193 = vunpack.c.h.b16 %v1190
          %v1194 = vpack.c.b16 %v1192, %v1192
          %v1195 = vpack.c.b16 %v1193, %v1193
          %v1197 = vshrl.u32 %v1194, 16
          %v1199 = vrot.slane %v1197, 7
          %v1200 = vshll.u32 %v1194, 16
          %v1202 = vor.u32 %v1199, %v1200
          %v1203 = vrot.slane %v1199, 4
          %v1205 = vshrl.u32 %v1195, 16
          %v1207 = vrot.slane %v1205, 7
          %v1208 = vshll.u32 %v1195, 16
          %v1210 = vor.u32 %v1207, %v1208
          %v1211 = vsel %vm661, %v1203, %v1210
          %v1212 = vrot.slane %v1207, 4
          %s1216 = scalar_lea.vmem [#allocation2], 108
          %v1217 = vld [vmem:[%s1216] sm:$0xf]
          %v1218 = vsel %vm824, %v1202, %v1217
          %1219 = vst [vmem:[%s1216] sm:$0xf] %v1218
          %1220 = vst.msk [vmem:[%s1216 + $0x4] sm:$0xf] %vm828, %v1211
          %v1221 = vld [vmem:[%s1216 + $0x8] sm:$0x1]
          %v1222 = vsel %vm296, %v1212, %v1221
          %1223 = vst [vmem:[%s1216 + $0x8] sm:$0x1] %v1222
        $region60: #{tpu_custom_call.1} parent=47 // pred_fallthru
          _
        %p1224 = scmp.eq.s32.totalorder %s26, 1
        // Predicated region
        $region61: #{tpu_custom_call.1} parent=47 // pred_check
          %p1225 = pneg %p1224
        $region62: #{tpu_custom_call.1} parent=47 // pred_check_branch
          %1227 = sbr.rel (%p1225) target = $region64
        $region63: #{tpu_custom_call.1} parent=47 // pred_region
          %s1228 = scalar_lea.vmem [#allocation2], 108
          %v1229 = vld [vmem:[%s1228] sm:$0xf]
          %v1230 = vsel %vm824, 0, %v1229
          %1231 = vst [vmem:[%s1228] sm:$0xf] %v1230
          %1232 = vst.msk [vmem:[%s1228 + $0x4] sm:$0xf] %vm828, 0
          %v1233 = vld [vmem:[%s1228 + $0x8] sm:$0x1]
          %v1234 = vsel %vm296, 0, %v1233
          %1235 = vst [vmem:[%s1228 + $0x8] sm:$0x1] %v1234
        $region64: #{tpu_custom_call.1} parent=47 // pred_fallthru
          _
        %v1236 = vld [vmem:[#allocation2] sm:$0xf]
        %v1237 = vld [vmem:[#allocation2 + $0x4] sm:$0xf]
        %v1238 = vld [vmem:[#allocation2 + $0x8] sm:$0x1]
        %v1239 = vld [vmem:[#allocation2 + $0xc] sm:$0xf]
        %v1240 = vld [vmem:[#allocation2 + $0x10] sm:$0xf]
        %v1241 = vld [vmem:[#allocation2 + $0x14] sm:$0x1]
        %v1242 = vld [vmem:[#allocation2 + $0x18] sm:$0xf]
        %v1243 = vld [vmem:[#allocation2 + $0x1c] sm:$0xf]
        %v1244 = vld [vmem:[#allocation2 + $0x20] sm:$0x1]
        %v1245 = vld [vmem:[#allocation2 + $0x24] sm:$0xf]
        %v1246 = vld [vmem:[#allocation2 + $0x28] sm:$0xf]
        %v1247 = vld [vmem:[#allocation2 + $0x2c] sm:$0x1]
        %v1248 = vld [vmem:[#allocation2 + $0x30] sm:$0xf]
        %v1249 = vld [vmem:[#allocation2 + $0x34] sm:$0xf]
        %v1250 = vld [vmem:[#allocation2 + $0x38] sm:$0x1]
        %v1251 = vld [vmem:[#allocation2 + $0x3c] sm:$0xf]
        %v1252 = vld [vmem:[#allocation2 + $0x40] sm:$0xf]
        %v1253 = vld [vmem:[#allocation2 + $0x44] sm:$0x1]
        %v1254 = vld [vmem:[#allocation2 + $0x48] sm:$0xf]
        %v1255 = vld [vmem:[#allocation2 + $0x4c] sm:$0xf]
        %v1256 = vld [vmem:[#allocation2 + $0x50] sm:$0x1]
        %v1257 = vld [vmem:[#allocation2 + $0x54] sm:$0xf]
        %v1258 = vld [vmem:[#allocation2 + $0x58] sm:$0xf]
        %v1259 = vld [vmem:[#allocation2 + $0x5c] sm:$0x1]
        %v1260 = vld [vmem:[#allocation2 + $0x60] sm:$0xf]
        %v1261 = vld [vmem:[#allocation2 + $0x64] sm:$0xf]
        %v1262 = vld [vmem:[#allocation2 + $0x68] sm:$0x1]
        %v1263 = vld [vmem:[#allocation2 + $0x6c] sm:$0xf]
        %v1264 = vld [vmem:[#allocation2 + $0x70] sm:$0xf]
        %v1265 = vld [vmem:[#allocation2 + $0x74] sm:$0x1]
        %v1282 = vunpack.c.l.b16 %v1236
        %v1283 = vunpack.c.l.b16 %v1237
        %v1284 = vunpack.c.l.b16 %v1239
        %v1285 = vunpack.c.l.b16 %v1240
        %v1286 = vunpack.c.l.b16 %v1242
        %v1287 = vunpack.c.l.b16 %v1243
        %v1288 = vunpack.c.l.b16 %v1245
        %v1289 = vunpack.c.l.b16 %v1246
        %v1290 = vunpack.c.l.b16 %v1248
        %v1291 = vunpack.c.l.b16 %v1249
        %v1292 = vunpack.c.l.b16 %v1251
        %v1293 = vunpack.c.l.b16 %v1252
        %v1294 = vunpack.c.l.b16 %v1254
        %v1295 = vunpack.c.l.b16 %v1255
        %v1296 = vunpack.c.l.b16 %v1257
        %v1297 = vunpack.c.l.b16 %v1258
        %v1298 = vpack.c.b16 %v1283, %v1282
        %v1299 = vpack.c.b16 %v1285, %v1284
        %v1300 = vpack.c.b16 %v1287, %v1286
        %v1301 = vpack.c.b16 %v1289, %v1288
        %v1302 = vpack.c.b16 %v1291, %v1290
        %v1303 = vpack.c.b16 %v1293, %v1292
        %v1304 = vpack.c.b16 %v1295, %v1294
        %v1305 = vpack.c.b16 %v1297, %v1296
        %v1314 = vunpack.c.l.b16 %v1238
        %v1315 = vunpack.c.l.b16 %v1241
        %v1316 = vunpack.c.l.b16 %v1244
        %v1317 = vunpack.c.l.b16 %v1247
        %v1318 = vunpack.c.l.b16 %v1250
        %v1319 = vunpack.c.l.b16 %v1253
        %v1320 = vunpack.c.l.b16 %v1256
        %v1321 = vunpack.c.l.b16 %v1259
        %v1322 = vpack.c.b16 %v1314, %v1314
        %v1323 = vpack.c.b16 %v1315, %v1315
        %v1324 = vpack.c.b16 %v1316, %v1316
        %v1325 = vpack.c.b16 %v1317, %v1317
        %v1326 = vpack.c.b16 %v1318, %v1318
        %v1327 = vpack.c.b16 %v1319, %v1319
        %v1328 = vpack.c.b16 %v1320, %v1320
        %v1329 = vpack.c.b16 %v1321, %v1321
        %vm1330 = vsmask.f32 7424
        %v1332 = vshrl.u32 %v1298, 16
        %v1334 = vshll.u32 %v1298, 16
        %v1336 = vrot.slane %v1334, 1
        %v1337 = vor.u32 %v1332, %v1336
        %v1339 = vshll.u32 %v1322, 16
        %v1341 = vrot.slane %v1339, 1
        %v1342 = vsel %vm1330, %v1337, %v1341
        %v1344 = vshrl.u32 %v1299, 16
        %v1346 = vshll.u32 %v1299, 16
        %v1348 = vrot.slane %v1346, 1
        %v1349 = vor.u32 %v1344, %v1348
        %v1351 = vshll.u32 %v1323, 16
        %v1353 = vrot.slane %v1351, 1
        %v1354 = vsel %vm1330, %v1349, %v1353
        %v1356 = vshrl.u32 %v1300, 16
        %v1358 = vshll.u32 %v1300, 16
        %v1360 = vrot.slane %v1358, 1
        %v1361 = vor.u32 %v1356, %v1360
        %v1363 = vshll.u32 %v1324, 16
        %v1365 = vrot.slane %v1363, 1
        %v1366 = vsel %vm1330, %v1361, %v1365
        %v1368 = vshrl.u32 %v1301, 16
        %v1370 = vshll.u32 %v1301, 16
        %v1372 = vrot.slane %v1370, 1
        %v1373 = vor.u32 %v1368, %v1372
        %v1375 = vshll.u32 %v1325, 16
        %v1377 = vrot.slane %v1375, 1
        %v1378 = vsel %vm1330, %v1373, %v1377
        %v1380 = vshrl.u32 %v1302, 16
        %v1382 = vshll.u32 %v1302, 16
        %v1384 = vrot.slane %v1382, 1
        %v1385 = vor.u32 %v1380, %v1384
        %v1387 = vshll.u32 %v1326, 16
        %v1389 = vrot.slane %v1387, 1
        %v1390 = vsel %vm1330, %v1385, %v1389
        %v1392 = vshrl.u32 %v1303, 16
        %v1394 = vshll.u32 %v1303, 16
        %v1396 = vrot.slane %v1394, 1
        %v1397 = vor.u32 %v1392, %v1396
        %v1399 = vshll.u32 %v1327, 16
        %v1401 = vrot.slane %v1399, 1
        %v1402 = vsel %vm1330, %v1397, %v1401
        %v1404 = vshrl.u32 %v1304, 16
        %v1406 = vshll.u32 %v1304, 16
        %v1408 = vrot.slane %v1406, 1
        %v1409 = vor.u32 %v1404, %v1408
        %v1411 = vshll.u32 %v1328, 16
        %v1413 = vrot.slane %v1411, 1
        %v1414 = vsel %vm1330, %v1409, %v1413
        %v1416 = vshrl.u32 %v1305, 16
        %v1418 = vshll.u32 %v1305, 16
        %v1420 = vrot.slane %v1418, 1
        %v1421 = vor.u32 %v1416, %v1420
        %v1423 = vshll.u32 %v1329, 16
        %v1425 = vrot.slane %v1423, 1
        %v1426 = vsel %vm1330, %v1421, %v1425
        %1427 = vrot.lane.b32.xlu0 %v1342, 32
        %v1428 = vpop.permute.xlu0 %1427
        %1429 = vrot.lane.b32.xlu0 %v1354, 32
        %v1430 = vpop.permute.xlu0 %1429
        %1431 = vrot.lane.b32.xlu0 %v1366, 32
        %v1432 = vpop.permute.xlu0 %1431
        %1433 = vrot.lane.b32.xlu0 %v1378, 32
        %v1434 = vpop.permute.xlu0 %1433
        %1435 = vrot.lane.b32.xlu0 %v1390, 32
        %v1436 = vpop.permute.xlu0 %1435
        %1437 = vrot.lane.b32.xlu0 %v1402, 32
        %v1438 = vpop.permute.xlu0 %1437
        %1439 = vrot.lane.b32.xlu0 %v1414, 32
        %v1440 = vpop.permute.xlu0 %1439
        %1441 = vrot.lane.b32.xlu0 %v1426, 32
        %v1442 = vpop.permute.xlu0 %1441
        %vm1443 = vcmask 1046528
        %v1444 = vrot.slane %v1298, 1
        %v1445 = vrot.slane %v1322, 1
        %v1446 = vsel %vm1443, %v1444, %v1445
        %v1447 = vrot.slane %v1299, 1
        %v1448 = vrot.slane %v1323, 1
        %v1449 = vsel %vm1443, %v1447, %v1448
        %v1450 = vrot.slane %v1300, 1
        %v1451 = vrot.slane %v1324, 1
        %v1452 = vsel %vm1443, %v1450, %v1451
        %v1453 = vrot.slane %v1301, 1
        %v1454 = vrot.slane %v1325, 1
        %v1455 = vsel %vm1443, %v1453, %v1454
        %v1456 = vrot.slane %v1302, 1
        %v1457 = vrot.slane %v1326, 1
        %v1458 = vsel %vm1443, %v1456, %v1457
        %v1459 = vrot.slane %v1303, 1
        %v1460 = vrot.slane %v1327, 1
        %v1461 = vsel %vm1443, %v1459, %v1460
        %v1462 = vrot.slane %v1304, 1
        %v1463 = vrot.slane %v1328, 1
        %v1464 = vsel %vm1443, %v1462, %v1463
        %v1465 = vrot.slane %v1305, 1
        %v1466 = vrot.slane %v1329, 1
        %v1467 = vsel %vm1443, %v1465, %v1466
        %1468 = vrot.lane.b32.xlu0 %v1446, 64
        %v1469 = vpop.permute.xlu0 %1468
        %1470 = vrot.lane.b32.xlu0 %v1449, 64
        %v1471 = vpop.permute.xlu0 %1470
        %1472 = vrot.lane.b32.xlu0 %v1452, 64
        %v1473 = vpop.permute.xlu0 %1472
        %1474 = vrot.lane.b32.xlu0 %v1455, 64
        %v1475 = vpop.permute.xlu0 %1474
        %1476 = vrot.lane.b32.xlu0 %v1458, 64
        %v1477 = vpop.permute.xlu0 %1476
        %1478 = vrot.lane.b32.xlu0 %v1461, 64
        %v1479 = vpop.permute.xlu0 %1478
        %1480 = vrot.lane.b32.xlu0 %v1464, 64
        %v1481 = vpop.permute.xlu0 %1480
        %1482 = vrot.lane.b32.xlu0 %v1467, 64
        %v1483 = vpop.permute.xlu0 %1482
        %v1486 = vunpack.c.l.b16 %v1260
        %v1487 = vunpack.c.l.b16 %v1261
        %v1488 = vpack.c.b16 %v1487, %v1486
        %1489 = vrot.lane.b32.xlu0 %v1299, 96
        %v1490 = vpop.permute.xlu0 %1489
        %1491 = vrot.lane.b32.xlu0 %v1300, 96
        %v1492 = vpop.permute.xlu0 %1491
        %1493 = vrot.lane.b32.xlu0 %v1301, 96
        %v1494 = vpop.permute.xlu0 %1493
        %1495 = vrot.lane.b32.xlu0 %v1302, 96
        %v1496 = vpop.permute.xlu0 %1495
        %1497 = vrot.lane.b32.xlu0 %v1303, 96
        %v1498 = vpop.permute.xlu0 %1497
        %1499 = vrot.lane.b32.xlu0 %v1304, 96
        %v1500 = vpop.permute.xlu0 %1499
        %1501 = vrot.lane.b32.xlu0 %v1305, 96
        %v1502 = vpop.permute.xlu0 %1501
        %1503 = vrot.lane.b32.xlu0 %v1488, 96
        %v1504 = vpop.permute.xlu0 %1503
        %v1506 = vunpack.c.l.b16 %v1262
        %v1507 = vpack.c.b16 %v1506, %v1506
        %v1509 = vshrl.u32 %v1488, 16
        %v1511 = vshll.u32 %v1488, 16
        %v1513 = vrot.slane %v1511, 1
        %v1514 = vor.u32 %v1509, %v1513
        %v1516 = vshll.u32 %v1507, 16
        %v1518 = vrot.slane %v1516, 1
        %v1519 = vsel %vm1330, %v1514, %v1518
        %v1520 = vrot.slane %v1488, 1
        %v1521 = vrot.slane %v1507, 1
        %v1522 = vsel %vm1443, %v1520, %v1521
        %1523 = vrot.lane.b32.xlu0 %v1449, 32
        %v1524 = vpop.permute.xlu0 %1523
        %1525 = vrot.lane.b32.xlu0 %v1452, 32
        %v1526 = vpop.permute.xlu0 %1525
        %1527 = vrot.lane.b32.xlu0 %v1455, 32
        %v1528 = vpop.permute.xlu0 %1527
        %1529 = vrot.lane.b32.xlu0 %v1458, 32
        %v1530 = vpop.permute.xlu0 %1529
        %1531 = vrot.lane.b32.xlu0 %v1461, 32
        %v1532 = vpop.permute.xlu0 %1531
        %1533 = vrot.lane.b32.xlu0 %v1464, 32
        %v1534 = vpop.permute.xlu0 %1533
        %1535 = vrot.lane.b32.xlu0 %v1467, 32
        %v1536 = vpop.permute.xlu0 %1535
        %1537 = vrot.lane.b32.xlu0 %v1522, 32
        %v1538 = vpop.permute.xlu0 %1537
        %v1541 = vunpack.c.l.b16 %v1263
        %v1542 = vunpack.c.l.b16 %v1264
        %v1543 = vpack.c.b16 %v1542, %v1541
        %1544 = vrot.lane.b32.xlu0 %v1300, 64
        %v1545 = vpop.permute.xlu0 %1544
        %1546 = vrot.lane.b32.xlu0 %v1301, 64
        %v1547 = vpop.permute.xlu0 %1546
        %1548 = vrot.lane.b32.xlu0 %v1302, 64
        %v1549 = vpop.permute.xlu0 %1548
        %1550 = vrot.lane.b32.xlu0 %v1303, 64
        %v1551 = vpop.permute.xlu0 %1550
        %1552 = vrot.lane.b32.xlu0 %v1304, 64
        %v1553 = vpop.permute.xlu0 %1552
        %1554 = vrot.lane.b32.xlu0 %v1305, 64
        %v1555 = vpop.permute.xlu0 %1554
        %1556 = vrot.lane.b32.xlu0 %v1488, 64
        %v1557 = vpop.permute.xlu0 %1556
        %1558 = vrot.lane.b32.xlu0 %v1543, 64
        %v1559 = vpop.permute.xlu0 %1558
        %v1561 = vunpack.c.l.b16 %v1265
        %v1562 = vpack.c.b16 %v1561, %v1561
        %v1564 = vshrl.u32 %v1543, 16
        %v1566 = vshll.u32 %v1543, 16
        %v1568 = vrot.slane %v1566, 1
        %v1569 = vor.u32 %v1564, %v1568
        %v1571 = vshll.u32 %v1562, 16
        %v1573 = vrot.slane %v1571, 1
        %v1574 = vsel %vm1330, %v1569, %v1573
        %1575 = vrot.lane.b32.xlu0 %v1366, 96
        %v1576 = vpop.permute.xlu0 %1575
        %1577 = vrot.lane.b32.xlu0 %v1378, 96
        %v1578 = vpop.permute.xlu0 %1577
        %1579 = vrot.lane.b32.xlu0 %v1390, 96
        %v1580 = vpop.permute.xlu0 %1579
        %1581 = vrot.lane.b32.xlu0 %v1402, 96
        %v1582 = vpop.permute.xlu0 %1581
        %1583 = vrot.lane.b32.xlu0 %v1414, 96
        %v1584 = vpop.permute.xlu0 %1583
        %1585 = vrot.lane.b32.xlu0 %v1426, 96
        %v1586 = vpop.permute.xlu0 %1585
        %1587 = vrot.lane.b32.xlu0 %v1519, 96
        %v1588 = vpop.permute.xlu0 %1587
        %1589 = vrot.lane.b32.xlu0 %v1574, 96
        %v1590 = vpop.permute.xlu0 %1589
        %v1591 = vrot.slane %v1543, 1
        %v1592 = vrot.slane %v1562, 1
        %v1593 = vsel %vm1443, %v1591, %v1592
        %vm1594 = vcmask 261120
        %v1596 = vsel %vm1594, %v1298, %v1428
        %v1598 = vsel %vm1594, %v1299, %v1430
        %v1600 = vsel %vm1594, %v1300, %v1432
        %v1602 = vsel %vm1594, %v1301, %v1434
        %v1604 = vsel %vm1594, %v1302, %v1436
        %v1606 = vsel %vm1594, %v1303, %v1438
        %v1608 = vsel %vm1594, %v1304, %v1440
        %v1610 = vsel %vm1594, %v1305, %v1442
        %vm1611 = vcmask 523264
        %v1613 = vsel %vm1611, %v1596, %v1469
        %v1615 = vsel %vm1611, %v1598, %v1471
        %v1617 = vsel %vm1611, %v1600, %v1473
        %v1619 = vsel %vm1611, %v1602, %v1475
        %v1621 = vsel %vm1611, %v1604, %v1477
        %v1623 = vsel %vm1611, %v1606, %v1479
        %v1625 = vsel %vm1611, %v1608, %v1481
        %v1627 = vsel %vm1611, %v1610, %v1483
        %vm1628 = vcmask 785408
        %v1630 = vsel %vm1628, %v1613, %v1490
        %v1633 = vsel %vm1628, %v1615, %v1492
        %v1636 = vsel %vm1628, %v1617, %v1494
        %v1639 = vsel %vm1628, %v1619, %v1496
        %v1642 = vsel %vm1628, %v1621, %v1498
        %v1645 = vsel %vm1628, %v1623, %v1500
        %v1648 = vsel %vm1628, %v1625, %v1502
        %v1651 = vsel %vm1628, %v1627, %v1504
        %v1655 = vsel %vm1594, %v1354, %v1524
        %v1658 = vsel %vm1594, %v1366, %v1526
        %v1661 = vsel %vm1594, %v1378, %v1528
        %v1664 = vsel %vm1594, %v1390, %v1530
        %v1667 = vsel %vm1594, %v1402, %v1532
        %v1670 = vsel %vm1594, %v1414, %v1534
        %v1673 = vsel %vm1594, %v1426, %v1536
        %v1676 = vsel %vm1594, %v1519, %v1538
        %v1678 = vsel %vm1611, %v1655, %v1545
        %v1680 = vsel %vm1611, %v1658, %v1547
        %v1682 = vsel %vm1611, %v1661, %v1549
        %v1684 = vsel %vm1611, %v1664, %v1551
        %v1686 = vsel %vm1611, %v1667, %v1553
        %v1688 = vsel %vm1611, %v1670, %v1555
        %v1690 = vsel %vm1611, %v1673, %v1557
        %v1692 = vsel %vm1611, %v1676, %v1559
        %v1694 = vsel %vm1628, %v1678, %v1576
        %v1697 = vsel %vm1628, %v1680, %v1578
        %v1700 = vsel %vm1628, %v1682, %v1580
        %v1703 = vsel %vm1628, %v1684, %v1582
        %v1706 = vsel %vm1628, %v1686, %v1584
        %v1709 = vsel %vm1628, %v1688, %v1586
        %v1712 = vsel %vm1628, %v1690, %v1588
        %v1715 = vsel %vm1628, %v1692, %v1590
        %v1717 = vld [vmem:[%s3] sm:$0xf]
        %v1718 = vld [vmem:[%s3 + $0x4] sm:$0xf]
        %v1719 = vld [vmem:[%s3 + $0x8] sm:$0xf]
        %v1720 = vld [vmem:[%s3 + $0xc] sm:$0xf]
        %v1721 = vld [vmem:[%s3 + $0x10] sm:$0xf]
        %v1722 = vld [vmem:[%s3 + $0x14] sm:$0xf]
        %v1723 = vld [vmem:[%s3 + $0x18] sm:$0xf]
        %v1724 = vld [vmem:[%s3 + $0x1c] sm:$0xf]
        %v1725 = vld [vmem:[%s3 + $0x20] sm:$0xf]
        %v1726 = vld [vmem:[%s3 + $0x24] sm:$0xf]
        %v1727 = vld [vmem:[%s3 + $0x28] sm:$0xf]
        %v1728 = vld [vmem:[%s3 + $0x2c] sm:$0xf]
        %v1729 = vld [vmem:[%s3 + $0x30] sm:$0xf]
        %v1730 = vld [vmem:[%s3 + $0x34] sm:$0xf]
        %v1731 = vld [vmem:[%s3 + $0x38] sm:$0xf]
        %v1732 = vld [vmem:[%s3 + $0x3c] sm:$0xf]
        %v1733 = vld [vmem:[%s3 + $0x40] sm:$0xf]
        %v1734 = vld [vmem:[%s3 + $0x44] sm:$0xf]
        %v1735 = vld [vmem:[%s3 + $0x48] sm:$0xf]
        %v1736 = vld [vmem:[%s3 + $0x4c] sm:$0xf]
        %v1737 = vld [vmem:[%s3 + $0x50] sm:$0xf]
        %v1738 = vld [vmem:[%s3 + $0x54] sm:$0xf]
        %v1739 = vld [vmem:[%s3 + $0x58] sm:$0xf]
        %v1740 = vld [vmem:[%s3 + $0x5c] sm:$0xf]
        %v1741 = vld [vmem:[%s3 + $0x60] sm:$0xf]
        %v1742 = vld [vmem:[%s3 + $0x64] sm:$0xf]
        %v1743 = vld [vmem:[%s3 + $0x68] sm:$0xf]
        %v1744 = vld [vmem:[%s3 + $0x6c] sm:$0xf]
        %v1745 = vld [vmem:[%s3 + $0x70] sm:$0xf]
        %v1746 = vld [vmem:[%s3 + $0x74] sm:$0xf]
        %v1747 = vld [vmem:[%s3 + $0x78] sm:$0xf]
        %v1748 = vld [vmem:[%s3 + $0x7c] sm:$0xf]
        %v1749 = vld [vmem:[%s3 + $0x80] sm:$0xf]
        %v1750 = vld [vmem:[%s3 + $0x84] sm:$0xf]
        %v1751 = vld [vmem:[%s3 + $0x88] sm:$0xf]
        %v1752 = vld [vmem:[%s3 + $0x8c] sm:$0xf]
        %v1753 = vld [vmem:[%s4] sm:$0x1]
        %v1755 = vlaneseq
        %v1756 = vshrl.u32 %v1755, 7
        %v1757 = vsub.s32 0, %v1756
        %v1758 = vrot.slane %v1753, %v1757
        %v1796 = vunpack.c.l.b16 %v1717
        %v1797 = vunpack.c.l.b16 %v1718
        %v1798 = vunpack.c.l.b16 %v1719
        %v1799 = vunpack.c.l.b16 %v1720
        %v1800 = vunpack.c.l.b16 %v1721
        %v1801 = vunpack.c.l.b16 %v1722
        %v1802 = vunpack.c.l.b16 %v1723
        %v1803 = vunpack.c.l.b16 %v1724
        %v1804 = vunpack.c.l.b16 %v1725
        %v1805 = vunpack.c.l.b16 %v1726
        %v1806 = vunpack.c.l.b16 %v1727
        %v1807 = vunpack.c.l.b16 %v1728
        %v1808 = vunpack.c.l.b16 %v1729
        %v1809 = vunpack.c.l.b16 %v1730
        %v1810 = vunpack.c.l.b16 %v1731
        %v1811 = vunpack.c.l.b16 %v1732
        %v1812 = vunpack.c.l.b16 %v1733
        %v1813 = vunpack.c.l.b16 %v1734
        %v1814 = vunpack.c.l.b16 %v1735
        %v1815 = vunpack.c.l.b16 %v1736
        %v1816 = vunpack.c.l.b16 %v1737
        %v1817 = vunpack.c.l.b16 %v1738
        %v1818 = vunpack.c.l.b16 %v1739
        %v1819 = vunpack.c.l.b16 %v1740
        %v1820 = vunpack.c.l.b16 %v1741
        %v1821 = vunpack.c.l.b16 %v1742
        %v1822 = vunpack.c.l.b16 %v1743
        %v1823 = vunpack.c.l.b16 %v1744
        %v1824 = vunpack.c.l.b16 %v1745
        %v1825 = vunpack.c.l.b16 %v1746
        %v1826 = vunpack.c.l.b16 %v1747
        %v1827 = vunpack.c.l.b16 %v1748
        %v1828 = vunpack.c.l.b16 %v1749
        %v1829 = vunpack.c.l.b16 %v1750
        %v1830 = vunpack.c.l.b16 %v1751
        %v1831 = vunpack.c.l.b16 %v1752
        %v1832 = vpack.c.b16 %v1797, %v1796
        %v1833 = vpack.c.b16 %v1799, %v1798
        %v1834 = vpack.c.b16 %v1801, %v1800
        %v1835 = vpack.c.b16 %v1803, %v1802
        %v1836 = vpack.c.b16 %v1805, %v1804
        %v1837 = vpack.c.b16 %v1807, %v1806
        %v1838 = vpack.c.b16 %v1809, %v1808
        %v1839 = vpack.c.b16 %v1811, %v1810
        %v1840 = vpack.c.b16 %v1813, %v1812
        %v1841 = vpack.c.b16 %v1815, %v1814
        %v1842 = vpack.c.b16 %v1817, %v1816
        %v1843 = vpack.c.b16 %v1819, %v1818
        %v1844 = vpack.c.b16 %v1821, %v1820
        %v1845 = vpack.c.b16 %v1823, %v1822
        %v1846 = vpack.c.b16 %v1825, %v1824
        %v1847 = vpack.c.b16 %v1827, %v1826
        %v1848 = vpack.c.b16 %v1829, %v1828
        %v1849 = vpack.c.b16 %v1831, %v1830
        %v1869 = vsel %vm1594, %v1452, 0
        %v1872 = vsel %vm1594, %v1455, 0
        %v1875 = vsel %vm1594, %v1458, 0
        %v1878 = vsel %vm1594, %v1461, 0
        %v1881 = vsel %vm1594, %v1464, 0
        %v1884 = vsel %vm1594, %v1467, 0
        %v1887 = vsel %vm1594, %v1522, 0
        %v1890 = vsel %vm1594, %v1593, 0
        %1892 = vmatprep.subr.bf16.mxu0 0
        %1893 = vmatpush1.bf16.msra.mxu0 %v1839
        %1894 = vmatprep.subr.bf16.mxu0 0
        %1895 = vmatpush1.bf16.msra.mxu0 %v1838
        %1896 = vmatprep.subr.bf16.mxu0 0
        %1897 = vmatpush1.bf16.msra.mxu0 %v1837
        %1898 = vmatprep.subr.bf16.mxu0 0
        %1899 = vmatpush1.bf16.msra.mxu0 %v1836
        %1900 = vmatprep.subr.bf16.mxu0 0
        %1901 = vmatpush1.bf16.msra.mxu0 %v1835
        %1902 = vmatprep.subr.bf16.mxu0 0
        %1903 = vmatpush1.bf16.msra.mxu0 %v1834
        %1904 = vmatprep.subr.bf16.mxu0 0
        %1905 = vmatpush1.bf16.msra.mxu0 %v1833
        %1906 = vmatprep.subr.bf16.mxu0 0
        %1907 = vmatpush1.bf16.msra.mxu0 %v1832
        %1908 = vmatprep.subr.bf16.mxu0 0
        %1909 = vmatpush2.bf16.msra.mxu0 %v1847
        %1910 = vmatprep.subr.bf16.mxu0 0
        %1911 = vmatpush2.bf16.msra.mxu0 %v1846
        %1912 = vmatprep.subr.bf16.mxu0 0
        %1913 = vmatpush2.bf16.msra.mxu0 %v1845
        %1914 = vmatprep.subr.bf16.mxu0 0
        %1915 = vmatpush2.bf16.msra.mxu0 %v1844
        %1916 = vmatprep.subr.bf16.mxu0 0
        %1917 = vmatpush2.bf16.msra.mxu0 %v1843
        %1918 = vmatprep.subr.bf16.mxu0 0
        %1919 = vmatpush2.bf16.msra.mxu0 %v1842
        %1920 = vmatprep.subr.bf16.mxu0 0
        %1921 = vmatpush2.bf16.msra.mxu0 %v1841
        %1922 = vmatprep.subr.bf16.mxu0 0
        %1923 = vmatpush2.bf16.msra.mxu0 %v1840
        %1924 = vmatprep.mubr.bf16.mxu0 %v1694
        %1925 = vmatmul.mubr.bf16.gmra.mxu0 %v1630
        %v1926 = vpop.f32.mrf.mxu0
        %v1927 = vadd.f32 %v1758, %v1926
        %v1928 = vpop.f32.mrf.mxu0
        %v1929 = vpop.f32.mrf.mxu0
        %v1930 = vadd.f32 %v1758, %v1929
        %v1931 = vpop.f32.mrf.mxu0
        %1932 = vmatprep.mubr.bf16.mxu0 %v1697
        %1933 = vmatmul.mubr.bf16.gmra.mxu0 %v1633
        %v1934 = vpop.f32.mrf.mxu0
        %v1935 = vadd.f32 %v1758, %v1934
        %v1936 = vpop.f32.mrf.mxu0
        %v1937 = vpop.f32.mrf.mxu0
        %v1938 = vadd.f32 %v1758, %v1937
        %v1939 = vpop.f32.mrf.mxu0
        %1940 = vmatprep.mubr.bf16.mxu0 %v1700
        %1941 = vmatmul.mubr.bf16.gmra.mxu0 %v1636
        %v1942 = vpop.f32.mrf.mxu0
        %v1943 = vadd.f32 %v1758, %v1942
        %v1944 = vpop.f32.mrf.mxu0
        %v1945 = vpop.f32.mrf.mxu0
        %v1946 = vadd.f32 %v1758, %v1945
        %v1947 = vpop.f32.mrf.mxu0
        %1948 = vmatprep.mubr.bf16.mxu0 %v1703
        %1949 = vmatmul.mubr.bf16.gmra.mxu0 %v1639
        %v1950 = vpop.f32.mrf.mxu0
        %v1951 = vadd.f32 %v1758, %v1950
        %v1952 = vpop.f32.mrf.mxu0
        %v1953 = vpop.f32.mrf.mxu0
        %v1954 = vadd.f32 %v1758, %v1953
        %v1955 = vpop.f32.mrf.mxu0
        %1956 = vmatprep.mubr.bf16.mxu0 %v1706
        %1957 = vmatmul.mubr.bf16.gmra.mxu0 %v1642
        %v1958 = vpop.f32.mrf.mxu0
        %v1959 = vadd.f32 %v1758, %v1958
        %v1960 = vpop.f32.mrf.mxu0
        %v1961 = vpop.f32.mrf.mxu0
        %v1962 = vadd.f32 %v1758, %v1961
        %v1963 = vpop.f32.mrf.mxu0
        %1964 = vmatprep.mubr.bf16.mxu0 %v1709
        %1965 = vmatmul.mubr.bf16.gmra.mxu0 %v1645
        %v1966 = vpop.f32.mrf.mxu0
        %v1967 = vadd.f32 %v1758, %v1966
        %v1968 = vpop.f32.mrf.mxu0
        %v1969 = vpop.f32.mrf.mxu0
        %v1970 = vadd.f32 %v1758, %v1969
        %v1971 = vpop.f32.mrf.mxu0
        %1972 = vmatprep.mubr.bf16.mxu0 %v1712
        %1973 = vmatmul.mubr.bf16.gmra.mxu0 %v1648
        %v1974 = vpop.f32.mrf.mxu0
        %v1975 = vadd.f32 %v1758, %v1974
        %v1976 = vpop.f32.mrf.mxu0
        %v1977 = vpop.f32.mrf.mxu0
        %v1978 = vadd.f32 %v1758, %v1977
        %v1979 = vpop.f32.mrf.mxu0
        %1980 = vmatprep.mubr.bf16.mxu0 %v1715
        %1981 = vmatmul.mubr.bf16.gmra.mxu0 %v1651
        %v1982 = vpop.f32.mrf.mxu0
        %v1983 = vadd.f32 %v1758, %v1982
        %v1984 = vpop.f32.mrf.mxu0
        %v1985 = vpop.f32.mrf.mxu0
        %v1986 = vadd.f32 %v1758, %v1985
        %v1987 = vpop.f32.mrf.mxu0
        %1988 = vdwg.mxu0
        %1989 = vmatprep.subr.bf16.mxu0 0
        %1990 = vmatpush1.bf16.msra.mxu0 0
        %1991 = vmatprep.subr.bf16.mxu0 0
        %1992 = vmatpush1.bf16.msra.mxu0 0
        %1993 = vmatprep.subr.bf16.mxu0 0
        %1994 = vmatpush1.bf16.msra.mxu0 0
        %1995 = vmatprep.subr.bf16.mxu0 0
        %1996 = vmatpush1.bf16.msra.mxu0 0
        %1997 = vmatprep.subr.bf16.mxu0 0
        %1998 = vmatpush1.bf16.msra.mxu0 0
        %1999 = vmatprep.subr.bf16.mxu0 0
        %2000 = vmatpush1.bf16.msra.mxu0 0
        %2001 = vmatprep.subr.bf16.mxu0 0
        %2002 = vmatpush1.bf16.msra.mxu0 %v1849
        %2003 = vmatprep.subr.bf16.mxu0 0
        %2004 = vmatpush1.bf16.msra.mxu0 %v1848
        %2005 = vmatprep.subr.bf16.mxu0 0
        %2006 = vmatpush2.bf16.msra.mxu0 0
        %2007 = vmatprep.subr.bf16.mxu0 0
        %2008 = vmatpush2.bf16.msra.mxu0 0
        %2009 = vmatprep.subr.bf16.mxu0 0
        %2010 = vmatpush2.bf16.msra.mxu0 0
        %2011 = vmatprep.subr.bf16.mxu0 0
        %2012 = vmatpush2.bf16.msra.mxu0 0
        %2013 = vmatprep.subr.bf16.mxu0 0
        %2014 = vmatpush2.bf16.msra.mxu0 0
        %2015 = vmatprep.subr.bf16.mxu0 0
        %2016 = vmatpush2.bf16.msra.mxu0 0
        %2017 = vmatprep.subr.bf16.mxu0 0
        %2018 = vmatpush2.bf16.msra.mxu0 0
        %2019 = vmatprep.subr.bf16.mxu0 0
        %2020 = vmatpush2.bf16.msra.mxu0 0
        %2021 = vmatprep.mubr.bf16.mxu0 0
        %2022 = vmatmul.mubr.bf16.gmra.mxu0 %v1869
        %v2023 = vpop.f32.mrf.mxu0
        %v2024 = vadd.f32 %v1927, %v2023
        %v2025 = vpop.f32.mrf.mxu0
        %v2026 = vpop.f32.mrf.mxu0
        %v2027 = vadd.f32 %v1930, %v2026
        %v2028 = vpop.f32.mrf.mxu0
        %2029 = vmatprep.mubr.bf16.mxu0 0
        %2030 = vmatmul.mubr.bf16.gmra.mxu0 %v1872
        %v2031 = vpop.f32.mrf.mxu0
        %v2032 = vadd.f32 %v1935, %v2031
        %v2033 = vpop.f32.mrf.mxu0
        %v2034 = vpop.f32.mrf.mxu0
        %v2035 = vadd.f32 %v1938, %v2034
        %v2036 = vpop.f32.mrf.mxu0
        %2037 = vmatprep.mubr.bf16.mxu0 0
        %2038 = vmatmul.mubr.bf16.gmra.mxu0 %v1875
        %v2039 = vpop.f32.mrf.mxu0
        %v2040 = vadd.f32 %v1943, %v2039
        %v2041 = vpop.f32.mrf.mxu0
        %v2042 = vpop.f32.mrf.mxu0
        %v2043 = vadd.f32 %v1946, %v2042
        %v2044 = vpop.f32.mrf.mxu0
        %2045 = vmatprep.mubr.bf16.mxu0 0
        %2046 = vmatmul.mubr.bf16.gmra.mxu0 %v1878
        %v2047 = vpop.f32.mrf.mxu0
        %v2048 = vadd.f32 %v1951, %v2047
        %v2049 = vpop.f32.mrf.mxu0
        %v2050 = vpop.f32.mrf.mxu0
        %v2051 = vadd.f32 %v1954, %v2050
        %v2052 = vpop.f32.mrf.mxu0
        %2053 = vmatprep.mubr.bf16.mxu0 0
        %2054 = vmatmul.mubr.bf16.gmra.mxu0 %v1881
        %v2055 = vpop.f32.mrf.mxu0
        %v2056 = vadd.f32 %v1959, %v2055
        %v2057 = vpop.f32.mrf.mxu0
        %v2058 = vpop.f32.mrf.mxu0
        %v2059 = vadd.f32 %v1962, %v2058
        %v2060 = vpop.f32.mrf.mxu0
        %2061 = vmatprep.mubr.bf16.mxu0 0
        %2062 = vmatmul.mubr.bf16.gmra.mxu0 %v1884
        %v2063 = vpop.f32.mrf.mxu0
        %v2064 = vadd.f32 %v1967, %v2063
        %v2065 = vpop.f32.mrf.mxu0
        %v2066 = vpop.f32.mrf.mxu0
        %v2067 = vadd.f32 %v1970, %v2066
        %v2068 = vpop.f32.mrf.mxu0
        %2069 = vmatprep.mubr.bf16.mxu0 0
        %2070 = vmatmul.mubr.bf16.gmra.mxu0 %v1887
        %v2071 = vpop.f32.mrf.mxu0
        %v2072 = vadd.f32 %v1975, %v2071
        %v2073 = vpop.f32.mrf.mxu0
        %v2074 = vpop.f32.mrf.mxu0
        %v2075 = vadd.f32 %v1978, %v2074
        %v2076 = vpop.f32.mrf.mxu0
        %2077 = vmatprep.mubr.bf16.mxu0 0
        %2078 = vmatmul.mubr.bf16.gmra.mxu0 %v1890
        %v2079 = vpop.f32.mrf.mxu0
        %v2080 = vadd.f32 %v1983, %v2079
        %v2081 = vpop.f32.mrf.mxu0
        %v2082 = vpop.f32.mrf.mxu0
        %v2083 = vadd.f32 %v1986, %v2082
        %v2084 = vpop.f32.mrf.mxu0
        %2085 = vdwg.mxu0
        %v2086 = vmax.f32 %v2024, 0.0
        %v2087 = vmax.f32 %v2027, 0.0
        %v2088 = vmax.f32 %v2032, 0.0
        %v2089 = vmax.f32 %v2035, 0.0
        %v2090 = vmax.f32 %v2040, 0.0
        %v2091 = vmax.f32 %v2043, 0.0
        %v2092 = vmax.f32 %v2048, 0.0
        %v2093 = vmax.f32 %v2051, 0.0
        %v2094 = vmax.f32 %v2056, 0.0
        %v2095 = vmax.f32 %v2059, 0.0
        %v2096 = vmax.f32 %v2064, 0.0
        %v2097 = vmax.f32 %v2067, 0.0
        %v2098 = vmax.f32 %v2072, 0.0
        %v2099 = vmax.f32 %v2075, 0.0
        %v2100 = vmax.f32 %v2080, 0.0
        %v2101 = vmax.f32 %v2083, 0.0
        %v2102 = vpack.c.bf16 %v2087, %v2086
        %v2103 = vpack.c.bf16 %v2089, %v2088
        %v2104 = vpack.c.bf16 %v2091, %v2090
        %v2105 = vpack.c.bf16 %v2093, %v2092
        %v2106 = vpack.c.bf16 %v2095, %v2094
        %v2107 = vpack.c.bf16 %v2097, %v2096
        %v2108 = vpack.c.bf16 %v2099, %v2098
        %v2109 = vpack.c.bf16 %v2101, %v2100
        %v2110 = vld [vmem:[%s5] sm:$0xf]
        %v2111 = vld [vmem:[%s5 + $0x4] sm:$0xf]
        %v2112 = vld [vmem:[%s5 + $0x8] sm:$0xf]
        %v2113 = vld [vmem:[%s5 + $0xc] sm:$0xf]
        %v2114 = vld [vmem:[%s6] sm:$0x1]
        %v2116 = vlaneseq
        %v2117 = vshrl.u32 %v2116, 7
        %v2118 = vsub.s32 0, %v2117
        %v2119 = vrot.slane %v2114, %v2118
        %v2125 = vunpack.c.l.b16 %v2110
        %v2126 = vunpack.c.l.b16 %v2111
        %v2127 = vunpack.c.l.b16 %v2112
        %v2128 = vunpack.c.l.b16 %v2113
        %v2129 = vpack.c.b16 %v2126, %v2125
        %v2130 = vpack.c.b16 %v2128, %v2127
        %v2134 = vsel %vm1594, %v2102, 0
        %v2137 = vsel %vm1594, %v2103, 0
        %v2140 = vsel %vm1594, %v2104, 0
        %v2143 = vsel %vm1594, %v2105, 0
        %v2146 = vsel %vm1594, %v2106, 0
        %v2149 = vsel %vm1594, %v2107, 0
        %v2152 = vsel %vm1594, %v2108, 0
        %v2155 = vsel %vm1594, %v2109, 0
        %2157 = vmatprep.subr.bf16.mxu0 0
        %2158 = vmatpush1.bf16.msra.mxu0 0
        %2159 = vmatprep.subr.bf16.mxu0 0
        %2160 = vmatpush1.bf16.msra.mxu0 0
        %2161 = vmatprep.subr.bf16.mxu0 0
        %2162 = vmatpush1.bf16.msra.mxu0 0
        %2163 = vmatprep.subr.bf16.mxu0 0
        %2164 = vmatpush1.bf16.msra.mxu0 0
        %2165 = vmatprep.subr.bf16.mxu0 0
        %2166 = vmatpush1.bf16.msra.mxu0 0
        %2167 = vmatprep.subr.bf16.mxu0 0
        %2168 = vmatpush1.bf16.msra.mxu0 0
        %2169 = vmatprep.subr.bf16.mxu0 0
        %2170 = vmatpush1.bf16.msra.mxu0 %v2130
        %2171 = vmatprep.subr.bf16.mxu0 0
        %2172 = vmatpush1.bf16.msra.mxu0 %v2129
        %2173 = vmatprep.subr.bf16.mxu0 0
        %2174 = vmatpush2.bf16.msra.mxu0 0
        %2175 = vmatprep.subr.bf16.mxu0 0
        %2176 = vmatpush2.bf16.msra.mxu0 0
        %2177 = vmatprep.subr.bf16.mxu0 0
        %2178 = vmatpush2.bf16.msra.mxu0 0
        %2179 = vmatprep.subr.bf16.mxu0 0
        %2180 = vmatpush2.bf16.msra.mxu0 0
        %2181 = vmatprep.subr.bf16.mxu0 0
        %2182 = vmatpush2.bf16.msra.mxu0 0
        %2183 = vmatprep.subr.bf16.mxu0 0
        %2184 = vmatpush2.bf16.msra.mxu0 0
        %2185 = vmatprep.subr.bf16.mxu0 0
        %2186 = vmatpush2.bf16.msra.mxu0 0
        %2187 = vmatprep.subr.bf16.mxu0 0
        %2188 = vmatpush2.bf16.msra.mxu0 0
        %2189 = vmatprep.mubr.bf16.mxu0 0
        %2190 = vmatmul.mubr.bf16.gmra.mxu0 %v2134
        %v2191 = vpop.f32.mrf.mxu0
        %v2192 = vadd.f32 %v2119, %v2191
        %v2193 = vpop.f32.mrf.mxu0
        %v2194 = vpop.f32.mrf.mxu0
        %v2195 = vadd.f32 %v2119, %v2194
        %v2196 = vpop.f32.mrf.mxu0
        %2197 = vmatprep.mubr.bf16.mxu0 0
        %2198 = vmatmul.mubr.bf16.gmra.mxu0 %v2137
        %v2199 = vpop.f32.mrf.mxu0
        %v2200 = vadd.f32 %v2119, %v2199
        %v2201 = vpop.f32.mrf.mxu0
        %v2202 = vpop.f32.mrf.mxu0
        %v2203 = vadd.f32 %v2119, %v2202
        %v2204 = vpop.f32.mrf.mxu0
        %2205 = vmatprep.mubr.bf16.mxu0 0
        %2206 = vmatmul.mubr.bf16.gmra.mxu0 %v2140
        %v2207 = vpop.f32.mrf.mxu0
        %v2208 = vadd.f32 %v2119, %v2207
        %v2209 = vpop.f32.mrf.mxu0
        %v2210 = vpop.f32.mrf.mxu0
        %v2211 = vadd.f32 %v2119, %v2210
        %v2212 = vpop.f32.mrf.mxu0
        %2213 = vmatprep.mubr.bf16.mxu0 0
        %2214 = vmatmul.mubr.bf16.gmra.mxu0 %v2143
        %v2215 = vpop.f32.mrf.mxu0
        %v2216 = vadd.f32 %v2119, %v2215
        %v2217 = vpop.f32.mrf.mxu0
        %v2218 = vpop.f32.mrf.mxu0
        %v2219 = vadd.f32 %v2119, %v2218
        %v2220 = vpop.f32.mrf.mxu0
        %2221 = vmatprep.mubr.bf16.mxu0 0
        %2222 = vmatmul.mubr.bf16.gmra.mxu0 %v2146
        %v2223 = vpop.f32.mrf.mxu0
        %v2224 = vadd.f32 %v2119, %v2223
        %v2225 = vpop.f32.mrf.mxu0
        %v2226 = vpop.f32.mrf.mxu0
        %v2227 = vadd.f32 %v2119, %v2226
        %v2228 = vpop.f32.mrf.mxu0
        %2229 = vmatprep.mubr.bf16.mxu0 0
        %2230 = vmatmul.mubr.bf16.gmra.mxu0 %v2149
        %v2231 = vpop.f32.mrf.mxu0
        %v2232 = vadd.f32 %v2119, %v2231
        %v2233 = vpop.f32.mrf.mxu0
        %v2234 = vpop.f32.mrf.mxu0
        %v2235 = vadd.f32 %v2119, %v2234
        %v2236 = vpop.f32.mrf.mxu0
        %2237 = vmatprep.mubr.bf16.mxu0 0
        %2238 = vmatmul.mubr.bf16.gmra.mxu0 %v2152
        %v2239 = vpop.f32.mrf.mxu0
        %v2240 = vadd.f32 %v2119, %v2239
        %v2241 = vpop.f32.mrf.mxu0
        %v2242 = vpop.f32.mrf.mxu0
        %v2243 = vadd.f32 %v2119, %v2242
        %v2244 = vpop.f32.mrf.mxu0
        %2245 = vmatprep.mubr.bf16.mxu0 0
        %2246 = vmatmul.mubr.bf16.gmra.mxu0 %v2155
        %v2247 = vpop.f32.mrf.mxu0
        %v2248 = vadd.f32 %v2119, %v2247
        %v2249 = vpop.f32.mrf.mxu0
        %v2250 = vpop.f32.mrf.mxu0
        %v2251 = vadd.f32 %v2119, %v2250
        %v2252 = vpop.f32.mrf.mxu0
        %2253 = vdwg.mxu0
        %v2254 = vunpack.c.l.bf16 %v364
        %v2255 = vunpack.c.l.bf16 %v365
        %v2256 = vunpack.c.l.bf16 %v366
        %v2257 = vunpack.c.l.bf16 %v367
        %v2258 = vunpack.c.l.bf16 %v368
        %v2259 = vunpack.c.l.bf16 %v369
        %v2260 = vunpack.c.l.bf16 %v370
        %v2261 = vunpack.c.l.bf16 %v371
        %v2262 = vunpack.c.l.bf16 %v372
        %v2263 = vunpack.c.l.bf16 %v373
        %v2264 = vunpack.c.l.bf16 %v374
        %v2265 = vunpack.c.l.bf16 %v375
        %v2266 = vunpack.c.l.bf16 %v376
        %v2267 = vunpack.c.l.bf16 %v377
        %v2268 = vunpack.c.l.bf16 %v378
        %v2269 = vunpack.c.l.bf16 %v379
        %v2270 = vadd.f32 %v2192, %v2254
        %v2271 = vadd.f32 %v2195, %v2255
        %v2272 = vadd.f32 %v2200, %v2256
        %v2273 = vadd.f32 %v2203, %v2257
        %v2274 = vadd.f32 %v2208, %v2258
        %v2275 = vadd.f32 %v2211, %v2259
        %v2276 = vadd.f32 %v2216, %v2260
        %v2277 = vadd.f32 %v2219, %v2261
        %v2278 = vadd.f32 %v2224, %v2262
        %v2279 = vadd.f32 %v2227, %v2263
        %v2280 = vadd.f32 %v2232, %v2264
        %v2281 = vadd.f32 %v2235, %v2265
        %v2282 = vadd.f32 %v2240, %v2266
        %v2283 = vadd.f32 %v2243, %v2267
        %v2284 = vadd.f32 %v2248, %v2268
        %v2285 = vadd.f32 %v2251, %v2269
        %v2286 = vmax.f32 %v2270, 0.0
        %v2287 = vmax.f32 %v2271, 0.0
        %v2288 = vmax.f32 %v2272, 0.0
        %v2289 = vmax.f32 %v2273, 0.0
        %v2290 = vmax.f32 %v2274, 0.0
        %v2291 = vmax.f32 %v2275, 0.0
        %v2292 = vmax.f32 %v2276, 0.0
        %v2293 = vmax.f32 %v2277, 0.0
        %v2294 = vmax.f32 %v2278, 0.0
        %v2295 = vmax.f32 %v2279, 0.0
        %v2296 = vmax.f32 %v2280, 0.0
        %v2297 = vmax.f32 %v2281, 0.0
        %v2298 = vmax.f32 %v2282, 0.0
        %v2299 = vmax.f32 %v2283, 0.0
        %v2300 = vmax.f32 %v2284, 0.0
        %v2301 = vmax.f32 %v2285, 0.0
        %2302 = vst [vmem:[%s285] sm:$0xff] %v2286
        %2303 = vst [vmem:[%s285 + $0x8] sm:$0xff] %v2287
        %2304 = vst [vmem:[%s285 + $0x10] sm:$0xff] %v2288
        %2305 = vst [vmem:[%s285 + $0x18] sm:$0xff] %v2289
        %2306 = vst [vmem:[%s285 + $0x20] sm:$0xff] %v2290
        %2307 = vst [vmem:[%s285 + $0x28] sm:$0xff] %v2291
        %2308 = vst [vmem:[%s285 + $0x30] sm:$0xff] %v2292
        %2309 = vst [vmem:[%s285 + $0x38] sm:$0xff] %v2293
        %2310 = vst [vmem:[%s285 + $0x40] sm:$0xff] %v2294
        %2311 = vst [vmem:[%s285 + $0x48] sm:$0xff] %v2295
        %2312 = vst [vmem:[%s285 + $0x50] sm:$0xff] %v2296
        %2313 = vst [vmem:[%s285 + $0x58] sm:$0xff] %v2297
        %2314 = vst [vmem:[%s285 + $0x60] sm:$0xff] %v2298
        %2315 = vst [vmem:[%s285 + $0x68] sm:$0xff] %v2299
        %2316 = vst [vmem:[%s285 + $0x70] sm:$0xff] %v2300
        %2317 = vst [vmem:[%s285 + $0x78] sm:$0xff] %v2301
        %s2318 = sand.u32 %s195, 1
        %s2319 = scalar_lea.sflag [#allocation4], %s2318
        %s2320 = sand.u32 %s195, 1
        %s2321 = smul.addr %s2320, 128
        %s2322 = scalar_lea.vmem [#allocation3], %s2321
        // Predicated region
        $region65: #{tpu_custom_call.1} parent=47 // pred_check
          %p2323 = pneg %p205
        $region66: #{tpu_custom_call.1} parent=47 // pred_check_branch
          %2325 = sbr.rel (%p2323) target = $region68
        $region67: #{tpu_custom_call.1} parent=47 // pred_region
          %s2326 = smul.u32 16, %s26
          %s2328 = ssub.s32 2048, 2048
          %2329 = vsyncadd %s2319, %s2328
          %s2330 = smul.addr %s25, 32
          %s2331 = sadd.s32 %s2326, %s2330
          %s2332 = smul.addr %s2331, 128
          %s2333 = scalar_lea.hbm %s7, %s2332
          %s2334 = sshll.u32 %s2322, 4
          %s2335 = int_to_ptr.vmem [resolvable:$true] %s2334
          %2340 = dma.vmem_to_hbm [thread:$0]  %s2335, 2048, %s2333, %s2319, 128, 128, 8
        $region68: #{tpu_custom_call.1} parent=47 // pred_fallthru
          _
      $region48: #{tpu_custom_call.1} parent=5 // pred_fallthru
        _
      %p2341 = scmp.le.s32.totalorder 2, %s16
      // Predicated region
      $region69: #{tpu_custom_call.1} parent=5 // pred_check
        %p2342 = pneg %p2341
      $region70: #{tpu_custom_call.1} parent=5 // pred_check_branch
        %2344 = sbr.rel (%p2342) target = $region72
      $region71: #{tpu_custom_call.1} parent=5 // pred_region
        %s2345 = ssub.s32 %s16, 2
        // Predicated region
        $region73: #{tpu_custom_call.1} parent=71 // pred_check
          %p2346 = pneg %p211
        $region74: #{tpu_custom_call.1} parent=71 // pred_check_branch
          %2348 = sbr.rel (%p2346) target = $region76
        $region75: #{tpu_custom_call.1} parent=71 // pred_region
          %s2349 = sand.u32 %s196, 1
          %s2350 = scalar_lea.sflag [#allocation4], %s2349
          %s2351 = sand.u32 %s196, 1
          %s2352 = smul.addr %s2351, 128
          %s2353 = scalar_lea.vmem [#allocation3], %s2352
          %2354 = dma.done %s2350, 2048
        $region76: #{tpu_custom_call.1} parent=71 // pred_fallthru
          _
      $region72: #{tpu_custom_call.1} parent=5 // pred_fallthru
        _
    $region6: #{tpu_custom_call.1} parent=1 // loop_footer
      %s20 = sadd.s32 1, %s16
    $region7: #{tpu_custom_call.1} parent=1 // loop_footer_branch
      %15 = sbr.rel target = $region3
    $region8: #{tpu_custom_call.1} parent=1 // loop_exit
      _
    %2355 = vsyncpa [#allocation4], 1
    %s2356 = scalar_lea.sflag [#allocation4], 1
    %2357 = vsyncpa %s2356, 1

// kernel: tpu_custom_call.1
$region0: #{tpu_custom_call.1}
  #allocation0 [shape = 'u32[]', space=smem, size = 0x4, offset = 0x4, fixed_abs, tag = 'smem constant byte address 0x4 - core index']
  #allocation1 [shape = 'u32[144,128]{1,0:T(1,128)}', space=vmem, size = 0x12000, scoped, tag = 'internal scratch']
  #allocation2 [shape = 'bf16[10,18,32]{2,1,0:T(8,128)(2,1)}', space=vmem, size = 0xf000, scoped, tag = 'scratch operand']
  %s0 = inlined_call_operand.vmem [shape: bf16[2,256,128], index: 0, kind: input, shape index: {}]
  %s1 = inlined_call_operand.vmem [shape: bf16[128,32], index: 1, kind: input, shape index: {}]
  %s2 = inlined_call_operand.vmem [shape: f32[1,32], index: 2, kind: input, shape index: {}]
  %s3 = inlined_call_operand.vmem [shape: bf16[288,32], index: 3, kind: input, shape index: {}]
  %s4 = inlined_call_operand.vmem [shape: f32[1,32], index: 4, kind: input, shape index: {}]
  %s5 = inlined_call_operand.vmem [shape: bf16[32,128], index: 5, kind: input, shape index: {}]
  %s6 = inlined_call_operand.vmem [shape: f32[1,128], index: 6, kind: input, shape index: {}]
  %s7 = inlined_call_operand.hbm [shape: f32[2,256,128], index: 7, kind: output, shape index: {}]
  %s8 = sld [smem:[#allocation0]]
  $region77: #{tpu_custom_call.1} parent=0
    _
  %s10 = ssub.s32 1, %s8
  %s11 = scalar_select 0, %s10, %s8
  $region1: #{tpu_custom_call.1} parent=0
    #allocation3 [shape = 'u8[131072]{0}', space=vmem, size = 0x20000, scoped, tag = 'output window, operand 0']
    #allocation4 [shape = 's32[2]{0}', space=sflag, size = 0x8, scoped, tag = 'scoped memory for tpu_custom_call.1']
    %12 = vsyncpa [#allocation4], 0
    %s13 = scalar_lea.sflag [#allocation4], 1
    %14 = vsyncpa %s13, 0
    loop: start=0, step=1, limit=6
    $region2: #{tpu_custom_call.1} parent=1 // loop_pre_header
      _
    $region3: #{tpu_custom_call.1} parent=1 // loop_header
      %s16 = sphi 0, %s20
      %p17 = scmp.ge.s32.totalorder %s16, 6
      %s23 = sphi 0, %s35
      %s24 = sphi 0, %s31
      %s25 = sphi 0, %s23
      %s26 = sphi 0, %s24
      %s27 = sphi 0, %s25
      %s28 = sphi 0, %s26
      %s38 = sphi 0, %s40
      %s41 = sphi 0, %s38
      %s42 = sphi 0, %s41
      %s58 = sphi 0, %s42
      %s62 = sphi 0, %s62
      %s64 = sphi 0, %s62
      %s65 = sphi 0, %s64
      %s79 = sphi 0, %s65
      %s83 = sphi 0, %s83
      %s85 = sphi 0, %s83
      %s86 = sphi 0, %s85
      %s100 = sphi 0, %s86
      %s104 = sphi 0, %s104
      %s106 = sphi 0, %s104
      %s107 = sphi 0, %s106
      %s121 = sphi 0, %s107
      %s125 = sphi 0, %s125
      %s127 = sphi 0, %s125
      %s128 = sphi 0, %s127
      %s142 = sphi 0, %s128
      %s146 = sphi 0, %s146
      %s148 = sphi 0, %s146
      %s149 = sphi 0, %s148
      %s163 = sphi 0, %s149
      %s167 = sphi 0, %s167
      %s169 = sphi 0, %s167
      %s170 = sphi 0, %s169
      %s184 = sphi 0, %s170
      %s192 = sphi 0, %s194
      %s195 = sphi 0, %s192
      %s196 = sphi 0, %s195
      %s212 = sphi 0, %s196
    $region4: #{tpu_custom_call.1} parent=1 // loop_header_branch
      %19 = sbr.rel (%p17) target = $region8
    $region5: #{tpu_custom_call.1} parent=1 // loop_body
      %s21 = ssub.s32 %s16, 1
      %s22 = ssub.s32 %s16, 2
      %s29 = sadd.s32 1, %s24
      %p30 = scmp.ge.s32.totalorder %s29, 2
      %s31 = scalar_select %p30, 0, %s29
      %s32 = sadd.s32 1, %s23
      %s33 = scalar_select %p30, %s32, %s23
      %p34 = scmp.ge.s32.totalorder %s33, 2
      %s35 = scalar_select %p34, 0, %s33
      %s36 = ssub.s32 %s23, %s35
      %p37 = scmp.eq.s32.totalorder %s36, 0
      %s39 = sadd.s32 %s38, 1
      %s40 = scalar_select %p37, %s38, %s39
      %p43 = pneg %p37
      %p44 = scmp.eq.s32.totalorder %s16, 3
      %p45 = por %p43, %p44
      %p46 = scmp.ne.s32.totalorder %s38, %s41
      %p47 = scmp.eq.s32.totalorder %s16, 0
      %p48 = por %p46, %p47
      %p49 = scmp.ne.s32.totalorder %s38, %s41
      %p50 = scmp.eq.s32.totalorder %s21, 3
      %p51 = por %p49, %p50
      %p52 = scmp.ne.s32.totalorder %s41, %s42
      %p53 = scmp.eq.s32.totalorder %s21, 0
      %p54 = por %p52, %p53
      %p55 = scmp.ne.s32.totalorder %s41, %s42
      %p56 = scmp.eq.s32.totalorder %s22, 3
      %p57 = por %p55, %p56
      %p59 = scmp.ne.s32.totalorder %s42, %s58
      %p60 = scmp.eq.s32.totalorder %s22, 0
      %p61 = por %p59, %p60
      %s63 = sadd.s32 %s62, 1
      %p66 = scmp.eq.s32.totalorder %s16, 3
      %p67 = scmp.ne.s32.totalorder %s62, %s64
      %p68 = scmp.eq.s32.totalorder %s16, 0
      %p69 = por %p67, %p68
      %p70 = scmp.ne.s32.totalorder %s62, %s64
      %p71 = scmp.eq.s32.totalorder %s21, 3
      %p72 = por %p70, %p71
      %p73 = scmp.ne.s32.totalorder %s64, %s65
      %p74 = scmp.eq.s32.totalorder %s21, 0
      %p75 = por %p73, %p74
      %p76 = scmp.ne.s32.totalorder %s64, %s65
      %p77 = scmp.eq.s32.totalorder %s22, 3
      %p78 = por %p76, %p77
      %p80 = scmp.ne.s32.totalorder %s65, %s79
      %p81 = scmp.eq.s32.totalorder %s22, 0
      %p82 = por %p80, %p81
      %s84 = sadd.s32 %s83, 1
      %p87 = scmp.eq.s32.totalorder %s16, 3
      %p88 = scmp.ne.s32.totalorder %s83, %s85
      %p89 = scmp.eq.s32.totalorder %s16, 0
      %p90 = por %p88, %p89
      %p91 = scmp.ne.s32.totalorder %s83, %s85
      %p92 = scmp.eq.s32.totalorder %s21, 3
      %p93 = por %p91, %p92
      %p94 = scmp.ne.s32.totalorder %s85, %s86
      %p95 = scmp.eq.s32.totalorder %s21, 0
      %p96 = por %p94, %p95
      %p97 = scmp.ne.s32.totalorder %s85, %s86
      %p98 = scmp.eq.s32.totalorder %s22, 3
      %p99 = por %p97, %p98
      %p101 = scmp.ne.s32.totalorder %s86, %s100
      %p102 = scmp.eq.s32.totalorder %s22, 0
      %p103 = por %p101, %p102
      %s105 = sadd.s32 %s104, 1
      %p108 = scmp.eq.s32.totalorder %s16, 3
      %p109 = scmp.ne.s32.totalorder %s104, %s106
      %p110 = scmp.eq.s32.totalorder %s16, 0
      %p111 = por %p109, %p110
      %p112 = scmp.ne.s32.totalorder %s104, %s106
      %p113 = scmp.eq.s32.totalorder %s21, 3
      %p114 = por %p112, %p113
      %p115 = scmp.ne.s32.totalorder %s106, %s107
      %p116 = scmp.eq.s32.totalorder %s21, 0
      %p117 = por %p115, %p116
      %p118 = scmp.ne.s32.totalorder %s106, %s107
      %p119 = scmp.eq.s32.totalorder %s22, 3
      %p120 = por %p118, %p119
      %p122 = scmp.ne.s32.totalorder %s107, %s121
      %p123 = scmp.eq.s32.totalorder %s22, 0
      %p124 = por %p122, %p123
      %s126 = sadd.s32 %s125, 1
      %p129 = scmp.eq.s32.totalorder %s16, 3
      %p130 = scmp.ne.s32.totalorder %s125, %s127
      %p131 = scmp.eq.s32.totalorder %s16, 0
      %p132 = por %p130, %p131
      %p133 = scmp.ne.s32.totalorder %s125, %s127
      %p134 = scmp.eq.s32.totalorder %s21, 3
      %p135 = por %p133, %p134
      %p136 = scmp.ne.s32.totalorder %s127, %s128
      %p137 = scmp.eq.s32.totalorder %s21, 0
      %p138 = por %p136, %p137
      %p139 = scmp.ne.s32.totalorder %s127, %s128
      %p140 = scmp.eq.s32.totalorder %s22, 3
      %p141 = por %p139, %p140
      %p143 = scmp.ne.s32.totalorder %s128, %s142
      %p144 = scmp.eq.s32.totalorder %s22, 0
      %p145 = por %p143, %p144
      %s147 = sadd.s32 %s146, 1
      %p150 = scmp.eq.s32.totalorder %s16, 3
      %p151 = scmp.ne.s32.totalorder %s146, %s148
      %p152 = scmp.eq.s32.totalorder %s16, 0
      %p153 = por %p151, %p152
      %p154 = scmp.ne.s32.totalorder %s146, %s148
      %p155 = scmp.eq.s32.totalorder %s21, 3
      %p156 = por %p154, %p155
      %p157 = scmp.ne.s32.totalorder %s148, %s149
      %p158 = scmp.eq.s32.totalorder %s21, 0
      %p159 = por %p157, %p158
      %p160 = scmp.ne.s32.totalorder %s148, %s149
      %p161 = scmp.eq.s32.totalorder %s22, 3
      %p162 = por %p160, %p161
      %p164 = scmp.ne.s32.totalorder %s149, %s163
      %p165 = scmp.eq.s32.totalorder %s22, 0
      %p166 = por %p164, %p165
      %s168 = sadd.s32 %s167, 1
      %p171 = scmp.eq.s32.totalorder %s16, 3
      %p172 = scmp.ne.s32.totalorder %s167, %s169
      %p173 = scmp.eq.s32.totalorder %s16, 0
      %p174 = por %p172, %p173
      %p175 = scmp.ne.s32.totalorder %s167, %s169
      %p176 = scmp.eq.s32.totalorder %s21, 3
      %p177 = por %p175, %p176
      %p178 = scmp.ne.s32.totalorder %s169, %s170
      %p179 = scmp.eq.s32.totalorder %s21, 0
      %p180 = por %p178, %p179
      %p181 = scmp.ne.s32.totalorder %s169, %s170
      %p182 = scmp.eq.s32.totalorder %s22, 3
      %p183 = por %p181, %p182
      %p185 = scmp.ne.s32.totalorder %s170, %s184
      %p186 = scmp.eq.s32.totalorder %s22, 0
      %p187 = por %p185, %p186
      %s188 = ssub.s32 %s23, %s35
      %s189 = ssub.s32 %s24, %s31
      %s190 = sor.u32 %s188, %s189
      %p191 = scmp.eq.s32.totalorder %s190, 0
      %s193 = sadd.s32 %s192, 1
      %s194 = scalar_select %p191, %s192, %s193
      %p197 = pneg %p191
      %p198 = scmp.eq.s32.totalorder %s16, 3
      %p199 = por %p197, %p198
      %p200 = scmp.ne.s32.totalorder %s192, %s195
      %p201 = scmp.eq.s32.totalorder %s16, 0
      %p202 = por %p200, %p201
      %p203 = scmp.ne.s32.totalorder %s192, %s195
      %p204 = scmp.eq.s32.totalorder %s21, 3
      %p205 = por %p203, %p204
      %p206 = scmp.ne.s32.totalorder %s195, %s196
      %p207 = scmp.eq.s32.totalorder %s21, 0
      %p208 = por %p206, %p207
      %p209 = scmp.ne.s32.totalorder %s195, %s196
      %p210 = scmp.eq.s32.totalorder %s22, 3
      %p211 = por %p209, %p210
      %p213 = scmp.ne.s32.totalorder %s196, %s212
      %p214 = scmp.eq.s32.totalorder %s22, 0
      %p215 = por %p213, %p214
      %p216 = scmp.le.s32.totalorder 1, %s16
      %p217 = scmp.lt.s32.totalorder %s16, 5
      %p218 = pnand %p216, %p217
      %p219 = pneg %p218
      // Predicated region
      $region9: #{tpu_custom_call.1} parent=5 // pred_check
        _
      $region10: #{tpu_custom_call.1} parent=5 // pred_check_branch
        %221 = sbr.rel (%p218) target = $region12
      $region11: #{tpu_custom_call.1} parent=5 // pred_region
        %s222 = ssub.s32 %s16, 1
        // Predicated region
        $region13: #{tpu_custom_call.1} parent=11 // pred_check
          %p223 = pneg %p75
        $region14: #{tpu_custom_call.1} parent=11 // pred_check_branch
          %225 = sbr.rel (%p223) target = $region16
        $region15: #{tpu_custom_call.1} parent=11 // pred_region
          _
        $region16: #{tpu_custom_call.1} parent=11 // pred_fallthru
          _
        // Predicated region
        $region17: #{tpu_custom_call.1} parent=11 // pred_check
          %p226 = pneg %p96
        $region18: #{tpu_custom_call.1} parent=11 // pred_check_branch
          %228 = sbr.rel (%p226) target = $region20
        $region19: #{tpu_custom_call.1} parent=11 // pred_region
          _
        $region20: #{tpu_custom_call.1} parent=11 // pred_fallthru
          _
        // Predicated region
        $region21: #{tpu_custom_call.1} parent=11 // pred_check
          %p229 = pneg %p117
        $region22: #{tpu_custom_call.1} parent=11 // pred_check_branch
          %231 = sbr.rel (%p229) target = $region24
        $region23: #{tpu_custom_call.1} parent=11 // pred_region
          _
        $region24: #{tpu_custom_call.1} parent=11 // pred_fallthru
          _
        // Predicated region
        $region25: #{tpu_custom_call.1} parent=11 // pred_check
          %p232 = pneg %p138
        $region26: #{tpu_custom_call.1} parent=11 // pred_check_branch
          %234 = sbr.rel (%p232) target = $region28
        $region27: #{tpu_custom_call.1} parent=11 // pred_region
          _
        $region28: #{tpu_custom_call.1} parent=11 // pred_fallthru
          _
        // Predicated region
        $region29: #{tpu_custom_call.1} parent=11 // pred_check
          %p235 = pneg %p159
        $region30: #{tpu_custom_call.1} parent=11 // pred_check_branch
          %237 = sbr.rel (%p235) target = $region32
        $region31: #{tpu_custom_call.1} parent=11 // pred_region
          _
        $region32: #{tpu_custom_call.1} parent=11 // pred_fallthru
          _
        // Predicated region
        $region33: #{tpu_custom_call.1} parent=11 // pred_check
          %p238 = pneg %p180
        $region34: #{tpu_custom_call.1} parent=11 // pred_check_branch
          %240 = sbr.rel (%p238) target = $region36
        $region35: #{tpu_custom_call.1} parent=11 // pred_region
          _
        $region36: #{tpu_custom_call.1} parent=11 // pred_fallthru
          _
      $region12: #{tpu_custom_call.1} parent=5 // pred_fallthru
        _
      %p241 = scmp.lt.s32.totalorder %s16, 4
      // Predicated region
      $region37: #{tpu_custom_call.1} parent=5 // pred_check
        %p242 = pneg %p241
      $region38: #{tpu_custom_call.1} parent=5 // pred_check_branch
        %244 = sbr.rel (%p242) target = $region40
      $region39: #{tpu_custom_call.1} parent=5 // pred_region
        // Predicated region
        $region41: #{tpu_custom_call.1} parent=39 // pred_check
          %p245 = pneg %p48
        $region42: #{tpu_custom_call.1} parent=39 // pred_check_branch
          %247 = sbr.rel (%p245) target = $region44
        $region43: #{tpu_custom_call.1} parent=39 // pred_region
          %p248 = scmp.lt.s32.totalorder %s23, 1
          %s249 = scalar_select %p248, %s23, 1
          %s250 = smul.addr %s249, 32
          %s251 = smul.addr %s250, 4
          %s252 = scalar_lea.vmem %s0, %s251
        $region44: #{tpu_custom_call.1} parent=39 // pred_fallthru
          _
      $region40: #{tpu_custom_call.1} parent=5 // pred_fallthru
        _
      %p253 = scmp.le.s32.totalorder 1, %s16
      %p254 = scmp.lt.s32.totalorder %s16, 5
      %p255 = pnand %p253, %p254
      %p256 = pneg %p255
      // Predicated region
      $region45: #{tpu_custom_call.1} parent=5 // pred_check
        _
      $region46: #{tpu_custom_call.1} parent=5 // pred_check_branch
        %258 = sbr.rel (%p255) target = $region48
      $region47: #{tpu_custom_call.1} parent=5 // pred_region
        %s259 = ssub.s32 %s16, 1
        %p260 = scmp.lt.s32.totalorder %s25, 1
        %s261 = scalar_select %p260, %s25, 1
        %s262 = smul.addr %s261, 32
        %s263 = smul.addr %s262, 4
        %s264 = scalar_lea.vmem %s0, %s263
        %p265 = pneg %p54
        %p266 = pneg %p51
        %p267 = pneg %p75
        %p268 = pneg %p72
        %p269 = pneg %p96
        %p270 = pneg %p93
        %p271 = pneg %p117
        %p272 = pneg %p114
        %p273 = pneg %p138
        %p274 = pneg %p135
        %p275 = pneg %p159
        %p276 = pneg %p156
        %p277 = pneg %p180
        %p278 = pneg %p177
        %p279 = pneg %p208
        %p280 = pneg %p205
        %s281 = sand.u32 %s195, 1
        %s282 = scalar_lea.sflag [#allocation4], %s281
        %s283 = sand.u32 %s195, 1
        %s284 = smul.addr %s283, 128
        %s285 = scalar_lea.vmem [#allocation3], %s284
        %p286 = scmp.lt.s32.totalorder %s25, 1
        %s287 = scalar_select %p286, %s25, 1
        %s288 = smul.addr %s287, 32
        %s289 = smul.addr %s288, 4
        %s290 = scalar_lea.vmem %s0, %s289
        %s291 = smul.u32 16, %s26
        %s293 = smul.u32 %s26, 8
        %vm294 = vcmask 253952
        %vm295 = vsmask.f32 256
        %vm296 = vmand %vm294, %vm295
        %v297 = vld [vmem:[#allocation2] sm:$0x1]
        %v298 = vsel %vm296, 0, %v297
        %299 = vst [vmem:[#allocation2] sm:$0x1] %v298
        %v300 = vld [vmem:[#allocation2 + $0xc] sm:$0x1]
        %v301 = vsel %vm296, 0, %v300
        %302 = vst [vmem:[#allocation2 + $0xc] sm:$0x1] %v301
        %v303 = vld [vmem:[#allocation2 + $0x18] sm:$0x1]
        %v304 = vsel %vm296, 0, %v303
        %305 = vst [vmem:[#allocation2 + $0x18] sm:$0x1] %v304
        %v306 = vld [vmem:[#allocation2 + $0x24] sm:$0x1]
        %v307 = vsel %vm296, 0, %v306
        %308 = vst [vmem:[#allocation2 + $0x24] sm:$0x1] %v307
        %v309 = vld [vmem:[#allocation2 + $0x30] sm:$0x1]
        %v310 = vsel %vm296, 0, %v309
        %311 = vst [vmem:[#allocation2 + $0x30] sm:$0x1] %v310
        %v312 = vld [vmem:[#allocation2 + $0x3c] sm:$0x1]
        %v313 = vsel %vm296, 0, %v312
        %314 = vst [vmem:[#allocation2 + $0x3c] sm:$0x1] %v313
        %v315 = vld [vmem:[#allocation2 + $0x48] sm:$0x1]
        %v316 = vsel %vm296, 0, %v315
        %317 = vst [vmem:[#allocation2 + $0x48] sm:$0x1] %v316
        %v318 = vld [vmem:[#allocation2 + $0x54] sm:$0x1]
        %v319 = vsel %vm296, 0, %v318
        %320 = vst [vmem:[#allocation2 + $0x54] sm:$0x1] %v319
        %v321 = vld [vmem:[#allocation2 + $0x60] sm:$0x1]
        %v322 = vsel %vm296, 0, %v321
        %323 = vst [vmem:[#allocation2 + $0x60] sm:$0x1] %v322
        %v324 = vld [vmem:[#allocation2 + $0x6c] sm:$0x1]
        %v325 = vsel %vm296, 0, %v324
        %326 = vst [vmem:[#allocation2 + $0x6c] sm:$0x1] %v325
        %vm327 = vsmask.f32 7938
        %vm328 = vmand %vm294, %vm327
        %v329 = vld [vmem:[#allocation2 + $0x8] sm:$0x1]
        %v330 = vsel %vm328, 0, %v329
        %331 = vst [vmem:[#allocation2 + $0x8] sm:$0x1] %v330
        %v332 = vld [vmem:[#allocation2 + $0x14] sm:$0x1]
        %v333 = vsel %vm328, 0, %v332
        %334 = vst [vmem:[#allocation2 + $0x14] sm:$0x1] %v333
        %v335 = vld [vmem:[#allocation2 + $0x20] sm:$0x1]
        %v336 = vsel %vm328, 0, %v335
        %337 = vst [vmem:[#allocation2 + $0x20] sm:$0x1] %v336
        %v338 = vld [vmem:[#allocation2 + $0x2c] sm:$0x1]
        %v339 = vsel %vm328, 0, %v338
        %340 = vst [vmem:[#allocation2 + $0x2c] sm:$0x1] %v339
        %v341 = vld [vmem:[#allocation2 + $0x38] sm:$0x1]
        %v342 = vsel %vm328, 0, %v341
        %343 = vst [vmem:[#allocation2 + $0x38] sm:$0x1] %v342
        %v344 = vld [vmem:[#allocation2 + $0x44] sm:$0x1]
        %v345 = vsel %vm328, 0, %v344
        %346 = vst [vmem:[#allocation2 + $0x44] sm:$0x1] %v345
        %v347 = vld [vmem:[#allocation2 + $0x50] sm:$0x1]
        %v348 = vsel %vm328, 0, %v347
        %349 = vst [vmem:[#allocation2 + $0x50] sm:$0x1] %v348
        %v350 = vld [vmem:[#allocation2 + $0x5c] sm:$0x1]
        %v351 = vsel %vm328, 0, %v350
        %352 = vst [vmem:[#allocation2 + $0x5c] sm:$0x1] %v351
        %v353 = vld [vmem:[#allocation2 + $0x68] sm:$0x1]
        %v354 = vsel %vm328, 0, %v353
        %355 = vst [vmem:[#allocation2 + $0x68] sm:$0x1] %v354
        %v356 = vld [vmem:[#allocation2 + $0x74] sm:$0x1]
        %v357 = vsel %vm328, 0, %v356
        %358 = vst [vmem:[#allocation2 + $0x74] sm:$0x1] %v357
        %s359 = smul.u32 %s26, 128
        %s360 = sshra.s32 %s359, 3
        %s361 = sand.u32 %s359, 7
        %s362 = smul.addr %s360, 4
        %s363 = scalar_lea.vmem %s290, %s362
        %v364 = vld [vmem:[%s363] sm:$0xf]
        %v365 = vld [vmem:[%s363 + $0x4] sm:$0xf]
        %v366 = vld [vmem:[%s363 + $0x8] sm:$0xf]
        %v367 = vld [vmem:[%s363 + $0xc] sm:$0xf]
        %v368 = vld [vmem:[%s363 + $0x10] sm:$0xf]
        %v369 = vld [vmem:[%s363 + $0x14] sm:$0xf]
        %v370 = vld [vmem:[%s363 + $0x18] sm:$0xf]
        %v371 = vld [vmem:[%s363 + $0x1c] sm:$0xf]
        %v372 = vld [vmem:[%s363 + $0x20] sm:$0xf]
        %v373 = vld [vmem:[%s363 + $0x24] sm:$0xf]
        %v374 = vld [vmem:[%s363 + $0x28] sm:$0xf]
        %v375 = vld [vmem:[%s363 + $0x2c] sm:$0xf]
        %v376 = vld [vmem:[%s363 + $0x30] sm:$0xf]
        %v377 = vld [vmem:[%s363 + $0x34] sm:$0xf]
        %v378 = vld [vmem:[%s363 + $0x38] sm:$0xf]
        %v379 = vld [vmem:[%s363 + $0x3c] sm:$0xf]
        %v380 = vld [vmem:[%s1] sm:$0xf]
        %v381 = vld [vmem:[%s1 + $0x4] sm:$0xf]
        %v382 = vld [vmem:[%s1 + $0x8] sm:$0xf]
        %v383 = vld [vmem:[%s1 + $0xc] sm:$0xf]
        %v384 = vld [vmem:[%s1 + $0x10] sm:$0xf]
        %v385 = vld [vmem:[%s1 + $0x14] sm:$0xf]
        %v386 = vld [vmem:[%s1 + $0x18] sm:$0xf]
        %v387 = vld [vmem:[%s1 + $0x1c] sm:$0xf]
        %v388 = vld [vmem:[%s1 + $0x20] sm:$0xf]
        %v389 = vld [vmem:[%s1 + $0x24] sm:$0xf]
        %v390 = vld [vmem:[%s1 + $0x28] sm:$0xf]
        %v391 = vld [vmem:[%s1 + $0x2c] sm:$0xf]
        %v392 = vld [vmem:[%s1 + $0x30] sm:$0xf]
        %v393 = vld [vmem:[%s1 + $0x34] sm:$0xf]
        %v394 = vld [vmem:[%s1 + $0x38] sm:$0xf]
        %v395 = vld [vmem:[%s1 + $0x3c] sm:$0xf]
        %v396 = vld [vmem:[%s2] sm:$0x1]
        %v398 = vlaneseq
        %v399 = vshrl.u32 %v398, 7
        %v400 = vsub.s32 0, %v399
        %v401 = vrot.slane %v396, %v400
        %v419 = vunpack.c.l.b16 %v364
        %v420 = vunpack.c.l.b16 %v365
        %v421 = vunpack.c.l.b16 %v366
        %v422 = vunpack.c.l.b16 %v367
        %v423 = vunpack.c.l.b16 %v368
        %v424 = vunpack.c.l.b16 %v369
        %v425 = vunpack.c.l.b16 %v370
        %v426 = vunpack.c.l.b16 %v371
        %v427 = vunpack.c.l.b16 %v372
        %v428 = vunpack.c.l.b16 %v373
        %v429 = vunpack.c.l.b16 %v374
        %v430 = vunpack.c.l.b16 %v375
        %v431 = vunpack.c.l.b16 %v376
        %v432 = vunpack.c.l.b16 %v377
        %v433 = vunpack.c.l.b16 %v378
        %v434 = vunpack.c.l.b16 %v379
        %v435 = vpack.c.b16 %v420, %v419
        %v436 = vpack.c.b16 %v422, %v421
        %v437 = vpack.c.b16 %v424, %v423
        %v438 = vpack.c.b16 %v426, %v425
        %v439 = vpack.c.b16 %v428, %v427
        %v440 = vpack.c.b16 %v430, %v429
        %v441 = vpack.c.b16 %v432, %v431
        %v442 = vpack.c.b16 %v434, %v433
        %v467 = vunpack.c.l.b16 %v380
        %v468 = vunpack.c.l.b16 %v381
        %v469 = vunpack.c.l.b16 %v382
        %v470 = vunpack.c.l.b16 %v383
        %v471 = vunpack.c.l.b16 %v384
        %v472 = vunpack.c.l.b16 %v385
        %v473 = vunpack.c.l.b16 %v386
        %v474 = vunpack.c.l.b16 %v387
        %v475 = vunpack.c.l.b16 %v388
        %v476 = vunpack.c.l.b16 %v389
        %v477 = vunpack.c.l.b16 %v390
        %v478 = vunpack.c.l.b16 %v391
        %v479 = vunpack.c.l.b16 %v392
        %v480 = vunpack.c.l.b16 %v393
        %v481 = vunpack.c.l.b16 %v394
        %v482 = vunpack.c.l.b16 %v395
        %v483 = vpack.c.b16 %v468, %v467
        %v484 = vpack.c.b16 %v470, %v469
        %v485 = vpack.c.b16 %v472, %v471
        %v486 = vpack.c.b16 %v474, %v473
        %v487 = vpack.c.b16 %v476, %v475
        %v488 = vpack.c.b16 %v478, %v477
        %v489 = vpack.c.b16 %v480, %v479
        %v490 = vpack.c.b16 %v482, %v481
        %499 = vmatprep.subr.bf16.mxu0 0
        %500 = vmatpush1.bf16.msra.mxu0 %v490
        %501 = vmatprep.subr.bf16.mxu0 0
        %502 = vmatpush1.bf16.msra.mxu0 %v489
        %503 = vmatprep.subr.bf16.mxu0 0
        %504 = vmatpush1.bf16.msra.mxu0 %v488
        %505 = vmatprep.subr.bf16.mxu0 0
        %506 = vmatpush1.bf16.msra.mxu0 %v487
        %507 = vmatprep.subr.bf16.mxu0 0
        %508 = vmatpush1.bf16.msra.mxu0 %v486
        %509 = vmatprep.subr.bf16.mxu0 0
        %510 = vmatpush1.bf16.msra.mxu0 %v485
        %511 = vmatprep.subr.bf16.mxu0 0
        %512 = vmatpush1.bf16.msra.mxu0 %v484
        %513 = vmatprep.subr.bf16.mxu0 0
        %514 = vmatpush1.bf16.msra.mxu0 %v483
        %515 = vmatprep.subr.bf16.mxu0 0
        %516 = vmatpush2.bf16.msra.mxu0 0
        %517 = vmatprep.subr.bf16.mxu0 0
        %518 = vmatpush2.bf16.msra.mxu0 0
        %519 = vmatprep.subr.bf16.mxu0 0
        %520 = vmatpush2.bf16.msra.mxu0 0
        %521 = vmatprep.subr.bf16.mxu0 0
        %522 = vmatpush2.bf16.msra.mxu0 0
        %523 = vmatprep.subr.bf16.mxu0 0
        %524 = vmatpush2.bf16.msra.mxu0 0
        %525 = vmatprep.subr.bf16.mxu0 0
        %526 = vmatpush2.bf16.msra.mxu0 0
        %527 = vmatprep.subr.bf16.mxu0 0
        %528 = vmatpush2.bf16.msra.mxu0 0
        %529 = vmatprep.subr.bf16.mxu0 0
        %530 = vmatpush2.bf16.msra.mxu0 0
        %531 = vmatprep.mubr.bf16.mxu0 0
        %532 = vmatmul.mubr.bf16.gmra.mxu0 %v435
        %v533 = vpop.f32.mrf.mxu0
        %v534 = vadd.f32 %v401, %v533
        %v535 = vpop.f32.mrf.mxu0
        %v536 = vpop.f32.mrf.mxu0
        %v537 = vadd.f32 %v401, %v536
        %v538 = vpop.f32.mrf.mxu0
        %539 = vmatprep.mubr.bf16.mxu0 0
        %540 = vmatmul.mubr.bf16.gmra.mxu0 %v436
        %v541 = vpop.f32.mrf.mxu0
        %v542 = vadd.f32 %v401, %v541
        %v543 = vpop.f32.mrf.mxu0
        %v544 = vpop.f32.mrf.mxu0
        %v545 = vadd.f32 %v401, %v544
        %v546 = vpop.f32.mrf.mxu0
        %547 = vmatprep.mubr.bf16.mxu0 0
        %548 = vmatmul.mubr.bf16.gmra.mxu0 %v437
        %v549 = vpop.f32.mrf.mxu0
        %v550 = vadd.f32 %v401, %v549
        %v551 = vpop.f32.mrf.mxu0
        %v552 = vpop.f32.mrf.mxu0
        %v553 = vadd.f32 %v401, %v552
        %v554 = vpop.f32.mrf.mxu0
        %555 = vmatprep.mubr.bf16.mxu0 0
        %556 = vmatmul.mubr.bf16.gmra.mxu0 %v438
        %v557 = vpop.f32.mrf.mxu0
        %v558 = vadd.f32 %v401, %v557
        %v559 = vpop.f32.mrf.mxu0
        %v560 = vpop.f32.mrf.mxu0
        %v561 = vadd.f32 %v401, %v560
        %v562 = vpop.f32.mrf.mxu0
        %563 = vmatprep.mubr.bf16.mxu0 0
        %564 = vmatmul.mubr.bf16.gmra.mxu0 %v439
        %v565 = vpop.f32.mrf.mxu0
        %v566 = vadd.f32 %v401, %v565
        %v567 = vpop.f32.mrf.mxu0
        %v568 = vpop.f32.mrf.mxu0
        %v569 = vadd.f32 %v401, %v568
        %v570 = vpop.f32.mrf.mxu0
        %571 = vmatprep.mubr.bf16.mxu0 0
        %572 = vmatmul.mubr.bf16.gmra.mxu0 %v440
        %v573 = vpop.f32.mrf.mxu0
        %v574 = vadd.f32 %v401, %v573
        %v575 = vpop.f32.mrf.mxu0
        %v576 = vpop.f32.mrf.mxu0
        %v577 = vadd.f32 %v401, %v576
        %v578 = vpop.f32.mrf.mxu0
        %579 = vmatprep.mubr.bf16.mxu0 0
        %580 = vmatmul.mubr.bf16.gmra.mxu0 %v441
        %v581 = vpop.f32.mrf.mxu0
        %v582 = vadd.f32 %v401, %v581
        %v583 = vpop.f32.mrf.mxu0
        %v584 = vpop.f32.mrf.mxu0
        %v585 = vadd.f32 %v401, %v584
        %v586 = vpop.f32.mrf.mxu0
        %587 = vmatprep.mubr.bf16.mxu0 0
        %588 = vmatmul.mubr.bf16.gmra.mxu0 %v442
        %v589 = vpop.f32.mrf.mxu0
        %v590 = vadd.f32 %v401, %v589
        %v591 = vpop.f32.mrf.mxu0
        %v592 = vpop.f32.mrf.mxu0
        %v593 = vadd.f32 %v401, %v592
        %v594 = vpop.f32.mrf.mxu0
        %595 = vdwg.mxu0
        %v596 = vmax.f32 %v534, 0.0
        %v597 = vmax.f32 %v537, 0.0
        %v598 = vmax.f32 %v542, 0.0
        %v599 = vmax.f32 %v545, 0.0
        %v600 = vmax.f32 %v550, 0.0
        %v601 = vmax.f32 %v553, 0.0
        %v602 = vmax.f32 %v558, 0.0
        %v603 = vmax.f32 %v561, 0.0
        %v604 = vmax.f32 %v566, 0.0
        %v605 = vmax.f32 %v569, 0.0
        %v606 = vmax.f32 %v574, 0.0
        %v607 = vmax.f32 %v577, 0.0
        %v608 = vmax.f32 %v582, 0.0
        %v609 = vmax.f32 %v585, 0.0
        %v610 = vmax.f32 %v590, 0.0
        %v611 = vmax.f32 %v593, 0.0
        %v612 = vpack.c.bf16 %v597, %v596
        %v613 = vpack.c.bf16 %v599, %v598
        %v614 = vpack.c.bf16 %v601, %v600
        %v615 = vpack.c.bf16 %v603, %v602
        %v616 = vpack.c.bf16 %v605, %v604
        %v617 = vpack.c.bf16 %v607, %v606
        %v618 = vpack.c.bf16 %v609, %v608
        %v619 = vpack.c.bf16 %v611, %v610
        %v628 = vunpack.c.l.b16 %v612
        %v629 = vunpack.c.h.b16 %v612
        %v630 = vunpack.c.l.b16 %v613
        %v631 = vunpack.c.h.b16 %v613
        %v632 = vunpack.c.l.b16 %v614
        %v633 = vunpack.c.h.b16 %v614
        %v634 = vunpack.c.l.b16 %v615
        %v635 = vunpack.c.h.b16 %v615
        %v636 = vunpack.c.l.b16 %v616
        %v637 = vunpack.c.h.b16 %v616
        %v638 = vunpack.c.l.b16 %v617
        %v639 = vunpack.c.h.b16 %v617
        %v640 = vunpack.c.l.b16 %v618
        %v641 = vunpack.c.h.b16 %v618
        %v642 = vunpack.c.l.b16 %v619
        %v643 = vunpack.c.h.b16 %v619
        %v644 = vpack.c.b16 %v628, %v628
        %v645 = vpack.c.b16 %v629, %v629
        %v646 = vpack.c.b16 %v630, %v630
        %v647 = vpack.c.b16 %v631, %v631
        %v648 = vpack.c.b16 %v632, %v632
        %v649 = vpack.c.b16 %v633, %v633
        %v650 = vpack.c.b16 %v634, %v634
        %v651 = vpack.c.b16 %v635, %v635
        %v652 = vpack.c.b16 %v636, %v636
        %v653 = vpack.c.b16 %v637, %v637
        %v654 = vpack.c.b16 %v638, %v638
        %v655 = vpack.c.b16 %v639, %v639
        %v656 = vpack.c.b16 %v640, %v640
        %v657 = vpack.c.b16 %v641, %v641
        %v658 = vpack.c.b16 %v642, %v642
        %v659 = vpack.c.b16 %v643, %v643
        %vm660 = vsmask.f32 4368
        %vm661 = vmor %vm295, %vm660
        %v663 = vshrl.u32 %v644, 16
        %v665 = vrot.slane %v663, 7
        %v666 = vshll.u32 %v644, 16
        %v668 = vor.u32 %v665, %v666
        %v669 = vrot.slane %v665, 4
        %v671 = vshrl.u32 %v645, 16
        %v673 = vrot.slane %v671, 7
        %v674 = vshll.u32 %v645, 16
        %v676 = vor.u32 %v673, %v674
        %v677 = vsel %vm661, %v669, %v676
        %v678 = vrot.slane %v673, 4
        %v680 = vshrl.u32 %v646, 16
        %v682 = vrot.slane %v680, 7
        %v683 = vshll.u32 %v646, 16
        %v685 = vor.u32 %v682, %v683
        %v686 = vrot.slane %v682, 4
        %v688 = vshrl.u32 %v647, 16
        %v690 = vrot.slane %v688, 7
        %v691 = vshll.u32 %v647, 16
        %v693 = vor.u32 %v690, %v691
        %v694 = vsel %vm661, %v686, %v693
        %v695 = vrot.slane %v690, 4
        %v697 = vshrl.u32 %v648, 16
        %v699 = vrot.slane %v697, 7
        %v700 = vshll.u32 %v648, 16
        %v702 = vor.u32 %v699, %v700
        %v703 = vrot.slane %v699, 4
        %v705 = vshrl.u32 %v649, 16
        %v707 = vrot.slane %v705, 7
        %v708 = vshll.u32 %v649, 16
        %v710 = vor.u32 %v707, %v708
        %v711 = vsel %vm661, %v703, %v710
        %v712 = vrot.slane %v707, 4
        %v714 = vshrl.u32 %v650, 16
        %v716 = vrot.slane %v714, 7
        %v717 = vshll.u32 %v650, 16
        %v719 = vor.u32 %v716, %v717
        %v720 = vrot.slane %v716, 4
        %v722 = vshrl.u32 %v651, 16
        %v724 = vrot.slane %v722, 7
        %v725 = vshll.u32 %v651, 16
        %v727 = vor.u32 %v724, %v725
        %v728 = vsel %vm661, %v720, %v727
        %v729 = vrot.slane %v724, 4
        %v731 = vshrl.u32 %v652, 16
        %v733 = vrot.slane %v731, 7
        %v734 = vshll.u32 %v652, 16
        %v736 = vor.u32 %v733, %v734
        %v737 = vrot.slane %v733, 4
        %v739 = vshrl.u32 %v653, 16
        %v741 = vrot.slane %v739, 7
        %v742 = vshll.u32 %v653, 16
        %v744 = vor.u32 %v741, %v742
        %v745 = vsel %vm661, %v737, %v744
        %v746 = vrot.slane %v741, 4
        %v748 = vshrl.u32 %v654, 16
        %v750 = vrot.slane %v748, 7
        %v751 = vshll.u32 %v654, 16
        %v753 = vor.u32 %v750, %v751
        %v754 = vrot.slane %v750, 4
        %v756 = vshrl.u32 %v655, 16
        %v758 = vrot.slane %v756, 7
        %v759 = vshll.u32 %v655, 16
        %v761 = vor.u32 %v758, %v759
        %v762 = vsel %vm661, %v754, %v761
        %v763 = vrot.slane %v758, 4
        %v765 = vshrl.u32 %v656, 16
        %v767 = vrot.slane %v765, 7
        %v768 = vshll.u32 %v656, 16
        %v770 = vor.u32 %v767, %v768
        %v771 = vrot.slane %v767, 4
        %v773 = vshrl.u32 %v657, 16
        %v775 = vrot.slane %v773, 7
        %v776 = vshll.u32 %v657, 16
        %v778 = vor.u32 %v775, %v776
        %v779 = vsel %vm661, %v771, %v778
        %v780 = vrot.slane %v775, 4
        %v782 = vshrl.u32 %v658, 16
        %v784 = vrot.slane %v782, 7
        %v785 = vshll.u32 %v658, 16
        %v787 = vor.u32 %v784, %v785
        %v788 = vrot.slane %v784, 4
        %v790 = vshrl.u32 %v659, 16
        %v792 = vrot.slane %v790, 7
        %v793 = vshll.u32 %v659, 16
        %v795 = vor.u32 %v792, %v793
        %v796 = vsel %vm661, %v788, %v795
        %v797 = vrot.slane %v792, 4
        %s822 = scalar_lea.vmem [#allocation2], 12
        %vm823 = vcmask 257024
        %vm824 = vmand %vm823, %vm327
        %v825 = vld [vmem:[%s822] sm:$0xf]
        %v826 = vsel %vm824, %v668, %v825
        %827 = vst [vmem:[%s822] sm:$0xf] %v826
        %vm828 = vcmask 257024
        %829 = vst.msk [vmem:[%s822 + $0x4] sm:$0xf] %vm828, %v677
        %v830 = vld [vmem:[%s822 + $0x8] sm:$0x1]
        %v831 = vsel %vm296, %v678, %v830
        %832 = vst [vmem:[%s822 + $0x8] sm:$0x1] %v831
        %v833 = vld [vmem:[%s822 + $0xc] sm:$0xf]
        %v834 = vsel %vm824, %v685, %v833
        %835 = vst [vmem:[%s822 + $0xc] sm:$0xf] %v834
        %836 = vst.msk [vmem:[%s822 + $0x10] sm:$0xf] %vm828, %v694
        %v837 = vld [vmem:[%s822 + $0x14] sm:$0x1]
        %v838 = vsel %vm296, %v695, %v837
        %839 = vst [vmem:[%s822 + $0x14] sm:$0x1] %v838
        %v840 = vld [vmem:[%s822 + $0x18] sm:$0xf]
        %v841 = vsel %vm824, %v702, %v840
        %842 = vst [vmem:[%s822 + $0x18] sm:$0xf] %v841
        %843 = vst.msk [vmem:[%s822 + $0x1c] sm:$0xf] %vm828, %v711
        %v844 = vld [vmem:[%s822 + $0x20] sm:$0x1]
        %v845 = vsel %vm296, %v712, %v844
        %846 = vst [vmem:[%s822 + $0x20] sm:$0x1] %v845
        %v847 = vld [vmem:[%s822 + $0x24] sm:$0xf]
        %v848 = vsel %vm824, %v719, %v847
        %849 = vst [vmem:[%s822 + $0x24] sm:$0xf] %v848
        %850 = vst.msk [vmem:[%s822 + $0x28] sm:$0xf] %vm828, %v728
        %v851 = vld [vmem:[%s822 + $0x2c] sm:$0x1]
        %v852 = vsel %vm296, %v729, %v851
        %853 = vst [vmem:[%s822 + $0x2c] sm:$0x1] %v852
        %v854 = vld [vmem:[%s822 + $0x30] sm:$0xf]
        %v855 = vsel %vm824, %v736, %v854
        %856 = vst [vmem:[%s822 + $0x30] sm:$0xf] %v855
        %857 = vst.msk [vmem:[%s822 + $0x34] sm:$0xf] %vm828, %v745
        %v858 = vld [vmem:[%s822 + $0x38] sm:$0x1]
        %v859 = vsel %vm296, %v746, %v858
        %860 = vst [vmem:[%s822 + $0x38] sm:$0x1] %v859
        %v861 = vld [vmem:[%s822 + $0x3c] sm:$0xf]
        %v862 = vsel %vm824, %v753, %v861
        %863 = vst [vmem:[%s822 + $0x3c] sm:$0xf] %v862
        %864 = vst.msk [vmem:[%s822 + $0x40] sm:$0xf] %vm828, %v762
        %v865 = vld [vmem:[%s822 + $0x44] sm:$0x1]
        %v866 = vsel %vm296, %v763, %v865
        %867 = vst [vmem:[%s822 + $0x44] sm:$0x1] %v866
        %v868 = vld [vmem:[%s822 + $0x48] sm:$0xf]
        %v869 = vsel %vm824, %v770, %v868
        %870 = vst [vmem:[%s822 + $0x48] sm:$0xf] %v869
        %871 = vst.msk [vmem:[%s822 + $0x4c] sm:$0xf] %vm828, %v779
        %v872 = vld [vmem:[%s822 + $0x50] sm:$0x1]
        %v873 = vsel %vm296, %v780, %v872
        %874 = vst [vmem:[%s822 + $0x50] sm:$0x1] %v873
        %v875 = vld [vmem:[%s822 + $0x54] sm:$0xf]
        %v876 = vsel %vm824, %v787, %v875
        %877 = vst [vmem:[%s822 + $0x54] sm:$0xf] %v876
        %878 = vst.msk [vmem:[%s822 + $0x58] sm:$0xf] %vm828, %v796
        %v879 = vld [vmem:[%s822 + $0x5c] sm:$0x1]
        %v880 = vsel %vm296, %v797, %v879
        %881 = vst [vmem:[%s822 + $0x5c] sm:$0x1] %v880
        %p882 = scmp.gt.s32.totalorder %s26, 0
        // Predicated region
        $region49: #{tpu_custom_call.1} parent=47 // pred_check
          %p883 = pneg %p882
        $region50: #{tpu_custom_call.1} parent=47 // pred_check_branch
          %885 = sbr.rel (%p883) target = $region52
        $region51: #{tpu_custom_call.1} parent=47 // pred_region
          %s886 = ssub.s32 %s293, 1
          %s887 = smul.u32 %s886, 16
          %s888 = sshra.s32 %s887, 3
          %s889 = sand.u32 %s887, 7
          %s890 = smul.addr %s888, 4
          %s891 = scalar_lea.vmem %s290, %s890
          %v892 = vld [vmem:[%s891] sm:$0xf]
          %v893 = vld [vmem:[%s891 + $0x4] sm:$0xf]
          %v894 = vld [vmem:[%s1] sm:$0xf]
          %v895 = vld [vmem:[%s1 + $0x4] sm:$0xf]
          %v896 = vld [vmem:[%s1 + $0x8] sm:$0xf]
          %v897 = vld [vmem:[%s1 + $0xc] sm:$0xf]
          %v898 = vld [vmem:[%s1 + $0x10] sm:$0xf]
          %v899 = vld [vmem:[%s1 + $0x14] sm:$0xf]
          %v900 = vld [vmem:[%s1 + $0x18] sm:$0xf]
          %v901 = vld [vmem:[%s1 + $0x1c] sm:$0xf]
          %v902 = vld [vmem:[%s1 + $0x20] sm:$0xf]
          %v903 = vld [vmem:[%s1 + $0x24] sm:$0xf]
          %v904 = vld [vmem:[%s1 + $0x28] sm:$0xf]
          %v905 = vld [vmem:[%s1 + $0x2c] sm:$0xf]
          %v906 = vld [vmem:[%s1 + $0x30] sm:$0xf]
          %v907 = vld [vmem:[%s1 + $0x34] sm:$0xf]
          %v908 = vld [vmem:[%s1 + $0x38] sm:$0xf]
          %v909 = vld [vmem:[%s1 + $0x3c] sm:$0xf]
          %v910 = vld [vmem:[%s2] sm:$0x1]
          %v912 = vlaneseq
          %v913 = vshrl.u32 %v912, 7
          %v914 = vsub.s32 0, %v913
          %v915 = vrot.slane %v910, %v914
          %v919 = vunpack.c.l.b16 %v892
          %v920 = vunpack.c.l.b16 %v893
          %v921 = vpack.c.b16 %v920, %v919
          %v939 = vunpack.c.l.b16 %v894
          %v940 = vunpack.c.l.b16 %v895
          %v941 = vunpack.c.l.b16 %v896
          %v942 = vunpack.c.l.b16 %v897
          %v943 = vunpack.c.l.b16 %v898
          %v944 = vunpack.c.l.b16 %v899
          %v945 = vunpack.c.l.b16 %v900
          %v946 = vunpack.c.l.b16 %v901
          %v947 = vunpack.c.l.b16 %v902
          %v948 = vunpack.c.l.b16 %v903
          %v949 = vunpack.c.l.b16 %v904
          %v950 = vunpack.c.l.b16 %v905
          %v951 = vunpack.c.l.b16 %v906
          %v952 = vunpack.c.l.b16 %v907
          %v953 = vunpack.c.l.b16 %v908
          %v954 = vunpack.c.l.b16 %v909
          %v955 = vpack.c.b16 %v940, %v939
          %v956 = vpack.c.b16 %v942, %v941
          %v957 = vpack.c.b16 %v944, %v943
          %v958 = vpack.c.b16 %v946, %v945
          %v959 = vpack.c.b16 %v948, %v947
          %v960 = vpack.c.b16 %v950, %v949
          %v961 = vpack.c.b16 %v952, %v951
          %v962 = vpack.c.b16 %v954, %v953
          %971 = vmatprep.subr.bf16.mxu0 0
          %972 = vmatpush1.bf16.msra.mxu0 %v962
          %973 = vmatprep.subr.bf16.mxu0 0
          %974 = vmatpush1.bf16.msra.mxu0 %v961
          %975 = vmatprep.subr.bf16.mxu0 0
          %976 = vmatpush1.bf16.msra.mxu0 %v960
          %977 = vmatprep.subr.bf16.mxu0 0
          %978 = vmatpush1.bf16.msra.mxu0 %v959
          %979 = vmatprep.subr.bf16.mxu0 0
          %980 = vmatpush1.bf16.msra.mxu0 %v958
          %981 = vmatprep.subr.bf16.mxu0 0
          %982 = vmatpush1.bf16.msra.mxu0 %v957
          %983 = vmatprep.subr.bf16.mxu0 0
          %984 = vmatpush1.bf16.msra.mxu0 %v956
          %985 = vmatprep.subr.bf16.mxu0 0
          %986 = vmatpush1.bf16.msra.mxu0 %v955
          %987 = vmatprep.subr.bf16.mxu0 0
          %988 = vmatpush2.bf16.msra.mxu0 0
          %989 = vmatprep.subr.bf16.mxu0 0
          %990 = vmatpush2.bf16.msra.mxu0 0
          %991 = vmatprep.subr.bf16.mxu0 0
          %992 = vmatpush2.bf16.msra.mxu0 0
          %993 = vmatprep.subr.bf16.mxu0 0
          %994 = vmatpush2.bf16.msra.mxu0 0
          %995 = vmatprep.subr.bf16.mxu0 0
          %996 = vmatpush2.bf16.msra.mxu0 0
          %997 = vmatprep.subr.bf16.mxu0 0
          %998 = vmatpush2.bf16.msra.mxu0 0
          %999 = vmatprep.subr.bf16.mxu0 0
          %1000 = vmatpush2.bf16.msra.mxu0 0
          %1001 = vmatprep.subr.bf16.mxu0 0
          %1002 = vmatpush2.bf16.msra.mxu0 0
          %1003 = vmatprep.mubr.bf16.mxu0 0
          %1004 = vmatmul.mubr.bf16.gmra.mxu0 %v921
          %v1005 = vpop.f32.mrf.mxu0
          %v1006 = vadd.f32 %v915, %v1005
          %v1007 = vpop.f32.mrf.mxu0
          %v1008 = vpop.f32.mrf.mxu0
          %v1009 = vadd.f32 %v915, %v1008
          %v1010 = vpop.f32.mrf.mxu0
          %1011 = vdwg.mxu0
          %v1012 = vmax.f32 %v1006, 0.0
          %v1013 = vmax.f32 %v1009, 0.0
          %v1014 = vpack.c.bf16 %v1013, %v1012
          %v1016 = vunpack.c.l.b16 %v1014
          %v1017 = vunpack.c.h.b16 %v1014
          %v1018 = vpack.c.b16 %v1016, %v1016
          %v1019 = vpack.c.b16 %v1017, %v1017
          %v1021 = vshrl.u32 %v1018, 16
          %v1023 = vrot.slane %v1021, 7
          %v1024 = vshll.u32 %v1018, 16
          %v1026 = vor.u32 %v1023, %v1024
          %v1027 = vrot.slane %v1023, 4
          %v1029 = vshrl.u32 %v1019, 16
          %v1031 = vrot.slane %v1029, 7
          %v1032 = vshll.u32 %v1019, 16
          %v1034 = vor.u32 %v1031, %v1032
          %v1035 = vsel %vm661, %v1027, %v1034
          %v1036 = vrot.slane %v1031, 4
          %v1040 = vld [vmem:[#allocation2] sm:$0xf]
          %v1041 = vsel %vm824, %v1026, %v1040
          %1042 = vst [vmem:[#allocation2] sm:$0xf] %v1041
          %1043 = vst.msk [vmem:[#allocation2 + $0x4] sm:$0xf] %vm828, %v1035
          %v1044 = vld [vmem:[#allocation2 + $0x8] sm:$0x1]
          %v1045 = vsel %vm296, %v1036, %v1044
          %1046 = vst [vmem:[#allocation2 + $0x8] sm:$0x1] %v1045
        $region52: #{tpu_custom_call.1} parent=47 // pred_fallthru
          _
        %p1047 = scmp.eq.s32.totalorder %s26, 0
        // Predicated region
        $region53: #{tpu_custom_call.1} parent=47 // pred_check
          %p1048 = pneg %p1047
        $region54: #{tpu_custom_call.1} parent=47 // pred_check_branch
          %1050 = sbr.rel (%p1048) target = $region56
        $region55: #{tpu_custom_call.1} parent=47 // pred_region
          %v1051 = vld [vmem:[#allocation2] sm:$0xf]
          %v1052 = vsel %vm824, 0, %v1051
          %1053 = vst [vmem:[#allocation2] sm:$0xf] %v1052
          %1054 = vst.msk [vmem:[#allocation2 + $0x4] sm:$0xf] %vm828, 0
          %v1055 = vld [vmem:[#allocation2 + $0x8] sm:$0x1]
          %v1056 = vsel %vm296, 0, %v1055
          %1057 = vst [vmem:[#allocation2 + $0x8] sm:$0x1] %v1056
        $region56: #{tpu_custom_call.1} parent=47 // pred_fallthru
          _
        %p1058 = scmp.lt.s32.totalorder %s26, 1
        // Predicated region
        $region57: #{tpu_custom_call.1} parent=47 // pred_check
          %p1059 = pneg %p1058
        $region58: #{tpu_custom_call.1} parent=47 // pred_check_branch
          %1061 = sbr.rel (%p1059) target = $region60
        $region59: #{tpu_custom_call.1} parent=47 // pred_region
          %s1062 = sadd.s32 %s293, 8
          %s1063 = smul.u32 %s1062, 16
          %s1064 = sshra.s32 %s1063, 3
          %s1065 = sand.u32 %s1063, 7
          %s1066 = smul.addr %s1064, 4
          %s1067 = scalar_lea.vmem %s290, %s1066
          %v1068 = vld [vmem:[%s1067] sm:$0xf]
          %v1069 = vld [vmem:[%s1067 + $0x4] sm:$0xf]
          %v1070 = vld [vmem:[%s1] sm:$0xf]
          %v1071 = vld [vmem:[%s1 + $0x4] sm:$0xf]
          %v1072 = vld [vmem:[%s1 + $0x8] sm:$0xf]
          %v1073 = vld [vmem:[%s1 + $0xc] sm:$0xf]
          %v1074 = vld [vmem:[%s1 + $0x10] sm:$0xf]
          %v1075 = vld [vmem:[%s1 + $0x14] sm:$0xf]
          %v1076 = vld [vmem:[%s1 + $0x18] sm:$0xf]
          %v1077 = vld [vmem:[%s1 + $0x1c] sm:$0xf]
          %v1078 = vld [vmem:[%s1 + $0x20] sm:$0xf]
          %v1079 = vld [vmem:[%s1 + $0x24] sm:$0xf]
          %v1080 = vld [vmem:[%s1 + $0x28] sm:$0xf]
          %v1081 = vld [vmem:[%s1 + $0x2c] sm:$0xf]
          %v1082 = vld [vmem:[%s1 + $0x30] sm:$0xf]
          %v1083 = vld [vmem:[%s1 + $0x34] sm:$0xf]
          %v1084 = vld [vmem:[%s1 + $0x38] sm:$0xf]
          %v1085 = vld [vmem:[%s1 + $0x3c] sm:$0xf]
          %v1086 = vld [vmem:[%s2] sm:$0x1]
          %v1088 = vlaneseq
          %v1089 = vshrl.u32 %v1088, 7
          %v1090 = vsub.s32 0, %v1089
          %v1091 = vrot.slane %v1086, %v1090
          %v1095 = vunpack.c.l.b16 %v1068
          %v1096 = vunpack.c.l.b16 %v1069
          %v1097 = vpack.c.b16 %v1096, %v1095
          %v1115 = vunpack.c.l.b16 %v1070
          %v1116 = vunpack.c.l.b16 %v1071
          %v1117 = vunpack.c.l.b16 %v1072
          %v1118 = vunpack.c.l.b16 %v1073
          %v1119 = vunpack.c.l.b16 %v1074
          %v1120 = vunpack.c.l.b16 %v1075
          %v1121 = vunpack.c.l.b16 %v1076
          %v1122 = vunpack.c.l.b16 %v1077
          %v1123 = vunpack.c.l.b16 %v1078
          %v1124 = vunpack.c.l.b16 %v1079
          %v1125 = vunpack.c.l.b16 %v1080
          %v1126 = vunpack.c.l.b16 %v1081
          %v1127 = vunpack.c.l.b16 %v1082
          %v1128 = vunpack.c.l.b16 %v1083
          %v1129 = vunpack.c.l.b16 %v1084
          %v1130 = vunpack.c.l.b16 %v1085
          %v1131 = vpack.c.b16 %v1116, %v1115
          %v1132 = vpack.c.b16 %v1118, %v1117
          %v1133 = vpack.c.b16 %v1120, %v1119
          %v1134 = vpack.c.b16 %v1122, %v1121
          %v1135 = vpack.c.b16 %v1124, %v1123
          %v1136 = vpack.c.b16 %v1126, %v1125
          %v1137 = vpack.c.b16 %v1128, %v1127
          %v1138 = vpack.c.b16 %v1130, %v1129
          %1147 = vmatprep.subr.bf16.mxu0 0
          %1148 = vmatpush1.bf16.msra.mxu0 %v1138
          %1149 = vmatprep.subr.bf16.mxu0 0
          %1150 = vmatpush1.bf16.msra.mxu0 %v1137
          %1151 = vmatprep.subr.bf16.mxu0 0
          %1152 = vmatpush1.bf16.msra.mxu0 %v1136
          %1153 = vmatprep.subr.bf16.mxu0 0
          %1154 = vmatpush1.bf16.msra.mxu0 %v1135
          %1155 = vmatprep.subr.bf16.mxu0 0
          %1156 = vmatpush1.bf16.msra.mxu0 %v1134
          %1157 = vmatprep.subr.bf16.mxu0 0
          %1158 = vmatpush1.bf16.msra.mxu0 %v1133
          %1159 = vmatprep.subr.bf16.mxu0 0
          %1160 = vmatpush1.bf16.msra.mxu0 %v1132
          %1161 = vmatprep.subr.bf16.mxu0 0
          %1162 = vmatpush1.bf16.msra.mxu0 %v1131
          %1163 = vmatprep.subr.bf16.mxu0 0
          %1164 = vmatpush2.bf16.msra.mxu0 0
          %1165 = vmatprep.subr.bf16.mxu0 0
          %1166 = vmatpush2.bf16.msra.mxu0 0
          %1167 = vmatprep.subr.bf16.mxu0 0
          %1168 = vmatpush2.bf16.msra.mxu0 0
          %1169 = vmatprep.subr.bf16.mxu0 0
          %1170 = vmatpush2.bf16.msra.mxu0 0
          %1171 = vmatprep.subr.bf16.mxu0 0
          %1172 = vmatpush2.bf16.msra.mxu0 0
          %1173 = vmatprep.subr.bf16.mxu0 0
          %1174 = vmatpush2.bf16.msra.mxu0 0
          %1175 = vmatprep.subr.bf16.mxu0 0
          %1176 = vmatpush2.bf16.msra.mxu0 0
          %1177 = vmatprep.subr.bf16.mxu0 0
          %1178 = vmatpush2.bf16.msra.mxu0 0
          %1179 = vmatprep.mubr.bf16.mxu0 0
          %1180 = vmatmul.mubr.bf16.gmra.mxu0 %v1097
          %v1181 = vpop.f32.mrf.mxu0
          %v1182 = vadd.f32 %v1091, %v1181
          %v1183 = vpop.f32.mrf.mxu0
          %v1184 = vpop.f32.mrf.mxu0
          %v1185 = vadd.f32 %v1091, %v1184
          %v1186 = vpop.f32.mrf.mxu0
          %1187 = vdwg.mxu0
          %v1188 = vmax.f32 %v1182, 0.0
          %v1189 = vmax.f32 %v1185, 0.0
          %v1190 = vpack.c.bf16 %v1189, %v1188
          %v1192 = vunpack.c.l.b16 %v1190
          %v1193 = vunpack.c.h.b16 %v1190
          %v1194 = vpack.c.b16 %v1192, %v1192
          %v1195 = vpack.c.b16 %v1193, %v1193
          %v1197 = vshrl.u32 %v1194, 16
          %v1199 = vrot.slane %v1197, 7
          %v1200 = vshll.u32 %v1194, 16
          %v1202 = vor.u32 %v1199, %v1200
          %v1203 = vrot.slane %v1199, 4
          %v1205 = vshrl.u32 %v1195, 16
          %v1207 = vrot.slane %v1205, 7
          %v1208 = vshll.u32 %v1195, 16
          %v1210 = vor.u32 %v1207, %v1208
          %v1211 = vsel %vm661, %v1203, %v1210
          %v1212 = vrot.slane %v1207, 4
          %s1216 = scalar_lea.vmem [#allocation2], 108
          %v1217 = vld [vmem:[%s1216] sm:$0xf]
          %v1218 = vsel %vm824, %v1202, %v1217
          %1219 = vst [vmem:[%s1216] sm:$0xf] %v1218
          %1220 = vst.msk [vmem:[%s1216 + $0x4] sm:$0xf] %vm828, %v1211
          %v1221 = vld [vmem:[%s1216 + $0x8] sm:$0x1]
          %v1222 = vsel %vm296, %v1212, %v1221
          %1223 = vst [vmem:[%s1216 + $0x8] sm:$0x1] %v1222
        $region60: #{tpu_custom_call.1} parent=47 // pred_fallthru
          _
        %p1224 = scmp.eq.s32.totalorder %s26, 1
        // Predicated region
        $region61: #{tpu_custom_call.1} parent=47 // pred_check
          %p1225 = pneg %p1224
        $region62: #{tpu_custom_call.1} parent=47 // pred_check_branch
          %1227 = sbr.rel (%p1225) target = $region64
        $region63: #{tpu_custom_call.1} parent=47 // pred_region
          %s1228 = scalar_lea.vmem [#allocation2], 108
          %v1229 = vld [vmem:[%s1228] sm:$0xf]
          %v1230 = vsel %vm824, 0, %v1229
          %1231 = vst [vmem:[%s1228] sm:$0xf] %v1230
          %1232 = vst.msk [vmem:[%s1228 + $0x4] sm:$0xf] %vm828, 0
          %v1233 = vld [vmem:[%s1228 + $0x8] sm:$0x1]
          %v1234 = vsel %vm296, 0, %v1233
          %1235 = vst [vmem:[%s1228 + $0x8] sm:$0x1] %v1234
        $region64: #{tpu_custom_call.1} parent=47 // pred_fallthru
          _
        %v1236 = vld [vmem:[#allocation2] sm:$0xf]
        %v1237 = vld [vmem:[#allocation2 + $0x4] sm:$0xf]
        %v1238 = vld [vmem:[#allocation2 + $0x8] sm:$0x1]
        %v1239 = vld [vmem:[#allocation2 + $0xc] sm:$0xf]
        %v1240 = vld [vmem:[#allocation2 + $0x10] sm:$0xf]
        %v1241 = vld [vmem:[#allocation2 + $0x14] sm:$0x1]
        %v1242 = vld [vmem:[#allocation2 + $0x18] sm:$0xf]
        %v1243 = vld [vmem:[#allocation2 + $0x1c] sm:$0xf]
        %v1244 = vld [vmem:[#allocation2 + $0x20] sm:$0x1]
        %v1245 = vld [vmem:[#allocation2 + $0x24] sm:$0xf]
        %v1246 = vld [vmem:[#allocation2 + $0x28] sm:$0xf]
        %v1247 = vld [vmem:[#allocation2 + $0x2c] sm:$0x1]
        %v1248 = vld [vmem:[#allocation2 + $0x30] sm:$0xf]
        %v1249 = vld [vmem:[#allocation2 + $0x34] sm:$0xf]
        %v1250 = vld [vmem:[#allocation2 + $0x38] sm:$0x1]
        %v1251 = vld [vmem:[#allocation2 + $0x3c] sm:$0xf]
        %v1252 = vld [vmem:[#allocation2 + $0x40] sm:$0xf]
        %v1253 = vld [vmem:[#allocation2 + $0x44] sm:$0x1]
        %v1254 = vld [vmem:[#allocation2 + $0x48] sm:$0xf]
        %v1255 = vld [vmem:[#allocation2 + $0x4c] sm:$0xf]
        %v1256 = vld [vmem:[#allocation2 + $0x50] sm:$0x1]
        %v1257 = vld [vmem:[#allocation2 + $0x54] sm:$0xf]
        %v1258 = vld [vmem:[#allocation2 + $0x58] sm:$0xf]
        %v1259 = vld [vmem:[#allocation2 + $0x5c] sm:$0x1]
        %v1260 = vld [vmem:[#allocation2 + $0x60] sm:$0xf]
        %v1261 = vld [vmem:[#allocation2 + $0x64] sm:$0xf]
        %v1262 = vld [vmem:[#allocation2 + $0x68] sm:$0x1]
        %v1263 = vld [vmem:[#allocation2 + $0x6c] sm:$0xf]
        %v1264 = vld [vmem:[#allocation2 + $0x70] sm:$0xf]
        %v1265 = vld [vmem:[#allocation2 + $0x74] sm:$0x1]
        %v1282 = vunpack.c.l.b16 %v1236
        %v1283 = vunpack.c.l.b16 %v1237
        %v1284 = vunpack.c.l.b16 %v1239
        %v1285 = vunpack.c.l.b16 %v1240
        %v1286 = vunpack.c.l.b16 %v1242
        %v1287 = vunpack.c.l.b16 %v1243
        %v1288 = vunpack.c.l.b16 %v1245
        %v1289 = vunpack.c.l.b16 %v1246
        %v1290 = vunpack.c.l.b16 %v1248
        %v1291 = vunpack.c.l.b16 %v1249
        %v1292 = vunpack.c.l.b16 %v1251
        %v1293 = vunpack.c.l.b16 %v1252
        %v1294 = vunpack.c.l.b16 %v1254
        %v1295 = vunpack.c.l.b16 %v1255
        %v1296 = vunpack.c.l.b16 %v1257
        %v1297 = vunpack.c.l.b16 %v1258
        %v1298 = vpack.c.b16 %v1283, %v1282
        %v1299 = vpack.c.b16 %v1285, %v1284
        %v1300 = vpack.c.b16 %v1287, %v1286
        %v1301 = vpack.c.b16 %v1289, %v1288
        %v1302 = vpack.c.b16 %v1291, %v1290
        %v1303 = vpack.c.b16 %v1293, %v1292
        %v1304 = vpack.c.b16 %v1295, %v1294
        %v1305 = vpack.c.b16 %v1297, %v1296
        %v1314 = vunpack.c.l.b16 %v1238
        %v1315 = vunpack.c.l.b16 %v1241
        %v1316 = vunpack.c.l.b16 %v1244
        %v1317 = vunpack.c.l.b16 %v1247
        %v1318 = vunpack.c.l.b16 %v1250
        %v1319 = vunpack.c.l.b16 %v1253
        %v1320 = vunpack.c.l.b16 %v1256
        %v1321 = vunpack.c.l.b16 %v1259
        %v1322 = vpack.c.b16 %v1314, %v1314
        %v1323 = vpack.c.b16 %v1315, %v1315
        %v1324 = vpack.c.b16 %v1316, %v1316
        %v1325 = vpack.c.b16 %v1317, %v1317
        %v1326 = vpack.c.b16 %v1318, %v1318
        %v1327 = vpack.c.b16 %v1319, %v1319
        %v1328 = vpack.c.b16 %v1320, %v1320
        %v1329 = vpack.c.b16 %v1321, %v1321
        %vm1330 = vsmask.f32 7424
        %v1332 = vshrl.u32 %v1298, 16
        %v1334 = vshll.u32 %v1298, 16
        %v1336 = vrot.slane %v1334, 1
        %v1337 = vor.u32 %v1332, %v1336
        %v1339 = vshll.u32 %v1322, 16
        %v1341 = vrot.slane %v1339, 1
        %v1342 = vsel %vm1330, %v1337, %v1341
        %v1344 = vshrl.u32 %v1299, 16
        %v1346 = vshll.u32 %v1299, 16
        %v1348 = vrot.slane %v1346, 1
        %v1349 = vor.u32 %v1344, %v1348
        %v1351 = vshll.u32 %v1323, 16
        %v1353 = vrot.slane %v1351, 1
        %v1354 = vsel %vm1330, %v1349, %v1353
        %v1356 = vshrl.u32 %v1300, 16
        %v1358 = vshll.u32 %v1300, 16
        %v1360 = vrot.slane %v1358, 1
        %v1361 = vor.u32 %v1356, %v1360
        %v1363 = vshll.u32 %v1324, 16
        %v1365 = vrot.slane %v1363, 1
        %v1366 = vsel %vm1330, %v1361, %v1365
        %v1368 = vshrl.u32 %v1301, 16
        %v1370 = vshll.u32 %v1301, 16
        %v1372 = vrot.slane %v1370, 1
        %v1373 = vor.u32 %v1368, %v1372
        %v1375 = vshll.u32 %v1325, 16
        %v1377 = vrot.slane %v1375, 1
        %v1378 = vsel %vm1330, %v1373, %v1377
        %v1380 = vshrl.u32 %v1302, 16
        %v1382 = vshll.u32 %v1302, 16
        %v1384 = vrot.slane %v1382, 1
        %v1385 = vor.u32 %v1380, %v1384
        %v1387 = vshll.u32 %v1326, 16
        %v1389 = vrot.slane %v1387, 1
        %v1390 = vsel %vm1330, %v1385, %v1389
        %v1392 = vshrl.u32 %v1303, 16
        %v1394 = vshll.u32 %v1303, 16
        %v1396 = vrot.slane %v1394, 1
        %v1397 = vor.u32 %v1392, %v1396
        %v1399 = vshll.u32 %v1327, 16
        %v1401 = vrot.slane %v1399, 1
        %v1402 = vsel %vm1330, %v1397, %v1401
        %v1404 = vshrl.u32 %v1304, 16
        %v1406 = vshll.u32 %v1304, 16
        %v1408 = vrot.slane %v1406, 1
        %v1409 = vor.u32 %v1404, %v1408
        %v1411 = vshll.u32 %v1328, 16
        %v1413 = vrot.slane %v1411, 1
        %v1414 = vsel %vm1330, %v1409, %v1413
        %v1416 = vshrl.u32 %v1305, 16
        %v1418 = vshll.u32 %v1305, 16
        %v1420 = vrot.slane %v1418, 1
        %v1421 = vor.u32 %v1416, %v1420
        %v1423 = vshll.u32 %v1329, 16
        %v1425 = vrot.slane %v1423, 1
        %v1426 = vsel %vm1330, %v1421, %v1425
        %1427 = vrot.lane.b32.xlu0 %v1342, 32
        %v1428 = vpop.permute.xlu0 %1427
        %1429 = vrot.lane.b32.xlu0 %v1354, 32
        %v1430 = vpop.permute.xlu0 %1429
        %1431 = vrot.lane.b32.xlu0 %v1366, 32
        %v1432 = vpop.permute.xlu0 %1431
        %1433 = vrot.lane.b32.xlu0 %v1378, 32
        %v1434 = vpop.permute.xlu0 %1433
        %1435 = vrot.lane.b32.xlu0 %v1390, 32
        %v1436 = vpop.permute.xlu0 %1435
        %1437 = vrot.lane.b32.xlu0 %v1402, 32
        %v1438 = vpop.permute.xlu0 %1437
        %1439 = vrot.lane.b32.xlu0 %v1414, 32
        %v1440 = vpop.permute.xlu0 %1439
        %1441 = vrot.lane.b32.xlu0 %v1426, 32
        %v1442 = vpop.permute.xlu0 %1441
        %vm1443 = vcmask 1046528
        %v1444 = vrot.slane %v1298, 1
        %v1445 = vrot.slane %v1322, 1
        %v1446 = vsel %vm1443, %v1444, %v1445
        %v1447 = vrot.slane %v1299, 1
        %v1448 = vrot.slane %v1323, 1
        %v1449 = vsel %vm1443, %v1447, %v1448
        %v1450 = vrot.slane %v1300, 1
        %v1451 = vrot.slane %v1324, 1
        %v1452 = vsel %vm1443, %v1450, %v1451
        %v1453 = vrot.slane %v1301, 1
        %v1454 = vrot.slane %v1325, 1
        %v1455 = vsel %vm1443, %v1453, %v1454
        %v1456 = vrot.slane %v1302, 1
        %v1457 = vrot.slane %v1326, 1
        %v1458 = vsel %vm1443, %v1456, %v1457
        %v1459 = vrot.slane %v1303, 1
        %v1460 = vrot.slane %v1327, 1
        %v1461 = vsel %vm1443, %v1459, %v1460
        %v1462 = vrot.slane %v1304, 1
        %v1463 = vrot.slane %v1328, 1
        %v1464 = vsel %vm1443, %v1462, %v1463
        %v1465 = vrot.slane %v1305, 1
        %v1466 = vrot.slane %v1329, 1
        %v1467 = vsel %vm1443, %v1465, %v1466
        %1468 = vrot.lane.b32.xlu0 %v1446, 64
        %v1469 = vpop.permute.xlu0 %1468
        %1470 = vrot.lane.b32.xlu0 %v1449, 64
        %v1471 = vpop.permute.xlu0 %1470
        %1472 = vrot.lane.b32.xlu0 %v1452, 64
        %v1473 = vpop.permute.xlu0 %1472
        %1474 = vrot.lane.b32.xlu0 %v1455, 64
        %v1475 = vpop.permute.xlu0 %1474
        %1476 = vrot.lane.b32.xlu0 %v1458, 64
        %v1477 = vpop.permute.xlu0 %1476
        %1478 = vrot.lane.b32.xlu0 %v1461, 64
        %v1479 = vpop.permute.xlu0 %1478
        %1480 = vrot.lane.b32.xlu0 %v1464, 64
        %v1481 = vpop.permute.xlu0 %1480
        %1482 = vrot.lane.b32.xlu0 %v1467, 64
        %v1483 = vpop.permute.xlu0 %1482
        %v1486 = vunpack.c.l.b16 %v1260
        %v1487 = vunpack.c.l.b16 %v1261
        %v1488 = vpack.c.b16 %v1487, %v1486
        %1489 = vrot.lane.b32.xlu0 %v1299, 96
        %v1490 = vpop.permute.xlu0 %1489
        %1491 = vrot.lane.b32.xlu0 %v1300, 96
        %v1492 = vpop.permute.xlu0 %1491
        %1493 = vrot.lane.b32.xlu0 %v1301, 96
        %v1494 = vpop.permute.xlu0 %1493
        %1495 = vrot.lane.b32.xlu0 %v1302, 96
        %v1496 = vpop.permute.xlu0 %1495
        %1497 = vrot.lane.b32.xlu0 %v1303, 96
        %v1498 = vpop.permute.xlu0 %1497
        %1499 = vrot.lane.b32.xlu0 %v1304, 96
        %v1500 = vpop.permute.xlu0 %1499
        %1501 = vrot.lane.b32.xlu0 %v1305, 96
        %v1502 = vpop.permute.xlu0 %1501
        %1503 = vrot.lane.b32.xlu0 %v1488, 96
        %v1504 = vpop.permute.xlu0 %1503
        %v1506 = vunpack.c.l.b16 %v1262
        %v1507 = vpack.c.b16 %v1506, %v1506
        %v1509 = vshrl.u32 %v1488, 16
        %v1511 = vshll.u32 %v1488, 16
        %v1513 = vrot.slane %v1511, 1
        %v1514 = vor.u32 %v1509, %v1513
        %v1516 = vshll.u32 %v1507, 16
        %v1518 = vrot.slane %v1516, 1
        %v1519 = vsel %vm1330, %v1514, %v1518
        %v1520 = vrot.slane %v1488, 1
        %v1521 = vrot.slane %v1507, 1
        %v1522 = vsel %vm1443, %v1520, %v1521
        %1523 = vrot.lane.b32.xlu0 %v1449, 32
        %v1524 = vpop.permute.xlu0 %1523
        %1525 = vrot.lane.b32.xlu0 %v1452, 32
        %v1526 = vpop.permute.xlu0 %1525
        %1527 = vrot.lane.b32.xlu0 %v1455, 32
        %v1528 = vpop.permute.xlu0 %1527
        %1529 = vrot.lane.b32.xlu0 %v1458, 32
        %v1530 = vpop.permute.xlu0 %1529
        %1531 = vrot.lane.b32.xlu0 %v1461, 32
        %v1532 = vpop.permute.xlu0 %1531
        %1533 = vrot.lane.b32.xlu0 %v1464, 32
        %v1534 = vpop.permute.xlu0 %1533
        %1535 = vrot.lane.b32.xlu0 %v1467, 32
        %v1536 = vpop.permute.xlu0 %1535
        %1537 = vrot.lane.b32.xlu0 %v1522, 32
        %v1538 = vpop.permute.xlu0 %1537
        %v1541 = vunpack.c.l.b16 %v1263
        %v1542 = vunpack.c.l.b16 %v1264
        %v1543 = vpack.c.b16 %v1542, %v1541
        %1544 = vrot.lane.b32.xlu0 %v1300, 64
        %v1545 = vpop.permute.xlu0 %1544
        %1546 = vrot.lane.b32.xlu0 %v1301, 64
        %v1547 = vpop.permute.xlu0 %1546
        %1548 = vrot.lane.b32.xlu0 %v1302, 64
        %v1549 = vpop.permute.xlu0 %1548
        %1550 = vrot.lane.b32.xlu0 %v1303, 64
        %v1551 = vpop.permute.xlu0 %1550
        %1552 = vrot.lane.b32.xlu0 %v1304, 64
        %v1553 = vpop.permute.xlu0 %1552
        %1554 = vrot.lane.b32.xlu0 %v1305, 64
        %v1555 = vpop.permute.xlu0 %1554
        %1556 = vrot.lane.b32.xlu0 %v1488, 64
        %v1557 = vpop.permute.xlu0 %1556
        %1558 = vrot.lane.b32.xlu0 %v1543, 64
        %v1559 = vpop.permute.xlu0 %1558
        %v1561 = vunpack.c.l.b16 %v1265
        %v1562 = vpack.c.b16 %v1561, %v1561
        %v1564 = vshrl.u32 %v1543, 16
        %v1566 = vshll.u32 %v1543, 16
        %v1568 = vrot.slane %v1566, 1
        %v1569 = vor.u32 %v1564, %v1568
        %v1571 = vshll.u32 %v1562, 16
        %v1573 = vrot.slane %v1571, 1
        %v1574 = vsel %vm1330, %v1569, %v1573
        %1575 = vrot.lane.b32.xlu0 %v1366, 96
        %v1576 = vpop.permute.xlu0 %1575
        %1577 = vrot.lane.b32.xlu0 %v1378, 96
        %v1578 = vpop.permute.xlu0 %1577
        %1579 = vrot.lane.b32.xlu0 %v1390, 96
        %v1580 = vpop.permute.xlu0 %1579
        %1581 = vrot.lane.b32.xlu0 %v1402, 96
        %v1582 = vpop.permute.xlu0 %1581
        %1583 = vrot.lane.b32.xlu0 %v1414, 96
        %v1584 = vpop.permute.xlu0 %1583
        %1585 = vrot.lane.b32.xlu0 %v1426, 96
        %v1586 = vpop.permute.xlu0 %1585
        %1587 = vrot.lane.b32.xlu0 %v1519, 96
        %v1588 = vpop.permute.xlu0 %1587
        %1589 = vrot.lane.b32.xlu0 %v1574, 96
        %v1590 = vpop.permute.xlu0 %1589
        %v1591 = vrot.slane %v1543, 1
        %v1592 = vrot.slane %v1562, 1
        %v1593 = vsel %vm1443, %v1591, %v1592
        %vm1594 = vcmask 261120
        %v1596 = vsel %vm1594, %v1298, %v1428
        %v1598 = vsel %vm1594, %v1299, %v1430
        %v1600 = vsel %vm1594, %v1300, %v1432
        %v1602 = vsel %vm1594, %v1301, %v1434
        %v1604 = vsel %vm1594, %v1302, %v1436
        %v1606 = vsel %vm1594, %v1303, %v1438
        %v1608 = vsel %vm1594, %v1304, %v1440
        %v1610 = vsel %vm1594, %v1305, %v1442
        %vm1611 = vcmask 523264
        %v1613 = vsel %vm1611, %v1596, %v1469
        %v1615 = vsel %vm1611, %v1598, %v1471
        %v1617 = vsel %vm1611, %v1600, %v1473
        %v1619 = vsel %vm1611, %v1602, %v1475
        %v1621 = vsel %vm1611, %v1604, %v1477
        %v1623 = vsel %vm1611, %v1606, %v1479
        %v1625 = vsel %vm1611, %v1608, %v1481
        %v1627 = vsel %vm1611, %v1610, %v1483
        %vm1628 = vcmask 785408
        %v1630 = vsel %vm1628, %v1613, %v1490
        %v1633 = vsel %vm1628, %v1615, %v1492
        %v1636 = vsel %vm1628, %v1617, %v1494
        %v1639 = vsel %vm1628, %v1619, %v1496
        %v1642 = vsel %vm1628, %v1621, %v1498
        %v1645 = vsel %vm1628, %v1623, %v1500
        %v1648 = vsel %vm1628, %v1625, %v1502
        %v1651 = vsel %vm1628, %v1627, %v1504
        %v1655 = vsel %vm1594, %v1354, %v1524
        %v1658 = vsel %vm1594, %v1366, %v1526
        %v1661 = vsel %vm1594, %v1378, %v1528
        %v1664 = vsel %vm1594, %v1390, %v1530
        %v1667 = vsel %vm1594, %v1402, %v1532
        %v1670 = vsel %vm1594, %v1414, %v1534
        %v1673 = vsel %vm1594, %v1426, %v1536
        %v1676 = vsel %vm1594, %v1519, %v1538
        %v1678 = vsel %vm1611, %v1655, %v1545
        %v1680 = vsel %vm1611, %v1658, %v1547
        %v1682 = vsel %vm1611, %v1661, %v1549
        %v1684 = vsel %vm1611, %v1664, %v1551
        %v1686 = vsel %vm1611, %v1667, %v1553
        %v1688 = vsel %vm1611, %v1670, %v1555
        %v1690 = vsel %vm1611, %v1673, %v1557
        %v1692 = vsel %vm1611, %v1676, %v1559
        %v1694 = vsel %vm1628, %v1678, %v1576
        %v1697 = vsel %vm1628, %v1680, %v1578
        %v1700 = vsel %vm1628, %v1682, %v1580
        %v1703 = vsel %vm1628, %v1684, %v1582
        %v1706 = vsel %vm1628, %v1686, %v1584
        %v1709 = vsel %vm1628, %v1688, %v1586
        %v1712 = vsel %vm1628, %v1690, %v1588
        %v1715 = vsel %vm1628, %v1692, %v1590
        %v1717 = vld [vmem:[%s3] sm:$0xf]
        %v1718 = vld [vmem:[%s3 + $0x4] sm:$0xf]
        %v1719 = vld [vmem:[%s3 + $0x8] sm:$0xf]
        %v1720 = vld [vmem:[%s3 + $0xc] sm:$0xf]
        %v1721 = vld [vmem:[%s3 + $0x10] sm:$0xf]
        %v1722 = vld [vmem:[%s3 + $0x14] sm:$0xf]
        %v1723 = vld [vmem:[%s3 + $0x18] sm:$0xf]
        %v1724 = vld [vmem:[%s3 + $0x1c] sm:$0xf]
        %v1725 = vld [vmem:[%s3 + $0x20] sm:$0xf]
        %v1726 = vld [vmem:[%s3 + $0x24] sm:$0xf]
        %v1727 = vld [vmem:[%s3 + $0x28] sm:$0xf]
        %v1728 = vld [vmem:[%s3 + $0x2c] sm:$0xf]
        %v1729 = vld [vmem:[%s3 + $0x30] sm:$0xf]
        %v1730 = vld [vmem:[%s3 + $0x34] sm:$0xf]
        %v1731 = vld [vmem:[%s3 + $0x38] sm:$0xf]
        %v1732 = vld [vmem:[%s3 + $0x3c] sm:$0xf]
        %v1733 = vld [vmem:[%s3 + $0x40] sm:$0xf]
        %v1734 = vld [vmem:[%s3 + $0x44] sm:$0xf]
        %v1735 = vld [vmem:[%s3 + $0x48] sm:$0xf]
        %v1736 = vld [vmem:[%s3 + $0x4c] sm:$0xf]
        %v1737 = vld [vmem:[%s3 + $0x50] sm:$0xf]
        %v1738 = vld [vmem:[%s3 + $0x54] sm:$0xf]
        %v1739 = vld [vmem:[%s3 + $0x58] sm:$0xf]
        %v1740 = vld [vmem:[%s3 + $0x5c] sm:$0xf]
        %v1741 = vld [vmem:[%s3 + $0x60] sm:$0xf]
        %v1742 = vld [vmem:[%s3 + $0x64] sm:$0xf]
        %v1743 = vld [vmem:[%s3 + $0x68] sm:$0xf]
        %v1744 = vld [vmem:[%s3 + $0x6c] sm:$0xf]
        %v1745 = vld [vmem:[%s3 + $0x70] sm:$0xf]
        %v1746 = vld [vmem:[%s3 + $0x74] sm:$0xf]
        %v1747 = vld [vmem:[%s3 + $0x78] sm:$0xf]
        %v1748 = vld [vmem:[%s3 + $0x7c] sm:$0xf]
        %v1749 = vld [vmem:[%s3 + $0x80] sm:$0xf]
        %v1750 = vld [vmem:[%s3 + $0x84] sm:$0xf]
        %v1751 = vld [vmem:[%s3 + $0x88] sm:$0xf]
        %v1752 = vld [vmem:[%s3 + $0x8c] sm:$0xf]
        %v1753 = vld [vmem:[%s4] sm:$0x1]
        %v1755 = vlaneseq
        %v1756 = vshrl.u32 %v1755, 7
        %v1757 = vsub.s32 0, %v1756
        %v1758 = vrot.slane %v1753, %v1757
        %v1796 = vunpack.c.l.b16 %v1717
        %v1797 = vunpack.c.l.b16 %v1718
        %v1798 = vunpack.c.l.b16 %v1719
        %v1799 = vunpack.c.l.b16 %v1720
        %v1800 = vunpack.c.l.b16 %v1721
        %v1801 = vunpack.c.l.b16 %v1722
        %v1802 = vunpack.c.l.b16 %v1723
        %v1803 = vunpack.c.l.b16 %v1724
        %v1804 = vunpack.c.l.b16 %v1725
        %v1805 = vunpack.c.l.b16 %v1726
        %v1806 = vunpack.c.l.b16 %v1727
        %v1807 = vunpack.c.l.b16 %v1728
        %v1808 = vunpack.c.l.b16 %v1729
        %v1809 = vunpack.c.l.b16 %v1730
        %v1810 = vunpack.c.l.b16 %v1731
        %v1811 = vunpack.c.l.b16 %v1732
        %v1812 = vunpack.c.l.b16 %v1733
        %v1813 = vunpack.c.l.b16 %v1734
        %v1814 = vunpack.c.l.b16 %v1735
        %v1815 = vunpack.c.l.b16 %v1736
        %v1816 = vunpack.c.l.b16 %v1737
        %v1817 = vunpack.c.l.b16 %v1738
        %v1818 = vunpack.c.l.b16 %v1739
        %v1819 = vunpack.c.l.b16 %v1740
        %v1820 = vunpack.c.l.b16 %v1741
        %v1821 = vunpack.c.l.b16 %v1742
        %v1822 = vunpack.c.l.b16 %v1743
        %v1823 = vunpack.c.l.b16 %v1744
        %v1824 = vunpack.c.l.b16 %v1745
        %v1825 = vunpack.c.l.b16 %v1746
        %v1826 = vunpack.c.l.b16 %v1747
        %v1827 = vunpack.c.l.b16 %v1748
        %v1828 = vunpack.c.l.b16 %v1749
        %v1829 = vunpack.c.l.b16 %v1750
        %v1830 = vunpack.c.l.b16 %v1751
        %v1831 = vunpack.c.l.b16 %v1752
        %v1832 = vpack.c.b16 %v1797, %v1796
        %v1833 = vpack.c.b16 %v1799, %v1798
        %v1834 = vpack.c.b16 %v1801, %v1800
        %v1835 = vpack.c.b16 %v1803, %v1802
        %v1836 = vpack.c.b16 %v1805, %v1804
        %v1837 = vpack.c.b16 %v1807, %v1806
        %v1838 = vpack.c.b16 %v1809, %v1808
        %v1839 = vpack.c.b16 %v1811, %v1810
        %v1840 = vpack.c.b16 %v1813, %v1812
        %v1841 = vpack.c.b16 %v1815, %v1814
        %v1842 = vpack.c.b16 %v1817, %v1816
        %v1843 = vpack.c.b16 %v1819, %v1818
        %v1844 = vpack.c.b16 %v1821, %v1820
        %v1845 = vpack.c.b16 %v1823, %v1822
        %v1846 = vpack.c.b16 %v1825, %v1824
        %v1847 = vpack.c.b16 %v1827, %v1826
        %v1848 = vpack.c.b16 %v1829, %v1828
        %v1849 = vpack.c.b16 %v1831, %v1830
        %v1869 = vsel %vm1594, %v1452, 0
        %v1872 = vsel %vm1594, %v1455, 0
        %v1875 = vsel %vm1594, %v1458, 0
        %v1878 = vsel %vm1594, %v1461, 0
        %v1881 = vsel %vm1594, %v1464, 0
        %v1884 = vsel %vm1594, %v1467, 0
        %v1887 = vsel %vm1594, %v1522, 0
        %v1890 = vsel %vm1594, %v1593, 0
        %1892 = vmatprep.subr.bf16.mxu0 0
        %1893 = vmatpush1.bf16.msra.mxu0 %v1839
        %1894 = vmatprep.subr.bf16.mxu0 0
        %1895 = vmatpush1.bf16.msra.mxu0 %v1838
        %1896 = vmatprep.subr.bf16.mxu0 0
        %1897 = vmatpush1.bf16.msra.mxu0 %v1837
        %1898 = vmatprep.subr.bf16.mxu0 0
        %1899 = vmatpush1.bf16.msra.mxu0 %v1836
        %1900 = vmatprep.subr.bf16.mxu0 0
        %1901 = vmatpush1.bf16.msra.mxu0 %v1835
        %1902 = vmatprep.subr.bf16.mxu0 0
        %1903 = vmatpush1.bf16.msra.mxu0 %v1834
        %1904 = vmatprep.subr.bf16.mxu0 0
        %1905 = vmatpush1.bf16.msra.mxu0 %v1833
        %1906 = vmatprep.subr.bf16.mxu0 0
        %1907 = vmatpush1.bf16.msra.mxu0 %v1832
        %1908 = vmatprep.subr.bf16.mxu0 0
        %1909 = vmatpush2.bf16.msra.mxu0 %v1847
        %1910 = vmatprep.subr.bf16.mxu0 0
        %1911 = vmatpush2.bf16.msra.mxu0 %v1846
        %1912 = vmatprep.subr.bf16.mxu0 0
        %1913 = vmatpush2.bf16.msra.mxu0 %v1845
        %1914 = vmatprep.subr.bf16.mxu0 0
        %1915 = vmatpush2.bf16.msra.mxu0 %v1844
        %1916 = vmatprep.subr.bf16.mxu0 0
        %1917 = vmatpush2.bf16.msra.mxu0 %v1843
        %1918 = vmatprep.subr.bf16.mxu0 0
        %1919 = vmatpush2.bf16.msra.mxu0 %v1842
        %1920 = vmatprep.subr.bf16.mxu0 0
        %1921 = vmatpush2.bf16.msra.mxu0 %v1841
        %1922 = vmatprep.subr.bf16.mxu0 0
        %1923 = vmatpush2.bf16.msra.mxu0 %v1840
        %1924 = vmatprep.mubr.bf16.mxu0 %v1694
        %1925 = vmatmul.mubr.bf16.gmra.mxu0 %v1630
        %v1926 = vpop.f32.mrf.mxu0
        %v1927 = vadd.f32 %v1758, %v1926
        %v1928 = vpop.f32.mrf.mxu0
        %v1929 = vpop.f32.mrf.mxu0
        %v1930 = vadd.f32 %v1758, %v1929
        %v1931 = vpop.f32.mrf.mxu0
        %1932 = vmatprep.mubr.bf16.mxu0 %v1697
        %1933 = vmatmul.mubr.bf16.gmra.mxu0 %v1633
        %v1934 = vpop.f32.mrf.mxu0
        %v1935 = vadd.f32 %v1758, %v1934
        %v1936 = vpop.f32.mrf.mxu0
        %v1937 = vpop.f32.mrf.mxu0
        %v1938 = vadd.f32 %v1758, %v1937
        %v1939 = vpop.f32.mrf.mxu0
        %1940 = vmatprep.mubr.bf16.mxu0 %v1700
        %1941 = vmatmul.mubr.bf16.gmra.mxu0 %v1636
        %v1942 = vpop.f32.mrf.mxu0
        %v1943 = vadd.f32 %v1758, %v1942
        %v1944 = vpop.f32.mrf.mxu0
        %v1945 = vpop.f32.mrf.mxu0
        %v1946 = vadd.f32 %v1758, %v1945
        %v1947 = vpop.f32.mrf.mxu0
        %1948 = vmatprep.mubr.bf16.mxu0 %v1703
        %1949 = vmatmul.mubr.bf16.gmra.mxu0 %v1639
        %v1950 = vpop.f32.mrf.mxu0
        %v1951 = vadd.f32 %v1758, %v1950
        %v1952 = vpop.f32.mrf.mxu0
        %v1953 = vpop.f32.mrf.mxu0
        %v1954 = vadd.f32 %v1758, %v1953
        %v1955 = vpop.f32.mrf.mxu0
        %1956 = vmatprep.mubr.bf16.mxu0 %v1706
        %1957 = vmatmul.mubr.bf16.gmra.mxu0 %v1642
        %v1958 = vpop.f32.mrf.mxu0
        %v1959 = vadd.f32 %v1758, %v1958
        %v1960 = vpop.f32.mrf.mxu0
        %v1961 = vpop.f32.mrf.mxu0
        %v1962 = vadd.f32 %v1758, %v1961
        %v1963 = vpop.f32.mrf.mxu0
        %1964 = vmatprep.mubr.bf16.mxu0 %v1709
        %1965 = vmatmul.mubr.bf16.gmra.mxu0 %v1645
        %v1966 = vpop.f32.mrf.mxu0
        %v1967 = vadd.f32 %v1758, %v1966
        %v1968 = vpop.f32.mrf.mxu0
        %v1969 = vpop.f32.mrf.mxu0
        %v1970 = vadd.f32 %v1758, %v1969
        %v1971 = vpop.f32.mrf.mxu0
        %1972 = vmatprep.mubr.bf16.mxu0 %v1712
        %1973 = vmatmul.mubr.bf16.gmra.mxu0 %v1648
        %v1974 = vpop.f32.mrf.mxu0
        %v1975 = vadd.f32 %v1758, %v1974
        %v1976 = vpop.f32.mrf.mxu0
        %v1977 = vpop.f32.mrf.mxu0
        %v1978 = vadd.f32 %v1758, %v1977
        %v1979 = vpop.f32.mrf.mxu0
        %1980 = vmatprep.mubr.bf16.mxu0 %v1715
        %1981 = vmatmul.mubr.bf16.gmra.mxu0 %v1651
        %v1982 = vpop.f32.mrf.mxu0
        %v1983 = vadd.f32 %v1758, %v1982
        %v1984 = vpop.f32.mrf.mxu0
        %v1985 = vpop.f32.mrf.mxu0
        %v1986 = vadd.f32 %v1758, %v1985
        %v1987 = vpop.f32.mrf.mxu0
        %1988 = vdwg.mxu0
        %1989 = vmatprep.subr.bf16.mxu0 0
        %1990 = vmatpush1.bf16.msra.mxu0 0
        %1991 = vmatprep.subr.bf16.mxu0 0
        %1992 = vmatpush1.bf16.msra.mxu0 0
        %1993 = vmatprep.subr.bf16.mxu0 0
        %1994 = vmatpush1.bf16.msra.mxu0 0
        %1995 = vmatprep.subr.bf16.mxu0 0
        %1996 = vmatpush1.bf16.msra.mxu0 0
        %1997 = vmatprep.subr.bf16.mxu0 0
        %1998 = vmatpush1.bf16.msra.mxu0 0
        %1999 = vmatprep.subr.bf16.mxu0 0
        %2000 = vmatpush1.bf16.msra.mxu0 0
        %2001 = vmatprep.subr.bf16.mxu0 0
        %2002 = vmatpush1.bf16.msra.mxu0 %v1849
        %2003 = vmatprep.subr.bf16.mxu0 0
        %2004 = vmatpush1.bf16.msra.mxu0 %v1848
        %2005 = vmatprep.subr.bf16.mxu0 0
        %2006 = vmatpush2.bf16.msra.mxu0 0
        %2007 = vmatprep.subr.bf16.mxu0 0
        %2008 = vmatpush2.bf16.msra.mxu0 0
        %2009 = vmatprep.subr.bf16.mxu0 0
        %2010 = vmatpush2.bf16.msra.mxu0 0
        %2011 = vmatprep.subr.bf16.mxu0 0
        %2012 = vmatpush2.bf16.msra.mxu0 0
        %2013 = vmatprep.subr.bf16.mxu0 0
        %2014 = vmatpush2.bf16.msra.mxu0 0
        %2015 = vmatprep.subr.bf16.mxu0 0
        %2016 = vmatpush2.bf16.msra.mxu0 0
        %2017 = vmatprep.subr.bf16.mxu0 0
        %2018 = vmatpush2.bf16.msra.mxu0 0
        %2019 = vmatprep.subr.bf16.mxu0 0
        %2020 = vmatpush2.bf16.msra.mxu0 0
        %2021 = vmatprep.mubr.bf16.mxu0 0
        %2022 = vmatmul.mubr.bf16.gmra.mxu0 %v1869
        %v2023 = vpop.f32.mrf.mxu0
        %v2024 = vadd.f32 %v1927, %v2023
        %v2025 = vpop.f32.mrf.mxu0
        %v2026 = vpop.f32.mrf.mxu0
        %v2027 = vadd.f32 %v1930, %v2026
        %v2028 = vpop.f32.mrf.mxu0
        %2029 = vmatprep.mubr.bf16.mxu0 0
        %2030 = vmatmul.mubr.bf16.gmra.mxu0 %v1872
        %v2031 = vpop.f32.mrf.mxu0
        %v2032 = vadd.f32 %v1935, %v2031
        %v2033 = vpop.f32.mrf.mxu0
        %v2034 = vpop.f32.mrf.mxu0
        %v2035 = vadd.f32 %v1938, %v2034
        %v2036 = vpop.f32.mrf.mxu0
        %2037 = vmatprep.mubr.bf16.mxu0 0
        %2038 = vmatmul.mubr.bf16.gmra.mxu0 %v1875
        %v2039 = vpop.f32.mrf.mxu0
        %v2040 = vadd.f32 %v1943, %v2039
        %v2041 = vpop.f32.mrf.mxu0
        %v2042 = vpop.f32.mrf.mxu0
        %v2043 = vadd.f32 %v1946, %v2042
        %v2044 = vpop.f32.mrf.mxu0
        %2045 = vmatprep.mubr.bf16.mxu0 0
        %2046 = vmatmul.mubr.bf16.gmra.mxu0 %v1878
        %v2047 = vpop.f32.mrf.mxu0
        %v2048 = vadd.f32 %v1951, %v2047
        %v2049 = vpop.f32.mrf.mxu0
        %v2050 = vpop.f32.mrf.mxu0
        %v2051 = vadd.f32 %v1954, %v2050
        %v2052 = vpop.f32.mrf.mxu0
        %2053 = vmatprep.mubr.bf16.mxu0 0
        %2054 = vmatmul.mubr.bf16.gmra.mxu0 %v1881
        %v2055 = vpop.f32.mrf.mxu0
        %v2056 = vadd.f32 %v1959, %v2055
        %v2057 = vpop.f32.mrf.mxu0
        %v2058 = vpop.f32.mrf.mxu0
        %v2059 = vadd.f32 %v1962, %v2058
        %v2060 = vpop.f32.mrf.mxu0
        %2061 = vmatprep.mubr.bf16.mxu0 0
        %2062 = vmatmul.mubr.bf16.gmra.mxu0 %v1884
        %v2063 = vpop.f32.mrf.mxu0
        %v2064 = vadd.f32 %v1967, %v2063
        %v2065 = vpop.f32.mrf.mxu0
        %v2066 = vpop.f32.mrf.mxu0
        %v2067 = vadd.f32 %v1970, %v2066
        %v2068 = vpop.f32.mrf.mxu0
        %2069 = vmatprep.mubr.bf16.mxu0 0
        %2070 = vmatmul.mubr.bf16.gmra.mxu0 %v1887
        %v2071 = vpop.f32.mrf.mxu0
        %v2072 = vadd.f32 %v1975, %v2071
        %v2073 = vpop.f32.mrf.mxu0
        %v2074 = vpop.f32.mrf.mxu0
        %v2075 = vadd.f32 %v1978, %v2074
        %v2076 = vpop.f32.mrf.mxu0
        %2077 = vmatprep.mubr.bf16.mxu0 0
        %2078 = vmatmul.mubr.bf16.gmra.mxu0 %v1890
        %v2079 = vpop.f32.mrf.mxu0
        %v2080 = vadd.f32 %v1983, %v2079
        %v2081 = vpop.f32.mrf.mxu0
        %v2082 = vpop.f32.mrf.mxu0
        %v2083 = vadd.f32 %v1986, %v2082
        %v2084 = vpop.f32.mrf.mxu0
        %2085 = vdwg.mxu0
        %v2086 = vmax.f32 %v2024, 0.0
        %v2087 = vmax.f32 %v2027, 0.0
        %v2088 = vmax.f32 %v2032, 0.0
        %v2089 = vmax.f32 %v2035, 0.0
        %v2090 = vmax.f32 %v2040, 0.0
        %v2091 = vmax.f32 %v2043, 0.0
        %v2092 = vmax.f32 %v2048, 0.0
        %v2093 = vmax.f32 %v2051, 0.0
        %v2094 = vmax.f32 %v2056, 0.0
        %v2095 = vmax.f32 %v2059, 0.0
        %v2096 = vmax.f32 %v2064, 0.0
        %v2097 = vmax.f32 %v2067, 0.0
        %v2098 = vmax.f32 %v2072, 0.0
        %v2099 = vmax.f32 %v2075, 0.0
        %v2100 = vmax.f32 %v2080, 0.0
        %v2101 = vmax.f32 %v2083, 0.0
        %v2102 = vpack.c.bf16 %v2087, %v2086
        %v2103 = vpack.c.bf16 %v2089, %v2088
        %v2104 = vpack.c.bf16 %v2091, %v2090
        %v2105 = vpack.c.bf16 %v2093, %v2092
        %v2106 = vpack.c.bf16 %v2095, %v2094
        %v2107 = vpack.c.bf16 %v2097, %v2096
        %v2108 = vpack.c.bf16 %v2099, %v2098
        %v2109 = vpack.c.bf16 %v2101, %v2100
        %v2110 = vld [vmem:[%s5] sm:$0xf]
        %v2111 = vld [vmem:[%s5 + $0x4] sm:$0xf]
        %v2112 = vld [vmem:[%s5 + $0x8] sm:$0xf]
        %v2113 = vld [vmem:[%s5 + $0xc] sm:$0xf]
        %v2114 = vld [vmem:[%s6] sm:$0x1]
        %v2116 = vlaneseq
        %v2117 = vshrl.u32 %v2116, 7
        %v2118 = vsub.s32 0, %v2117
        %v2119 = vrot.slane %v2114, %v2118
        %v2125 = vunpack.c.l.b16 %v2110
        %v2126 = vunpack.c.l.b16 %v2111
        %v2127 = vunpack.c.l.b16 %v2112
        %v2128 = vunpack.c.l.b16 %v2113
        %v2129 = vpack.c.b16 %v2126, %v2125
        %v2130 = vpack.c.b16 %v2128, %v2127
        %v2134 = vsel %vm1594, %v2102, 0
        %v2137 = vsel %vm1594, %v2103, 0
        %v2140 = vsel %vm1594, %v2104, 0
        %v2143 = vsel %vm1594, %v2105, 0
        %v2146 = vsel %vm1594, %v2106, 0
        %v2149 = vsel %vm1594, %v2107, 0
        %v2152 = vsel %vm1594, %v2108, 0
        %v2155 = vsel %vm1594, %v2109, 0
        %2157 = vmatprep.subr.bf16.mxu0 0
        %2158 = vmatpush1.bf16.msra.mxu0 0
        %2159 = vmatprep.subr.bf16.mxu0 0
        %2160 = vmatpush1.bf16.msra.mxu0 0
        %2161 = vmatprep.subr.bf16.mxu0 0
        %2162 = vmatpush1.bf16.msra.mxu0 0
        %2163 = vmatprep.subr.bf16.mxu0 0
        %2164 = vmatpush1.bf16.msra.mxu0 0
        %2165 = vmatprep.subr.bf16.mxu0 0
        %2166 = vmatpush1.bf16.msra.mxu0 0
        %2167 = vmatprep.subr.bf16.mxu0 0
        %2168 = vmatpush1.bf16.msra.mxu0 0
        %2169 = vmatprep.subr.bf16.mxu0 0
        %2170 = vmatpush1.bf16.msra.mxu0 %v2130
        %2171 = vmatprep.subr.bf16.mxu0 0
        %2172 = vmatpush1.bf16.msra.mxu0 %v2129
        %2173 = vmatprep.subr.bf16.mxu0 0
        %2174 = vmatpush2.bf16.msra.mxu0 0
        %2175 = vmatprep.subr.bf16.mxu0 0
        %2176 = vmatpush2.bf16.msra.mxu0 0
        %2177 = vmatprep.subr.bf16.mxu0 0
        %2178 = vmatpush2.bf16.msra.mxu0 0
        %2179 = vmatprep.subr.bf16.mxu0 0
        %2180 = vmatpush2.bf16.msra.mxu0 0
        %2181 = vmatprep.subr.bf16.mxu0 0
        %2182 = vmatpush2.bf16.msra.mxu0 0
        %2183 = vmatprep.subr.bf16.mxu0 0
        %2184 = vmatpush2.bf16.msra.mxu0 0
        %2185 = vmatprep.subr.bf16.mxu0 0
        %2186 = vmatpush2.bf16.msra.mxu0 0
        %2187 = vmatprep.subr.bf16.mxu0 0
        %2188 = vmatpush2.bf16.msra.mxu0 0
        %2189 = vmatprep.mubr.bf16.mxu0 0
        %2190 = vmatmul.mubr.bf16.gmra.mxu0 %v2134
        %v2191 = vpop.f32.mrf.mxu0
        %v2192 = vadd.f32 %v2119, %v2191
        %v2193 = vpop.f32.mrf.mxu0
        %v2194 = vpop.f32.mrf.mxu0
        %v2195 = vadd.f32 %v2119, %v2194
        %v2196 = vpop.f32.mrf.mxu0
        %2197 = vmatprep.mubr.bf16.mxu0 0
        %2198 = vmatmul.mubr.bf16.gmra.mxu0 %v2137
        %v2199 = vpop.f32.mrf.mxu0
        %v2200 = vadd.f32 %v2119, %v2199
        %v2201 = vpop.f32.mrf.mxu0
        %v2202 = vpop.f32.mrf.mxu0
        %v2203 = vadd.f32 %v2119, %v2202
        %v2204 = vpop.f32.mrf.mxu0
        %2205 = vmatprep.mubr.bf16.mxu0 0
        %2206 = vmatmul.mubr.bf16.gmra.mxu0 %v2140
        %v2207 = vpop.f32.mrf.mxu0
        %v2208 = vadd.f32 %v2119, %v2207
        %v2209 = vpop.f32.mrf.mxu0
        %v2210 = vpop.f32.mrf.mxu0
        %v2211 = vadd.f32 %v2119, %v2210
        %v2212 = vpop.f32.mrf.mxu0
        %2213 = vmatprep.mubr.bf16.mxu0 0
        %2214 = vmatmul.mubr.bf16.gmra.mxu0 %v2143
        %v2215 = vpop.f32.mrf.mxu0
        %v2216 = vadd.f32 %v2119, %v2215
        %v2217 = vpop.f32.mrf.mxu0
        %v2218 = vpop.f32.mrf.mxu0
        %v2219 = vadd.f32 %v2119, %v2218
        %v2220 = vpop.f32.mrf.mxu0
        %2221 = vmatprep.mubr.bf16.mxu0 0
        %2222 = vmatmul.mubr.bf16.gmra.mxu0 %v2146
        %v2223 = vpop.f32.mrf.mxu0
        %v2224 = vadd.f32 %v2119, %v2223
        %v2225 = vpop.f32.mrf.mxu0
        %v2226 = vpop.f32.mrf.mxu0
        %v2227 = vadd.f32 %v2119, %v2226
        %v2228 = vpop.f32.mrf.mxu0
        %2229 = vmatprep.mubr.bf16.mxu0 0
        %2230 = vmatmul.mubr.bf16.gmra.mxu0 %v2149
        %v2231 = vpop.f32.mrf.mxu0
        %v2232 = vadd.f32 %v2119, %v2231
        %v2233 = vpop.f32.mrf.mxu0
        %v2234 = vpop.f32.mrf.mxu0
        %v2235 = vadd.f32 %v2119, %v2234
        %v2236 = vpop.f32.mrf.mxu0
        %2237 = vmatprep.mubr.bf16.mxu0 0
        %2238 = vmatmul.mubr.bf16.gmra.mxu0 %v2152
        %v2239 = vpop.f32.mrf.mxu0
        %v2240 = vadd.f32 %v2119, %v2239
        %v2241 = vpop.f32.mrf.mxu0
        %v2242 = vpop.f32.mrf.mxu0
        %v2243 = vadd.f32 %v2119, %v2242
        %v2244 = vpop.f32.mrf.mxu0
        %2245 = vmatprep.mubr.bf16.mxu0 0
        %2246 = vmatmul.mubr.bf16.gmra.mxu0 %v2155
        %v2247 = vpop.f32.mrf.mxu0
        %v2248 = vadd.f32 %v2119, %v2247
        %v2249 = vpop.f32.mrf.mxu0
        %v2250 = vpop.f32.mrf.mxu0
        %v2251 = vadd.f32 %v2119, %v2250
        %v2252 = vpop.f32.mrf.mxu0
        %2253 = vdwg.mxu0
        %v2254 = vunpack.c.l.bf16 %v364
        %v2255 = vunpack.c.l.bf16 %v365
        %v2256 = vunpack.c.l.bf16 %v366
        %v2257 = vunpack.c.l.bf16 %v367
        %v2258 = vunpack.c.l.bf16 %v368
        %v2259 = vunpack.c.l.bf16 %v369
        %v2260 = vunpack.c.l.bf16 %v370
        %v2261 = vunpack.c.l.bf16 %v371
        %v2262 = vunpack.c.l.bf16 %v372
        %v2263 = vunpack.c.l.bf16 %v373
        %v2264 = vunpack.c.l.bf16 %v374
        %v2265 = vunpack.c.l.bf16 %v375
        %v2266 = vunpack.c.l.bf16 %v376
        %v2267 = vunpack.c.l.bf16 %v377
        %v2268 = vunpack.c.l.bf16 %v378
        %v2269 = vunpack.c.l.bf16 %v379
        %v2270 = vadd.f32 %v2192, %v2254
        %v2271 = vadd.f32 %v2195, %v2255
        %v2272 = vadd.f32 %v2200, %v2256
        %v2273 = vadd.f32 %v2203, %v2257
        %v2274 = vadd.f32 %v2208, %v2258
        %v2275 = vadd.f32 %v2211, %v2259
        %v2276 = vadd.f32 %v2216, %v2260
        %v2277 = vadd.f32 %v2219, %v2261
        %v2278 = vadd.f32 %v2224, %v2262
        %v2279 = vadd.f32 %v2227, %v2263
        %v2280 = vadd.f32 %v2232, %v2264
        %v2281 = vadd.f32 %v2235, %v2265
        %v2282 = vadd.f32 %v2240, %v2266
        %v2283 = vadd.f32 %v2243, %v2267
        %v2284 = vadd.f32 %v2248, %v2268
        %v2285 = vadd.f32 %v2251, %v2269
        %v2286 = vmax.f32 %v2270, 0.0
        %v2287 = vmax.f32 %v2271, 0.0
        %v2288 = vmax.f32 %v2272, 0.0
        %v2289 = vmax.f32 %v2273, 0.0
        %v2290 = vmax.f32 %v2274, 0.0
        %v2291 = vmax.f32 %v2275, 0.0
        %v2292 = vmax.f32 %v2276, 0.0
        %v2293 = vmax.f32 %v2277, 0.0
        %v2294 = vmax.f32 %v2278, 0.0
        %v2295 = vmax.f32 %v2279, 0.0
        %v2296 = vmax.f32 %v2280, 0.0
        %v2297 = vmax.f32 %v2281, 0.0
        %v2298 = vmax.f32 %v2282, 0.0
        %v2299 = vmax.f32 %v2283, 0.0
        %v2300 = vmax.f32 %v2284, 0.0
        %v2301 = vmax.f32 %v2285, 0.0
        %2302 = vst [vmem:[%s285] sm:$0xff] %v2286
        %2303 = vst [vmem:[%s285 + $0x8] sm:$0xff] %v2287
        %2304 = vst [vmem:[%s285 + $0x10] sm:$0xff] %v2288
        %2305 = vst [vmem:[%s285 + $0x18] sm:$0xff] %v2289
        %2306 = vst [vmem:[%s285 + $0x20] sm:$0xff] %v2290
        %2307 = vst [vmem:[%s285 + $0x28] sm:$0xff] %v2291
        %2308 = vst [vmem:[%s285 + $0x30] sm:$0xff] %v2292
        %2309 = vst [vmem:[%s285 + $0x38] sm:$0xff] %v2293
        %2310 = vst [vmem:[%s285 + $0x40] sm:$0xff] %v2294
        %2311 = vst [vmem:[%s285 + $0x48] sm:$0xff] %v2295
        %2312 = vst [vmem:[%s285 + $0x50] sm:$0xff] %v2296
        %2313 = vst [vmem:[%s285 + $0x58] sm:$0xff] %v2297
        %2314 = vst [vmem:[%s285 + $0x60] sm:$0xff] %v2298
        %2315 = vst [vmem:[%s285 + $0x68] sm:$0xff] %v2299
        %2316 = vst [vmem:[%s285 + $0x70] sm:$0xff] %v2300
        %2317 = vst [vmem:[%s285 + $0x78] sm:$0xff] %v2301
        %s2318 = sand.u32 %s195, 1
        %s2319 = scalar_lea.sflag [#allocation4], %s2318
        %s2320 = sand.u32 %s195, 1
        %s2321 = smul.addr %s2320, 128
        %s2322 = scalar_lea.vmem [#allocation3], %s2321
        // Predicated region
        $region65: #{tpu_custom_call.1} parent=47 // pred_check
          %p2323 = pneg %p205
        $region66: #{tpu_custom_call.1} parent=47 // pred_check_branch
          %2325 = sbr.rel (%p2323) target = $region68
        $region67: #{tpu_custom_call.1} parent=47 // pred_region
          %s2326 = smul.u32 16, %s26
          %s2328 = ssub.s32 2048, 2048
          %2329 = vsyncadd %s2319, %s2328
          %s2330 = smul.addr %s25, 32
          %s2331 = sadd.s32 %s2326, %s2330
          %s2332 = smul.addr %s2331, 128
          %s2333 = scalar_lea.hbm %s7, %s2332
          %s2334 = sshll.u32 %s2322, 4
          %s2335 = int_to_ptr.vmem [resolvable:$true] %s2334
          %2340 = dma.vmem_to_hbm [thread:$0]  %s2335, 2048, %s2333, %s2319, 128, 128, 8
        $region68: #{tpu_custom_call.1} parent=47 // pred_fallthru
          _
      $region48: #{tpu_custom_call.1} parent=5 // pred_fallthru
        _
      %p2341 = scmp.le.s32.totalorder 2, %s16
      // Predicated region
      $region69: #{tpu_custom_call.1} parent=5 // pred_check
        %p2342 = pneg %p2341
      $region70: #{tpu_custom_call.1} parent=5 // pred_check_branch
        %2344 = sbr.rel (%p2342) target = $region72
      $region71: #{tpu_custom_call.1} parent=5 // pred_region
        %s2345 = ssub.s32 %s16, 2
        // Predicated region
        $region73: #{tpu_custom_call.1} parent=71 // pred_check
          %p2346 = pneg %p211
        $region74: #{tpu_custom_call.1} parent=71 // pred_check_branch
          %2348 = sbr.rel (%p2346) target = $region76
        $region75: #{tpu_custom_call.1} parent=71 // pred_region
          %s2349 = sand.u32 %s196, 1
          %s2350 = scalar_lea.sflag [#allocation4], %s2349
          %s2351 = sand.u32 %s196, 1
          %s2352 = smul.addr %s2351, 128
          %s2353 = scalar_lea.vmem [#allocation3], %s2352
          %2354 = dma.done %s2350, 2048
        $region76: #{tpu_custom_call.1} parent=71 // pred_fallthru
          _
      $region72: #{tpu_custom_call.1} parent=5 // pred_fallthru
        _
    $region6: #{tpu_custom_call.1} parent=1 // loop_footer
      %s20 = sadd.s32 1, %s16
    $region7: #{tpu_custom_call.1} parent=1 // loop_footer_branch
      %15 = sbr.rel target = $region3
    $region8: #{tpu_custom_call.1} parent=1 // loop_exit
      _
    %2355 = vsyncpa [#allocation4], 1
    %s2356 = scalar_lea.sflag [#allocation4], 1
    %2357 = vsyncpa %s2356, 1

</llo_original>
